<compile_context>
chip_gen: v6e
topology: v6e:2x2x1
jax: 0.10.0
libtpu: 0.0.40
codegen_flags: <defaults>
</compile_context>

<pallas_src>
import jax
import jax.numpy as jnp
from jax.experimental import pallas as pl
from jax.experimental.pallas import tpu as pltpu


# ---------------------------------------------------------------------------
# skew / unskew (vectorized pad+reshape versions used by the Pallas path)
# ---------------------------------------------------------------------------
def skew_fast(x):
    """(B, C, H, W) with W == H -> (B, C, H, 2H-1), row i shifted right by i."""
    B, C, H, W = x.shape
    xp = jnp.pad(x, ((0, 0), (0, 0), (0, 0), (0, H)))            # (B, C, H, 2H)
    flat = xp.reshape(B, C, H * 2 * H)
    return flat[:, :, : H * (2 * H - 1)].reshape(B, C, H, 2 * H - 1)


def unskew_fast(s):
    """(B, C, H, 2H-1) -> (B, C, H, H); inverse of skew_fast."""
    B, C, H, _ = s.shape
    flat = s.reshape(B, C, H * (2 * H - 1))
    flat = jnp.pad(flat, ((0, 0), (0, 0), (0, H)))
    return flat.reshape(B, C, H, 2 * H)[:, :, :, :H]


# Loop versions (exact mirror of the PyTorch loops) -- used by the pure-JAX ref.
def skew_loop(x):
    B, C, H, W = x.shape
    out = jnp.zeros((B, C, H, 2 * H - 1), x.dtype)
    for i in range(H):
        out = out.at[:, :, i, i:i + W].set(x[:, :, i, :])
    return out


def unskew_loop(x):
    H = x.shape[2]
    return jnp.stack([x[:, :, i, i:i + H] for i in range(H)], axis=2)


# ---------------------------------------------------------------------------
# Fused bidirectional diagonal LSTM driven by a single Pallas kernel
# ---------------------------------------------------------------------------
def diag_bilstm_pallas(image, pf, pb):
    B, C, H, W = image.shape
    assert H == W, "diagonal skew requires square images"
    hh = pf["h0"].shape[0]
    n_seq = 2 * H - 1
    BH = B * H
    R = 2 * BH                                    # fwd rows [0:BH), bwd rows [BH:2BH)

    LANES = 128
    pack = LANES // hh if (hh <= LANES and LANES % hh == 0) else 1
    n_slab = -(-n_seq // pack)                    # ceil(n_seq / pack)

    def prep(img, p):
        # itos (1x1 conv) + both conv biases, hoisted out of the recurrence.
        x_seq = jnp.transpose(skew_fast(img), (3, 0, 2, 1)).reshape(n_seq * BH, C)
        bias = (p["bis"] + p["bss"])[None, :]
        feat = (jnp.dot(x_seq, p["wis"].T,
                        precision=jax.lax.Precision.HIGHEST) + bias
                ).reshape(n_seq, BH, 4 * hh)
        # stos (2,1) conv taps: k=0 acts on the row above, k=1 on the current row.
        wrec = jnp.concatenate([p["wss"][:, :, 0, 0].T,
                                p["wss"][:, :, 1, 0].T], axis=0)  # (2*hh, 4*hh)
        h0 = jnp.broadcast_to(p["h0"][:, :, 0].T[None], (B, H, hh)).reshape(BH, hh)
        c0 = jnp.broadcast_to(p["c0"][:, :, 0].T[None], (B, H, hh)).reshape(BH, hh)
        return feat, wrec, h0, c0

    feat_f, wrec_f, h0_f, c0_f = prep(image, pf)
    feat_b, wrec_b, h0_b, c0_b = prep(jnp.flip(image, axis=3), pb)

    feat_all = jnp.concatenate([feat_f, feat_b], axis=1)          # (n_seq, R, 4hh)
    # Fused recurrent weight: lanes [0:4hh) = fwd gates, [4hh:8hh) = bwd gates.
    w_all = jnp.concatenate([wrec_f, wrec_b], axis=1)             # (2hh, 8hh)
    h0_all = jnp.concatenate([h0_f, h0_b], axis=0)                # (R, hh)
    c0_all = jnp.concatenate([c0_f, c0_b], axis=0)                # (R, hh)

    def kernel(feat_ref, w_ref, h0_ref, c0_ref, out_ref):
        # Loop-invariant masks / weights: built once, outside the unrolled loop.
        rows = jax.lax.broadcasted_iota(jnp.int32, (R, 1), 0)
        notop = (rows % H) != 0          # rows whose "row above" is in the same image
        is_fwd = rows < BH               # forward-direction rows
        w_v = w_ref[...]                 # (2hh, 8hh), stays in vregs/VMEM view

        def shift_up(h):
            # h_up[r] = h[r-1] within an image; 0 at the top row of each image.
            # (pltpu.roll wraps, but every wrap row has r % H == 0 -> masked.)
            return jnp.where(notop, pltpu.roll(h, 1, 0), 0.0)

        h = h0_ref[...]
        cell = c0_ref[...]
        hid2 = jnp.concatenate([shift_up(h), h], axis=1)          # (R, 2hh)

        group = []                        # lane-packing staging for the output
        slab = 0
        for j in range(n_seq):            # fully unrolled; j, slab are static
            # One fused MXU matmul for both stos taps of both directions.
            res = jnp.dot(hid2, w_v, preferred_element_type=jnp.float32)  # (R, 8hh)
            g_rec = jnp.where(is_fwd, res[:, :4 * hh], res[:, 4 * hh:])   # (R, 4hh)
            gates = feat_ref[j] + g_rec

            sig = jax.nn.sigmoid(gates)   # one EUP pass over the packed gates
            i_s = sig[:, 0 * hh:1 * hh]
            f_s = sig[:, 2 * hh:3 * hh]
            o_s = sig[:, 3 * hh:4 * hh]
            g_t = jnp.tanh(gates[:, 1 * hh:2 * hh])

            cell_new = f_s * cell + i_s * g_t
            # Reference quirk (kept intentionally): hidden uses the PREVIOUS cell.
            hid_new = jnp.tanh(cell) * o_s

            # Lane-dense output: flush `pack` diagonals as one full-width slab.
            group.append(hid_new)
            if len(group) == pack or j == n_seq - 1:
                while len(group) < pack:
                    group.append(jnp.zeros_like(hid_new))
                out_ref[slab] = (jnp.concatenate(group, axis=1)
                                 if pack > 1 else group[0])
                group = []
                slab += 1

            # Next-step state stays in vregs (no VMEM scratch round trip).
            cell = cell_new
            hid2 = jnp.concatenate([shift_up(hid_new), hid_new], axis=1)

    h_packed = pl.pallas_call(
        kernel,
        out_shape=jax.ShapeDtypeStruct((n_slab, R, pack * hh), jnp.float32),
        grid_spec=pltpu.PrefetchScalarGridSpec(
            num_scalar_prefetch=0,
            grid=(1,),
            in_specs=[
                pl.BlockSpec((n_seq, R, 4 * hh), lambda i: (0, 0, 0)),   # feat
                pl.BlockSpec((2 * hh, 8 * hh), lambda i: (0, 0)),        # fused W
                pl.BlockSpec((R, hh), lambda i: (0, 0)),                 # h0
                pl.BlockSpec((R, hh), lambda i: (0, 0)),                 # c0
            ],
            out_specs=pl.BlockSpec((n_slab, R, pack * hh), lambda i: (0, 0, 0)),
        ),
        compiler_params=pltpu.CompilerParams(dimension_semantics=("arbitrary",)),
    )(feat_all, w_all, h0_all, c0_all)

    # Undo the lane packing: (n_slab, R, pack*hh) -> (n_seq, R, hh).
    h_seq = h_packed.reshape(n_slab, R, pack, hh)
    h_seq = jnp.transpose(h_seq, (0, 2, 1, 3)).reshape(n_slab * pack, R, hh)[:n_seq]

    # (n_seq, 2*B*H, hh) -> per-direction (B, hh, H, n_seq) -> unskew -> combine
    hs = h_seq.reshape(n_seq, 2, B, H, hh)
    hs_f = jnp.transpose(hs[:, 0], (1, 3, 2, 0))
    hs_b = jnp.transpose(hs[:, 1], (1, 3, 2, 0))
    out_f = unskew_fast(hs_f)                                     # (B, hh, H, W)
    out_b = jnp.flip(unskew_fast(hs_b), axis=3)
    shifted = jnp.concatenate(
        [jnp.zeros((B, hh, 1, W), out_f.dtype), out_b[:, :, :H - 1, :]], axis=2)
    return out_f + shifted


# ---------------------------------------------------------------------------
# Pure-JAX reference mirroring the PyTorch forward (for validation)
# ---------------------------------------------------------------------------
def ref_diag_lstm(image, p):
    HI = jax.lax.Precision.HIGHEST
    B, C, H, W = image.shape
    hh = p["h0"].shape[0]
    skewed = skew_loop(image)
    n_seq = skewed.shape[-1]
    feat = (jnp.einsum("oc,bchj->bohj", p["wis"], skewed, precision=HI)
            + p["bis"][None, :, None, None])
    w0 = p["wss"][:, :, 0, 0]
    w1 = p["wss"][:, :, 1, 0]
    hid = jnp.broadcast_to(p["h0"][None, :, :, 0], (B, hh, H))
    cell = jnp.broadcast_to(p["c0"][None, :, :, 0], (B, hh, H))
    outs = []
    for j in range(n_seq):
        h_up = jnp.concatenate([jnp.zeros((B, hh, 1), image.dtype),
                                hid[:, :, :H - 1]], axis=2)
        gates = (jnp.einsum("oc,bch->boh", w0, h_up, precision=HI)
                 + jnp.einsum("oc,bch->boh", w1, hid, precision=HI)
                 + p["bss"][None, :, None] + feat[:, :, :, j])
        i_g, g_g, f_g, o_g = jnp.split(gates, 4, axis=1)
        c_new = jax.nn.sigmoid(f_g) * cell + jax.nn.sigmoid(i_g) * jnp.tanh(g_g)
        h_new = jnp.tanh(cell) * jax.nn.sigmoid(o_g)   # same quirk as the module
        cell, hid = c_new, h_new
        outs.append(h_new)
    hs = jnp.transpose(jnp.stack(outs, axis=2), (0, 1, 3, 2))
    return unskew_loop(hs)


def ref_diag_bilstm(image, pf, pb):
    B, C, H, W = image.shape
    hh = pf["h0"].shape[0]
    fwd = ref_diag_lstm(image, pf)
    bwd = jnp.flip(ref_diag_lstm(jnp.flip(image, axis=3), pb), axis=3)
    shifted = jnp.concatenate(
        [jnp.zeros((B, hh, 1, W), fwd.dtype), bwd[:, :, :H - 1, :]], axis=2)
    return fwd + shifted


# ---------------------------------------------------------------------------
# Deterministic parameter init (shapes dictated by the module's __init__)
# ---------------------------------------------------------------------------
def init_params(key, hidden, c_in, height):
    k = jax.random.split(key, 6)
    s = 0.1
    return dict(
        wis=jax.random.normal(k[0], (4 * hidden, c_in), jnp.float32) * s,          # itos 1x1
        bis=jax.random.normal(k[1], (4 * hidden,), jnp.float32) * s,
        wss=jax.random.normal(k[2], (4 * hidden, hidden, 2, 1), jnp.float32) * s,  # stos (2,1)
        bss=jax.random.normal(k[3], (4 * hidden,), jnp.float32) * s,
        h0=jax.random.normal(k[4], (hidden, height, 1), jnp.float32),
        c0=jax.random.normal(k[5], (hidden, height, 1), jnp.float32),
    )


if __name__ == "__main__":
    B, C_in, H, W = 2, 4, 8, 8       # square image required by skew()
    hidden = 32                       # -> out_channels = out_channels_s = 4*hidden = 128

    key = jax.random.PRNGKey(0)
    k_img, k_f, k_b = jax.random.split(key, 3)
    image = jax.random.normal(k_img, (B, C_in, H, W), jnp.float32)
    pf = init_params(k_f, hidden, C_in, H)
    pb = init_params(k_b, hidden, C_in, H)

    bilstm = jax.jit(diag_bilstm_pallas)
    out = jax.block_until_ready(bilstm(image, pf, pb))

    ref = ref_diag_bilstm(image, pf, pb)
    assert out.shape == (B, hidden, H, W), out.shape
    if not jnp.allclose(out, ref, atol=2e-3, rtol=2e-3):
        raise AssertionError(
            f"mismatch: max abs err = {float(jnp.max(jnp.abs(out - ref)))}")
    print("KERNEL_OK")
</pallas_src>

<mosaic_0001>
module attributes {stable_mosaic.version = 11 : i64} {
  func.func @kernel(%arg0: i32, %arg1: memref<15x32x128xf32, #tpu.memory_space<vmem>>, %arg2: memref<64x256xf32, #tpu.memory_space<vmem>>, %arg3: memref<32x32xf32, #tpu.memory_space<vmem>>, %arg4: memref<32x32xf32, #tpu.memory_space<vmem>>, %arg5: memref<4x32x128xf32, #tpu.memory_space<vmem>>) attributes {dimension_semantics = [#tpu.dimension_semantics<arbitrary>], iteration_bounds = array<i64: 1>, scalar_prefetch = 0 : i64, scratch_operands = 0 : i64, tpu.core_type = #tpu.core_type<tc>, window_params = [{pipeline_mode = #tpu.pipeline_mode<synchronous>, transform_indices = @transform_0, window_bounds = array<i64: 15, 32, 128>}, {pipeline_mode = #tpu.pipeline_mode<synchronous>, transform_indices = @transform_1, window_bounds = array<i64: 64, 256>}, {pipeline_mode = #tpu.pipeline_mode<synchronous>, transform_indices = @transform_2, window_bounds = array<i64: 32, 32>}, {pipeline_mode = #tpu.pipeline_mode<synchronous>, transform_indices = @transform_3, window_bounds = array<i64: 32, 32>}, {pipeline_mode = #tpu.pipeline_mode<synchronous>, transform_indices = @transform_4, window_bounds = array<i64: 4, 32, 128>}]} {
    %0 = tpu.iota {dimensions = array<i32: 0>} : vector<32x1xi32>
    %c8_i32 = arith.constant 8 : i32
    %c0_i32 = arith.constant 0 : i32
    %1 = arith.cmpi eq, %c8_i32, %c0_i32 : i32
    %c1_i32 = arith.constant 1 : i32
    %2 = arith.select %1, %c1_i32, %c8_i32 : i32
    %3 = vector.broadcast %2 : i32 to vector<32x1xi32>
    %4 = arith.remsi %0, %3 : vector<32x1xi32>
    %c0_i32_0 = arith.constant 0 : i32
    %5 = vector.broadcast %c0_i32_0 : i32 to vector<32x1xi32>
    %6 = arith.cmpi ne, %4, %5 : vector<32x1xi32>
    %c0_i32_1 = arith.constant 0 : i32
    %7 = vector.broadcast %c0_i32_1 : i32 to vector<32x1xi32>
    %8 = arith.cmpi slt, %4, %7 : vector<32x1xi32>
    %c0_i32_2 = arith.constant 0 : i32
    %9 = arith.cmpi slt, %2, %c0_i32_2 : i32
    %10 = vector.broadcast %9 : i1 to vector<32x1xi1>
    %11 = vector.broadcast %10 : vector<32x1xi1> to vector<32x1xi1>
    %12 = arith.xori %8, %11 : vector<32x1xi1>
    %13 = arith.andi %12, %6 : vector<32x1xi1>
    %14 = vector.broadcast %2 : i32 to vector<32x1xi32>
    %15 = arith.addi %4, %14 : vector<32x1xi32>
    %16 = arith.select %13, %15, %4 : vector<32x1xi1>, vector<32x1xi32>
    %c0_i32_3 = arith.constant 0 : i32
    %17 = vector.broadcast %c0_i32_3 : i32 to vector<32x1xi32>
    %18 = arith.cmpi ne, %16, %17 : vector<32x1xi32>
    %c16_i32 = arith.constant 16 : i32
    %19 = vector.broadcast %c16_i32 : i32 to vector<32x1xi32>
    %20 = arith.cmpi slt, %0, %19 : vector<32x1xi32>
    %c0 = arith.constant 0 : index
    %c0_4 = arith.constant 0 : index
    %21 = vector.load %arg2[%c0, %c0_4] : memref<64x256xf32, #tpu.memory_space<vmem>>, vector<64x256xf32>
    %c0_5 = arith.constant 0 : index
    %c0_6 = arith.constant 0 : index
    %22 = vector.load %arg3[%c0_5, %c0_6] : memref<32x32xf32, #tpu.memory_space<vmem>>, vector<32x32xf32>
    %c0_7 = arith.constant 0 : index
    %c0_8 = arith.constant 0 : index
    %23 = vector.load %arg4[%c0_7, %c0_8] : memref<32x32xf32, #tpu.memory_space<vmem>>, vector<32x32xf32>
    %c1_i32_9 = arith.constant 1 : i32
    %24 = tpu.dynamic_rotate %22 by %c1_i32_9 dim 0 : vector<32x32xf32>, i32 -> vector<32x32xf32>
    %cst = arith.constant 0.000000e+00 : f32
    %25 = vector.shape_cast %18 : vector<32x1xi1> to vector<32x1xi1>
    %26 = vector.broadcast %25 : vector<32x1xi1> to vector<32x32xi1>
    %27 = vector.broadcast %cst : f32 to vector<32x32xf32>
    %28 = arith.select %26, %24, %27 : vector<32x32xi1>, vector<32x32xf32>
    %29 = tpu.concatenate %28, %22 in 1 : vector<32x32xf32>, vector<32x32xf32> -> vector<32x64xf32>
    %cst_10 = arith.constant dense<0.000000e+00> : vector<32x256xf32>
    %30 = tpu.matmul %29, %21, %cst_10 {dimension_numbers = #tpu.dot_dimension_numbers<[1], [0], [0], [1], [0, 0, 1, 1], [], []>} : vector<32x64xf32>, vector<64x256xf32>, vector<32x256xf32> -> vector<32x256xf32>
    %31 = vector.extract_strided_slice %30 {offsets = [0, 0], sizes = [32, 128], strides = [1, 1]} : vector<32x256xf32> to vector<32x128xf32>
    %32 = vector.extract_strided_slice %30 {offsets = [0, 128], sizes = [32, 128], strides = [1, 1]} : vector<32x256xf32> to vector<32x128xf32>
    %33 = vector.shape_cast %20 : vector<32x1xi1> to vector<32x1xi1>
    %34 = vector.broadcast %33 : vector<32x1xi1> to vector<32x128xi1>
    %35 = arith.select %34, %31, %32 : vector<32x128xi1>, vector<32x128xf32>
    %c0_11 = arith.constant 0 : index
    %c0_12 = arith.constant 0 : index
    %c0_13 = arith.constant 0 : index
    %36 = vector.load %arg1[%c0_11, %c0_12, %c0_13] : memref<15x32x128xf32, #tpu.memory_space<vmem>>, vector<1x32x128xf32>
    %37 = vector.shape_cast %36 : vector<1x32x128xf32> to vector<32x128xf32>
    %38 = arith.addf %37, %35 : vector<32x128xf32>
    %39 = arith.negf %38 : vector<32x128xf32>
    %40 = math.exp %39 : vector<32x128xf32>
    %cst_14 = arith.constant 1.000000e+00 : f32
    %41 = vector.broadcast %cst_14 : f32 to vector<32x128xf32>
    %42 = arith.addf %41, %40 : vector<32x128xf32>
    %43 = arith.divf %41, %42 : vector<32x128xf32>
    %44 = vector.extract_strided_slice %43 {offsets = [0, 0], sizes = [32, 32], strides = [1, 1]} : vector<32x128xf32> to vector<32x32xf32>
    %45 = vector.extract_strided_slice %43 {offsets = [0, 64], sizes = [32, 32], strides = [1, 1]} : vector<32x128xf32> to vector<32x32xf32>
    %46 = vector.extract_strided_slice %43 {offsets = [0, 96], sizes = [32, 32], strides = [1, 1]} : vector<32x128xf32> to vector<32x32xf32>
    %47 = vector.extract_strided_slice %38 {offsets = [0, 32], sizes = [32, 32], strides = [1, 1]} : vector<32x128xf32> to vector<32x32xf32>
    %48 = math.tanh %47 : vector<32x32xf32>
    %49 = arith.mulf %45, %23 : vector<32x32xf32>
    %50 = arith.mulf %44, %48 : vector<32x32xf32>
    %51 = arith.addf %49, %50 : vector<32x32xf32>
    %52 = math.tanh %23 : vector<32x32xf32>
    %53 = arith.mulf %52, %46 : vector<32x32xf32>
    %c1_i32_15 = arith.constant 1 : i32
    %54 = tpu.dynamic_rotate %53 by %c1_i32_15 dim 0 : vector<32x32xf32>, i32 -> vector<32x32xf32>
    %cst_16 = arith.constant 0.000000e+00 : f32
    %55 = vector.shape_cast %18 : vector<32x1xi1> to vector<32x1xi1>
    %56 = vector.broadcast %55 : vector<32x1xi1> to vector<32x32xi1>
    %57 = vector.broadcast %cst_16 : f32 to vector<32x32xf32>
    %58 = arith.select %56, %54, %57 : vector<32x32xi1>, vector<32x32xf32>
    %59 = tpu.concatenate %58, %53 in 1 : vector<32x32xf32>, vector<32x32xf32> -> vector<32x64xf32>
    %cst_17 = arith.constant dense<0.000000e+00> : vector<32x256xf32>
    %60 = tpu.matmul %59, %21, %cst_17 {dimension_numbers = #tpu.dot_dimension_numbers<[1], [0], [0], [1], [0, 0, 1, 1], [], []>} : vector<32x64xf32>, vector<64x256xf32>, vector<32x256xf32> -> vector<32x256xf32>
    %61 = vector.extract_strided_slice %60 {offsets = [0, 0], sizes = [32, 128], strides = [1, 1]} : vector<32x256xf32> to vector<32x128xf32>
    %62 = vector.extract_strided_slice %60 {offsets = [0, 128], sizes = [32, 128], strides = [1, 1]} : vector<32x256xf32> to vector<32x128xf32>
    %63 = vector.shape_cast %20 : vector<32x1xi1> to vector<32x1xi1>
    %64 = vector.broadcast %63 : vector<32x1xi1> to vector<32x128xi1>
    %65 = arith.select %64, %61, %62 : vector<32x128xi1>, vector<32x128xf32>
    %c1 = arith.constant 1 : index
    %c0_18 = arith.constant 0 : index
    %c0_19 = arith.constant 0 : index
    %66 = vector.load %arg1[%c1, %c0_18, %c0_19] : memref<15x32x128xf32, #tpu.memory_space<vmem>>, vector<1x32x128xf32>
    %67 = vector.shape_cast %66 : vector<1x32x128xf32> to vector<32x128xf32>
    %68 = arith.addf %67, %65 : vector<32x128xf32>
    %69 = arith.negf %68 : vector<32x128xf32>
    %70 = math.exp %69 : vector<32x128xf32>
    %cst_20 = arith.constant 1.000000e+00 : f32
    %71 = vector.broadcast %cst_20 : f32 to vector<32x128xf32>
    %72 = arith.addf %71, %70 : vector<32x128xf32>
    %73 = arith.divf %71, %72 : vector<32x128xf32>
    %74 = vector.extract_strided_slice %73 {offsets = [0, 0], sizes = [32, 32], strides = [1, 1]} : vector<32x128xf32> to vector<32x32xf32>
    %75 = vector.extract_strided_slice %73 {offsets = [0, 64], sizes = [32, 32], strides = [1, 1]} : vector<32x128xf32> to vector<32x32xf32>
    %76 = vector.extract_strided_slice %73 {offsets = [0, 96], sizes = [32, 32], strides = [1, 1]} : vector<32x128xf32> to vector<32x32xf32>
    %77 = vector.extract_strided_slice %68 {offsets = [0, 32], sizes = [32, 32], strides = [1, 1]} : vector<32x128xf32> to vector<32x32xf32>
    %78 = math.tanh %77 : vector<32x32xf32>
    %79 = arith.mulf %75, %51 : vector<32x32xf32>
    %80 = arith.mulf %74, %78 : vector<32x32xf32>
    %81 = arith.addf %79, %80 : vector<32x32xf32>
    %82 = math.tanh %51 : vector<32x32xf32>
    %83 = arith.mulf %82, %76 : vector<32x32xf32>
    %c1_i32_21 = arith.constant 1 : i32
    %84 = tpu.dynamic_rotate %83 by %c1_i32_21 dim 0 : vector<32x32xf32>, i32 -> vector<32x32xf32>
    %cst_22 = arith.constant 0.000000e+00 : f32
    %85 = vector.shape_cast %18 : vector<32x1xi1> to vector<32x1xi1>
    %86 = vector.broadcast %85 : vector<32x1xi1> to vector<32x32xi1>
    %87 = vector.broadcast %cst_22 : f32 to vector<32x32xf32>
    %88 = arith.select %86, %84, %87 : vector<32x32xi1>, vector<32x32xf32>
    %89 = tpu.concatenate %88, %83 in 1 : vector<32x32xf32>, vector<32x32xf32> -> vector<32x64xf32>
    %cst_23 = arith.constant dense<0.000000e+00> : vector<32x256xf32>
    %90 = tpu.matmul %89, %21, %cst_23 {dimension_numbers = #tpu.dot_dimension_numbers<[1], [0], [0], [1], [0, 0, 1, 1], [], []>} : vector<32x64xf32>, vector<64x256xf32>, vector<32x256xf32> -> vector<32x256xf32>
    %91 = vector.extract_strided_slice %90 {offsets = [0, 0], sizes = [32, 128], strides = [1, 1]} : vector<32x256xf32> to vector<32x128xf32>
    %92 = vector.extract_strided_slice %90 {offsets = [0, 128], sizes = [32, 128], strides = [1, 1]} : vector<32x256xf32> to vector<32x128xf32>
    %93 = vector.shape_cast %20 : vector<32x1xi1> to vector<32x1xi1>
    %94 = vector.broadcast %93 : vector<32x1xi1> to vector<32x128xi1>
    %95 = arith.select %94, %91, %92 : vector<32x128xi1>, vector<32x128xf32>
    %c2 = arith.constant 2 : index
    %c0_24 = arith.constant 0 : index
    %c0_25 = arith.constant 0 : index
    %96 = vector.load %arg1[%c2, %c0_24, %c0_25] : memref<15x32x128xf32, #tpu.memory_space<vmem>>, vector<1x32x128xf32>
    %97 = vector.shape_cast %96 : vector<1x32x128xf32> to vector<32x128xf32>
    %98 = arith.addf %97, %95 : vector<32x128xf32>
    %99 = arith.negf %98 : vector<32x128xf32>
    %100 = math.exp %99 : vector<32x128xf32>
    %cst_26 = arith.constant 1.000000e+00 : f32
    %101 = vector.broadcast %cst_26 : f32 to vector<32x128xf32>
    %102 = arith.addf %101, %100 : vector<32x128xf32>
    %103 = arith.divf %101, %102 : vector<32x128xf32>
    %104 = vector.extract_strided_slice %103 {offsets = [0, 0], sizes = [32, 32], strides = [1, 1]} : vector<32x128xf32> to vector<32x32xf32>
    %105 = vector.extract_strided_slice %103 {offsets = [0, 64], sizes = [32, 32], strides = [1, 1]} : vector<32x128xf32> to vector<32x32xf32>
    %106 = vector.extract_strided_slice %103 {offsets = [0, 96], sizes = [32, 32], strides = [1, 1]} : vector<32x128xf32> to vector<32x32xf32>
    %107 = vector.extract_strided_slice %98 {offsets = [0, 32], sizes = [32, 32], strides = [1, 1]} : vector<32x128xf32> to vector<32x32xf32>
    %108 = math.tanh %107 : vector<32x32xf32>
    %109 = arith.mulf %105, %81 : vector<32x32xf32>
    %110 = arith.mulf %104, %108 : vector<32x32xf32>
    %111 = arith.addf %109, %110 : vector<32x32xf32>
    %112 = math.tanh %81 : vector<32x32xf32>
    %113 = arith.mulf %112, %106 : vector<32x32xf32>
    %c1_i32_27 = arith.constant 1 : i32
    %114 = tpu.dynamic_rotate %113 by %c1_i32_27 dim 0 : vector<32x32xf32>, i32 -> vector<32x32xf32>
    %cst_28 = arith.constant 0.000000e+00 : f32
    %115 = vector.shape_cast %18 : vector<32x1xi1> to vector<32x1xi1>
    %116 = vector.broadcast %115 : vector<32x1xi1> to vector<32x32xi1>
    %117 = vector.broadcast %cst_28 : f32 to vector<32x32xf32>
    %118 = arith.select %116, %114, %117 : vector<32x32xi1>, vector<32x32xf32>
    %119 = tpu.concatenate %118, %113 in 1 : vector<32x32xf32>, vector<32x32xf32> -> vector<32x64xf32>
    %cst_29 = arith.constant dense<0.000000e+00> : vector<32x256xf32>
    %120 = tpu.matmul %119, %21, %cst_29 {dimension_numbers = #tpu.dot_dimension_numbers<[1], [0], [0], [1], [0, 0, 1, 1], [], []>} : vector<32x64xf32>, vector<64x256xf32>, vector<32x256xf32> -> vector<32x256xf32>
    %121 = vector.extract_strided_slice %120 {offsets = [0, 0], sizes = [32, 128], strides = [1, 1]} : vector<32x256xf32> to vector<32x128xf32>
    %122 = vector.extract_strided_slice %120 {offsets = [0, 128], sizes = [32, 128], strides = [1, 1]} : vector<32x256xf32> to vector<32x128xf32>
    %123 = vector.shape_cast %20 : vector<32x1xi1> to vector<32x1xi1>
    %124 = vector.broadcast %123 : vector<32x1xi1> to vector<32x128xi1>
    %125 = arith.select %124, %121, %122 : vector<32x128xi1>, vector<32x128xf32>
    %c3 = arith.constant 3 : index
    %c0_30 = arith.constant 0 : index
    %c0_31 = arith.constant 0 : index
    %126 = vector.load %arg1[%c3, %c0_30, %c0_31] : memref<15x32x128xf32, #tpu.memory_space<vmem>>, vector<1x32x128xf32>
    %127 = vector.shape_cast %126 : vector<1x32x128xf32> to vector<32x128xf32>
    %128 = arith.addf %127, %125 : vector<32x128xf32>
    %129 = arith.negf %128 : vector<32x128xf32>
    %130 = math.exp %129 : vector<32x128xf32>
    %cst_32 = arith.constant 1.000000e+00 : f32
    %131 = vector.broadcast %cst_32 : f32 to vector<32x128xf32>
    %132 = arith.addf %131, %130 : vector<32x128xf32>
    %133 = arith.divf %131, %132 : vector<32x128xf32>
    %134 = vector.extract_strided_slice %133 {offsets = [0, 0], sizes = [32, 32], strides = [1, 1]} : vector<32x128xf32> to vector<32x32xf32>
    %135 = vector.extract_strided_slice %133 {offsets = [0, 64], sizes = [32, 32], strides = [1, 1]} : vector<32x128xf32> to vector<32x32xf32>
    %136 = vector.extract_strided_slice %133 {offsets = [0, 96], sizes = [32, 32], strides = [1, 1]} : vector<32x128xf32> to vector<32x32xf32>
    %137 = vector.extract_strided_slice %128 {offsets = [0, 32], sizes = [32, 32], strides = [1, 1]} : vector<32x128xf32> to vector<32x32xf32>
    %138 = math.tanh %137 : vector<32x32xf32>
    %139 = arith.mulf %135, %111 : vector<32x32xf32>
    %140 = arith.mulf %134, %138 : vector<32x32xf32>
    %141 = arith.addf %139, %140 : vector<32x32xf32>
    %142 = math.tanh %111 : vector<32x32xf32>
    %143 = arith.mulf %142, %136 : vector<32x32xf32>
    %144 = tpu.concatenate %53, %83, %113, %143 in 1 : vector<32x32xf32>, vector<32x32xf32>, vector<32x32xf32>, vector<32x32xf32> -> vector<32x128xf32>
    %c0_33 = arith.constant 0 : index
    %c0_34 = arith.constant 0 : index
    %c0_35 = arith.constant 0 : index
    %145 = vector.load %arg5[%c0_33, %c0_34, %c0_35] : memref<4x32x128xf32, #tpu.memory_space<vmem>>, vector<1x32x128xf32>
    %146 = vector.shape_cast %145 : vector<1x32x128xf32> to vector<32x128xf32>
    %147 = vector.shape_cast %144 : vector<32x128xf32> to vector<1x32x128xf32>
    tpu.vector_store %arg5[%c0_33, %c0_34, %c0_35], %147 {strides = array<i32>} : memref<4x32x128xf32, #tpu.memory_space<vmem>>, vector<1x32x128xf32>,
    %c1_i32_36 = arith.constant 1 : i32
    %148 = tpu.dynamic_rotate %143 by %c1_i32_36 dim 0 : vector<32x32xf32>, i32 -> vector<32x32xf32>
    %cst_37 = arith.constant 0.000000e+00 : f32
    %149 = vector.shape_cast %18 : vector<32x1xi1> to vector<32x1xi1>
    %150 = vector.broadcast %149 : vector<32x1xi1> to vector<32x32xi1>
    %151 = vector.broadcast %cst_37 : f32 to vector<32x32xf32>
    %152 = arith.select %150, %148, %151 : vector<32x32xi1>, vector<32x32xf32>
    %153 = tpu.concatenate %152, %143 in 1 : vector<32x32xf32>, vector<32x32xf32> -> vector<32x64xf32>
    %cst_38 = arith.constant dense<0.000000e+00> : vector<32x256xf32>
    %154 = tpu.matmul %153, %21, %cst_38 {dimension_numbers = #tpu.dot_dimension_numbers<[1], [0], [0], [1], [0, 0, 1, 1], [], []>} : vector<32x64xf32>, vector<64x256xf32>, vector<32x256xf32> -> vector<32x256xf32>
    %155 = vector.extract_strided_slice %154 {offsets = [0, 0], sizes = [32, 128], strides = [1, 1]} : vector<32x256xf32> to vector<32x128xf32>
    %156 = vector.extract_strided_slice %154 {offsets = [0, 128], sizes = [32, 128], strides = [1, 1]} : vector<32x256xf32> to vector<32x128xf32>
    %157 = vector.shape_cast %20 : vector<32x1xi1> to vector<32x1xi1>
    %158 = vector.broadcast %157 : vector<32x1xi1> to vector<32x128xi1>
    %159 = arith.select %158, %155, %156 : vector<32x128xi1>, vector<32x128xf32>
    %c4 = arith.constant 4 : index
    %c0_39 = arith.constant 0 : index
    %c0_40 = arith.constant 0 : index
    %160 = vector.load %arg1[%c4, %c0_39, %c0_40] : memref<15x32x128xf32, #tpu.memory_space<vmem>>, vector<1x32x128xf32>
    %161 = vector.shape_cast %160 : vector<1x32x128xf32> to vector<32x128xf32>
    %162 = arith.addf %161, %159 : vector<32x128xf32>
    %163 = arith.negf %162 : vector<32x128xf32>
    %164 = math.exp %163 : vector<32x128xf32>
    %cst_41 = arith.constant 1.000000e+00 : f32
    %165 = vector.broadcast %cst_41 : f32 to vector<32x128xf32>
    %166 = arith.addf %165, %164 : vector<32x128xf32>
    %167 = arith.divf %165, %166 : vector<32x128xf32>
    %168 = vector.extract_strided_slice %167 {offsets = [0, 0], sizes = [32, 32], strides = [1, 1]} : vector<32x128xf32> to vector<32x32xf32>
    %169 = vector.extract_strided_slice %167 {offsets = [0, 64], sizes = [32, 32], strides = [1, 1]} : vector<32x128xf32> to vector<32x32xf32>
    %170 = vector.extract_strided_slice %167 {offsets = [0, 96], sizes = [32, 32], strides = [1, 1]} : vector<32x128xf32> to vector<32x32xf32>
    %171 = vector.extract_strided_slice %162 {offsets = [0, 32], sizes = [32, 32], strides = [1, 1]} : vector<32x128xf32> to vector<32x32xf32>
    %172 = math.tanh %171 : vector<32x32xf32>
    %173 = arith.mulf %169, %141 : vector<32x32xf32>
    %174 = arith.mulf %168, %172 : vector<32x32xf32>
    %175 = arith.addf %173, %174 : vector<32x32xf32>
    %176 = math.tanh %141 : vector<32x32xf32>
    %177 = arith.mulf %176, %170 : vector<32x32xf32>
    %c1_i32_42 = arith.constant 1 : i32
    %178 = tpu.dynamic_rotate %177 by %c1_i32_42 dim 0 : vector<32x32xf32>, i32 -> vector<32x32xf32>
    %cst_43 = arith.constant 0.000000e+00 : f32
    %179 = vector.shape_cast %18 : vector<32x1xi1> to vector<32x1xi1>
    %180 = vector.broadcast %179 : vector<32x1xi1> to vector<32x32xi1>
    %181 = vector.broadcast %cst_43 : f32 to vector<32x32xf32>
    %182 = arith.select %180, %178, %181 : vector<32x32xi1>, vector<32x32xf32>
    %183 = tpu.concatenate %182, %177 in 1 : vector<32x32xf32>, vector<32x32xf32> -> vector<32x64xf32>
    %cst_44 = arith.constant dense<0.000000e+00> : vector<32x256xf32>
    %184 = tpu.matmul %183, %21, %cst_44 {dimension_numbers = #tpu.dot_dimension_numbers<[1], [0], [0], [1], [0, 0, 1, 1], [], []>} : vector<32x64xf32>, vector<64x256xf32>, vector<32x256xf32> -> vector<32x256xf32>
    %185 = vector.extract_strided_slice %184 {offsets = [0, 0], sizes = [32, 128], strides = [1, 1]} : vector<32x256xf32> to vector<32x128xf32>
    %186 = vector.extract_strided_slice %184 {offsets = [0, 128], sizes = [32, 128], strides = [1, 1]} : vector<32x256xf32> to vector<32x128xf32>
    %187 = vector.shape_cast %20 : vector<32x1xi1> to vector<32x1xi1>
    %188 = vector.broadcast %187 : vector<32x1xi1> to vector<32x128xi1>
    %189 = arith.select %188, %185, %186 : vector<32x128xi1>, vector<32x128xf32>
    %c5 = arith.constant 5 : index
    %c0_45 = arith.constant 0 : index
    %c0_46 = arith.constant 0 : index
    %190 = vector.load %arg1[%c5, %c0_45, %c0_46] : memref<15x32x128xf32, #tpu.memory_space<vmem>>, vector<1x32x128xf32>
    %191 = vector.shape_cast %190 : vector<1x32x128xf32> to vector<32x128xf32>
    %192 = arith.addf %191, %189 : vector<32x128xf32>
    %193 = arith.negf %192 : vector<32x128xf32>
    %194 = math.exp %193 : vector<32x128xf32>
    %cst_47 = arith.constant 1.000000e+00 : f32
    %195 = vector.broadcast %cst_47 : f32 to vector<32x128xf32>
    %196 = arith.addf %195, %194 : vector<32x128xf32>
    %197 = arith.divf %195, %196 : vector<32x128xf32>
    %198 = vector.extract_strided_slice %197 {offsets = [0, 0], sizes = [32, 32], strides = [1, 1]} : vector<32x128xf32> to vector<32x32xf32>
    %199 = vector.extract_strided_slice %197 {offsets = [0, 64], sizes = [32, 32], strides = [1, 1]} : vector<32x128xf32> to vector<32x32xf32>
    %200 = vector.extract_strided_slice %197 {offsets = [0, 96], sizes = [32, 32], strides = [1, 1]} : vector<32x128xf32> to vector<32x32xf32>
    %201 = vector.extract_strided_slice %192 {offsets = [0, 32], sizes = [32, 32], strides = [1, 1]} : vector<32x128xf32> to vector<32x32xf32>
    %202 = math.tanh %201 : vector<32x32xf32>
    %203 = arith.mulf %199, %175 : vector<32x32xf32>
    %204 = arith.mulf %198, %202 : vector<32x32xf32>
    %205 = arith.addf %203, %204 : vector<32x32xf32>
    %206 = math.tanh %175 : vector<32x32xf32>
    %207 = arith.mulf %206, %200 : vector<32x32xf32>
    %c1_i32_48 = arith.constant 1 : i32
    %208 = tpu.dynamic_rotate %207 by %c1_i32_48 dim 0 : vector<32x32xf32>, i32 -> vector<32x32xf32>
    %cst_49 = arith.constant 0.000000e+00 : f32
    %209 = vector.shape_cast %18 : vector<32x1xi1> to vector<32x1xi1>
    %210 = vector.broadcast %209 : vector<32x1xi1> to vector<32x32xi1>
    %211 = vector.broadcast %cst_49 : f32 to vector<32x32xf32>
    %212 = arith.select %210, %208, %211 : vector<32x32xi1>, vector<32x32xf32>
    %213 = tpu.concatenate %212, %207 in 1 : vector<32x32xf32>, vector<32x32xf32> -> vector<32x64xf32>
    %cst_50 = arith.constant dense<0.000000e+00> : vector<32x256xf32>
    %214 = tpu.matmul %213, %21, %cst_50 {dimension_numbers = #tpu.dot_dimension_numbers<[1], [0], [0], [1], [0, 0, 1, 1], [], []>} : vector<32x64xf32>, vector<64x256xf32>, vector<32x256xf32> -> vector<32x256xf32>
    %215 = vector.extract_strided_slice %214 {offsets = [0, 0], sizes = [32, 128], strides = [1, 1]} : vector<32x256xf32> to vector<32x128xf32>
    %216 = vector.extract_strided_slice %214 {offsets = [0, 128], sizes = [32, 128], strides = [1, 1]} : vector<32x256xf32> to vector<32x128xf32>
    %217 = vector.shape_cast %20 : vector<32x1xi1> to vector<32x1xi1>
    %218 = vector.broadcast %217 : vector<32x1xi1> to vector<32x128xi1>
    %219 = arith.select %218, %215, %216 : vector<32x128xi1>, vector<32x128xf32>
    %c6 = arith.constant 6 : index
    %c0_51 = arith.constant 0 : index
    %c0_52 = arith.constant 0 : index
    %220 = vector.load %arg1[%c6, %c0_51, %c0_52] : memref<15x32x128xf32, #tpu.memory_space<vmem>>, vector<1x32x128xf32>
    %221 = vector.shape_cast %220 : vector<1x32x128xf32> to vector<32x128xf32>
    %222 = arith.addf %221, %219 : vector<32x128xf32>
    %223 = arith.negf %222 : vector<32x128xf32>
    %224 = math.exp %223 : vector<32x128xf32>
    %cst_53 = arith.constant 1.000000e+00 : f32
    %225 = vector.broadcast %cst_53 : f32 to vector<32x128xf32>
    %226 = arith.addf %225, %224 : vector<32x128xf32>
    %227 = arith.divf %225, %226 : vector<32x128xf32>
    %228 = vector.extract_strided_slice %227 {offsets = [0, 0], sizes = [32, 32], strides = [1, 1]} : vector<32x128xf32> to vector<32x32xf32>
    %229 = vector.extract_strided_slice %227 {offsets = [0, 64], sizes = [32, 32], strides = [1, 1]} : vector<32x128xf32> to vector<32x32xf32>
    %230 = vector.extract_strided_slice %227 {offsets = [0, 96], sizes = [32, 32], strides = [1, 1]} : vector<32x128xf32> to vector<32x32xf32>
    %231 = vector.extract_strided_slice %222 {offsets = [0, 32], sizes = [32, 32], strides = [1, 1]} : vector<32x128xf32> to vector<32x32xf32>
    %232 = math.tanh %231 : vector<32x32xf32>
    %233 = arith.mulf %229, %205 : vector<32x32xf32>
    %234 = arith.mulf %228, %232 : vector<32x32xf32>
    %235 = arith.addf %233, %234 : vector<32x32xf32>
    %236 = math.tanh %205 : vector<32x32xf32>
    %237 = arith.mulf %236, %230 : vector<32x32xf32>
    %c1_i32_54 = arith.constant 1 : i32
    %238 = tpu.dynamic_rotate %237 by %c1_i32_54 dim 0 : vector<32x32xf32>, i32 -> vector<32x32xf32>
    %cst_55 = arith.constant 0.000000e+00 : f32
    %239 = vector.shape_cast %18 : vector<32x1xi1> to vector<32x1xi1>
    %240 = vector.broadcast %239 : vector<32x1xi1> to vector<32x32xi1>
    %241 = vector.broadcast %cst_55 : f32 to vector<32x32xf32>
    %242 = arith.select %240, %238, %241 : vector<32x32xi1>, vector<32x32xf32>
    %243 = tpu.concatenate %242, %237 in 1 : vector<32x32xf32>, vector<32x32xf32> -> vector<32x64xf32>
    %cst_56 = arith.constant dense<0.000000e+00> : vector<32x256xf32>
    %244 = tpu.matmul %243, %21, %cst_56 {dimension_numbers = #tpu.dot_dimension_numbers<[1], [0], [0], [1], [0, 0, 1, 1], [], []>} : vector<32x64xf32>, vector<64x256xf32>, vector<32x256xf32> -> vector<32x256xf32>
    %245 = vector.extract_strided_slice %244 {offsets = [0, 0], sizes = [32, 128], strides = [1, 1]} : vector<32x256xf32> to vector<32x128xf32>
    %246 = vector.extract_strided_slice %244 {offsets = [0, 128], sizes = [32, 128], strides = [1, 1]} : vector<32x256xf32> to vector<32x128xf32>
    %247 = vector.shape_cast %20 : vector<32x1xi1> to vector<32x1xi1>
    %248 = vector.broadcast %247 : vector<32x1xi1> to vector<32x128xi1>
    %249 = arith.select %248, %245, %246 : vector<32x128xi1>, vector<32x128xf32>
    %c7 = arith.constant 7 : index
    %c0_57 = arith.constant 0 : index
    %c0_58 = arith.constant 0 : index
    %250 = vector.load %arg1[%c7, %c0_57, %c0_58] : memref<15x32x128xf32, #tpu.memory_space<vmem>>, vector<1x32x128xf32>
    %251 = vector.shape_cast %250 : vector<1x32x128xf32> to vector<32x128xf32>
    %252 = arith.addf %251, %249 : vector<32x128xf32>
    %253 = arith.negf %252 : vector<32x128xf32>
    %254 = math.exp %253 : vector<32x128xf32>
    %cst_59 = arith.constant 1.000000e+00 : f32
    %255 = vector.broadcast %cst_59 : f32 to vector<32x128xf32>
    %256 = arith.addf %255, %254 : vector<32x128xf32>
    %257 = arith.divf %255, %256 : vector<32x128xf32>
    %258 = vector.extract_strided_slice %257 {offsets = [0, 0], sizes = [32, 32], strides = [1, 1]} : vector<32x128xf32> to vector<32x32xf32>
    %259 = vector.extract_strided_slice %257 {offsets = [0, 64], sizes = [32, 32], strides = [1, 1]} : vector<32x128xf32> to vector<32x32xf32>
    %260 = vector.extract_strided_slice %257 {offsets = [0, 96], sizes = [32, 32], strides = [1, 1]} : vector<32x128xf32> to vector<32x32xf32>
    %261 = vector.extract_strided_slice %252 {offsets = [0, 32], sizes = [32, 32], strides = [1, 1]} : vector<32x128xf32> to vector<32x32xf32>
    %262 = math.tanh %261 : vector<32x32xf32>
    %263 = arith.mulf %259, %235 : vector<32x32xf32>
    %264 = arith.mulf %258, %262 : vector<32x32xf32>
    %265 = arith.addf %263, %264 : vector<32x32xf32>
    %266 = math.tanh %235 : vector<32x32xf32>
    %267 = arith.mulf %266, %260 : vector<32x32xf32>
    %268 = tpu.concatenate %177, %207, %237, %267 in 1 : vector<32x32xf32>, vector<32x32xf32>, vector<32x32xf32>, vector<32x32xf32> -> vector<32x128xf32>
    %c1_60 = arith.constant 1 : index
    %c0_61 = arith.constant 0 : index
    %c0_62 = arith.constant 0 : index
    %269 = vector.load %arg5[%c1_60, %c0_61, %c0_62] : memref<4x32x128xf32, #tpu.memory_space<vmem>>, vector<1x32x128xf32>
    %270 = vector.shape_cast %269 : vector<1x32x128xf32> to vector<32x128xf32>
    %271 = vector.shape_cast %268 : vector<32x128xf32> to vector<1x32x128xf32>
    tpu.vector_store %arg5[%c1_60, %c0_61, %c0_62], %271 {strides = array<i32>} : memref<4x32x128xf32, #tpu.memory_space<vmem>>, vector<1x32x128xf32>,
    %c1_i32_63 = arith.constant 1 : i32
    %272 = tpu.dynamic_rotate %267 by %c1_i32_63 dim 0 : vector<32x32xf32>, i32 -> vector<32x32xf32>
    %cst_64 = arith.constant 0.000000e+00 : f32
    %273 = vector.shape_cast %18 : vector<32x1xi1> to vector<32x1xi1>
    %274 = vector.broadcast %273 : vector<32x1xi1> to vector<32x32xi1>
    %275 = vector.broadcast %cst_64 : f32 to vector<32x32xf32>
    %276 = arith.select %274, %272, %275 : vector<32x32xi1>, vector<32x32xf32>
    %277 = tpu.concatenate %276, %267 in 1 : vector<32x32xf32>, vector<32x32xf32> -> vector<32x64xf32>
    %cst_65 = arith.constant dense<0.000000e+00> : vector<32x256xf32>
    %278 = tpu.matmul %277, %21, %cst_65 {dimension_numbers = #tpu.dot_dimension_numbers<[1], [0], [0], [1], [0, 0, 1, 1], [], []>} : vector<32x64xf32>, vector<64x256xf32>, vector<32x256xf32> -> vector<32x256xf32>
    %279 = vector.extract_strided_slice %278 {offsets = [0, 0], sizes = [32, 128], strides = [1, 1]} : vector<32x256xf32> to vector<32x128xf32>
    %280 = vector.extract_strided_slice %278 {offsets = [0, 128], sizes = [32, 128], strides = [1, 1]} : vector<32x256xf32> to vector<32x128xf32>
    %281 = vector.shape_cast %20 : vector<32x1xi1> to vector<32x1xi1>
    %282 = vector.broadcast %281 : vector<32x1xi1> to vector<32x128xi1>
    %283 = arith.select %282, %279, %280 : vector<32x128xi1>, vector<32x128xf32>
    %c8 = arith.constant 8 : index
    %c0_66 = arith.constant 0 : index
    %c0_67 = arith.constant 0 : index
    %284 = vector.load %arg1[%c8, %c0_66, %c0_67] : memref<15x32x128xf32, #tpu.memory_space<vmem>>, vector<1x32x128xf32>
    %285 = vector.shape_cast %284 : vector<1x32x128xf32> to vector<32x128xf32>
    %286 = arith.addf %285, %283 : vector<32x128xf32>
    %287 = arith.negf %286 : vector<32x128xf32>
    %288 = math.exp %287 : vector<32x128xf32>
    %cst_68 = arith.constant 1.000000e+00 : f32
    %289 = vector.broadcast %cst_68 : f32 to vector<32x128xf32>
    %290 = arith.addf %289, %288 : vector<32x128xf32>
    %291 = arith.divf %289, %290 : vector<32x128xf32>
    %292 = vector.extract_strided_slice %291 {offsets = [0, 0], sizes = [32, 32], strides = [1, 1]} : vector<32x128xf32> to vector<32x32xf32>
    %293 = vector.extract_strided_slice %291 {offsets = [0, 64], sizes = [32, 32], strides = [1, 1]} : vector<32x128xf32> to vector<32x32xf32>
    %294 = vector.extract_strided_slice %291 {offsets = [0, 96], sizes = [32, 32], strides = [1, 1]} : vector<32x128xf32> to vector<32x32xf32>
    %295 = vector.extract_strided_slice %286 {offsets = [0, 32], sizes = [32, 32], strides = [1, 1]} : vector<32x128xf32> to vector<32x32xf32>
    %296 = math.tanh %295 : vector<32x32xf32>
    %297 = arith.mulf %293, %265 : vector<32x32xf32>
    %298 = arith.mulf %292, %296 : vector<32x32xf32>
    %299 = arith.addf %297, %298 : vector<32x32xf32>
    %300 = math.tanh %265 : vector<32x32xf32>
    %301 = arith.mulf %300, %294 : vector<32x32xf32>
    %c1_i32_69 = arith.constant 1 : i32
    %302 = tpu.dynamic_rotate %301 by %c1_i32_69 dim 0 : vector<32x32xf32>, i32 -> vector<32x32xf32>
    %cst_70 = arith.constant 0.000000e+00 : f32
    %303 = vector.shape_cast %18 : vector<32x1xi1> to vector<32x1xi1>
    %304 = vector.broadcast %303 : vector<32x1xi1> to vector<32x32xi1>
    %305 = vector.broadcast %cst_70 : f32 to vector<32x32xf32>
    %306 = arith.select %304, %302, %305 : vector<32x32xi1>, vector<32x32xf32>
    %307 = tpu.concatenate %306, %301 in 1 : vector<32x32xf32>, vector<32x32xf32> -> vector<32x64xf32>
    %cst_71 = arith.constant dense<0.000000e+00> : vector<32x256xf32>
    %308 = tpu.matmul %307, %21, %cst_71 {dimension_numbers = #tpu.dot_dimension_numbers<[1], [0], [0], [1], [0, 0, 1, 1], [], []>} : vector<32x64xf32>, vector<64x256xf32>, vector<32x256xf32> -> vector<32x256xf32>
    %309 = vector.extract_strided_slice %308 {offsets = [0, 0], sizes = [32, 128], strides = [1, 1]} : vector<32x256xf32> to vector<32x128xf32>
    %310 = vector.extract_strided_slice %308 {offsets = [0, 128], sizes = [32, 128], strides = [1, 1]} : vector<32x256xf32> to vector<32x128xf32>
    %311 = vector.shape_cast %20 : vector<32x1xi1> to vector<32x1xi1>
    %312 = vector.broadcast %311 : vector<32x1xi1> to vector<32x128xi1>
    %313 = arith.select %312, %309, %310 : vector<32x128xi1>, vector<32x128xf32>
    %c9 = arith.constant 9 : index
    %c0_72 = arith.constant 0 : index
    %c0_73 = arith.constant 0 : index
    %314 = vector.load %arg1[%c9, %c0_72, %c0_73] : memref<15x32x128xf32, #tpu.memory_space<vmem>>, vector<1x32x128xf32>
    %315 = vector.shape_cast %314 : vector<1x32x128xf32> to vector<32x128xf32>
    %316 = arith.addf %315, %313 : vector<32x128xf32>
    %317 = arith.negf %316 : vector<32x128xf32>
    %318 = math.exp %317 : vector<32x128xf32>
    %cst_74 = arith.constant 1.000000e+00 : f32
    %319 = vector.broadcast %cst_74 : f32 to vector<32x128xf32>
    %320 = arith.addf %319, %318 : vector<32x128xf32>
    %321 = arith.divf %319, %320 : vector<32x128xf32>
    %322 = vector.extract_strided_slice %321 {offsets = [0, 0], sizes = [32, 32], strides = [1, 1]} : vector<32x128xf32> to vector<32x32xf32>
    %323 = vector.extract_strided_slice %321 {offsets = [0, 64], sizes = [32, 32], strides = [1, 1]} : vector<32x128xf32> to vector<32x32xf32>
    %324 = vector.extract_strided_slice %321 {offsets = [0, 96], sizes = [32, 32], strides = [1, 1]} : vector<32x128xf32> to vector<32x32xf32>
    %325 = vector.extract_strided_slice %316 {offsets = [0, 32], sizes = [32, 32], strides = [1, 1]} : vector<32x128xf32> to vector<32x32xf32>
    %326 = math.tanh %325 : vector<32x32xf32>
    %327 = arith.mulf %323, %299 : vector<32x32xf32>
    %328 = arith.mulf %322, %326 : vector<32x32xf32>
    %329 = arith.addf %327, %328 : vector<32x32xf32>
    %330 = math.tanh %299 : vector<32x32xf32>
    %331 = arith.mulf %330, %324 : vector<32x32xf32>
    %c1_i32_75 = arith.constant 1 : i32
    %332 = tpu.dynamic_rotate %331 by %c1_i32_75 dim 0 : vector<32x32xf32>, i32 -> vector<32x32xf32>
    %cst_76 = arith.constant 0.000000e+00 : f32
    %333 = vector.shape_cast %18 : vector<32x1xi1> to vector<32x1xi1>
    %334 = vector.broadcast %333 : vector<32x1xi1> to vector<32x32xi1>
    %335 = vector.broadcast %cst_76 : f32 to vector<32x32xf32>
    %336 = arith.select %334, %332, %335 : vector<32x32xi1>, vector<32x32xf32>
    %337 = tpu.concatenate %336, %331 in 1 : vector<32x32xf32>, vector<32x32xf32> -> vector<32x64xf32>
    %cst_77 = arith.constant dense<0.000000e+00> : vector<32x256xf32>
    %338 = tpu.matmul %337, %21, %cst_77 {dimension_numbers = #tpu.dot_dimension_numbers<[1], [0], [0], [1], [0, 0, 1, 1], [], []>} : vector<32x64xf32>, vector<64x256xf32>, vector<32x256xf32> -> vector<32x256xf32>
    %339 = vector.extract_strided_slice %338 {offsets = [0, 0], sizes = [32, 128], strides = [1, 1]} : vector<32x256xf32> to vector<32x128xf32>
    %340 = vector.extract_strided_slice %338 {offsets = [0, 128], sizes = [32, 128], strides = [1, 1]} : vector<32x256xf32> to vector<32x128xf32>
    %341 = vector.shape_cast %20 : vector<32x1xi1> to vector<32x1xi1>
    %342 = vector.broadcast %341 : vector<32x1xi1> to vector<32x128xi1>
    %343 = arith.select %342, %339, %340 : vector<32x128xi1>, vector<32x128xf32>
    %c10 = arith.constant 10 : index
    %c0_78 = arith.constant 0 : index
    %c0_79 = arith.constant 0 : index
    %344 = vector.load %arg1[%c10, %c0_78, %c0_79] : memref<15x32x128xf32, #tpu.memory_space<vmem>>, vector<1x32x128xf32>
    %345 = vector.shape_cast %344 : vector<1x32x128xf32> to vector<32x128xf32>
    %346 = arith.addf %345, %343 : vector<32x128xf32>
    %347 = arith.negf %346 : vector<32x128xf32>
    %348 = math.exp %347 : vector<32x128xf32>
    %cst_80 = arith.constant 1.000000e+00 : f32
    %349 = vector.broadcast %cst_80 : f32 to vector<32x128xf32>
    %350 = arith.addf %349, %348 : vector<32x128xf32>
    %351 = arith.divf %349, %350 : vector<32x128xf32>
    %352 = vector.extract_strided_slice %351 {offsets = [0, 0], sizes = [32, 32], strides = [1, 1]} : vector<32x128xf32> to vector<32x32xf32>
    %353 = vector.extract_strided_slice %351 {offsets = [0, 64], sizes = [32, 32], strides = [1, 1]} : vector<32x128xf32> to vector<32x32xf32>
    %354 = vector.extract_strided_slice %351 {offsets = [0, 96], sizes = [32, 32], strides = [1, 1]} : vector<32x128xf32> to vector<32x32xf32>
    %355 = vector.extract_strided_slice %346 {offsets = [0, 32], sizes = [32, 32], strides = [1, 1]} : vector<32x128xf32> to vector<32x32xf32>
    %356 = math.tanh %355 : vector<32x32xf32>
    %357 = arith.mulf %353, %329 : vector<32x32xf32>
    %358 = arith.mulf %352, %356 : vector<32x32xf32>
    %359 = arith.addf %357, %358 : vector<32x32xf32>
    %360 = math.tanh %329 : vector<32x32xf32>
    %361 = arith.mulf %360, %354 : vector<32x32xf32>
    %c1_i32_81 = arith.constant 1 : i32
    %362 = tpu.dynamic_rotate %361 by %c1_i32_81 dim 0 : vector<32x32xf32>, i32 -> vector<32x32xf32>
    %cst_82 = arith.constant 0.000000e+00 : f32
    %363 = vector.shape_cast %18 : vector<32x1xi1> to vector<32x1xi1>
    %364 = vector.broadcast %363 : vector<32x1xi1> to vector<32x32xi1>
    %365 = vector.broadcast %cst_82 : f32 to vector<32x32xf32>
    %366 = arith.select %364, %362, %365 : vector<32x32xi1>, vector<32x32xf32>
    %367 = tpu.concatenate %366, %361 in 1 : vector<32x32xf32>, vector<32x32xf32> -> vector<32x64xf32>
    %cst_83 = arith.constant dense<0.000000e+00> : vector<32x256xf32>
    %368 = tpu.matmul %367, %21, %cst_83 {dimension_numbers = #tpu.dot_dimension_numbers<[1], [0], [0], [1], [0, 0, 1, 1], [], []>} : vector<32x64xf32>, vector<64x256xf32>, vector<32x256xf32> -> vector<32x256xf32>
    %369 = vector.extract_strided_slice %368 {offsets = [0, 0], sizes = [32, 128], strides = [1, 1]} : vector<32x256xf32> to vector<32x128xf32>
    %370 = vector.extract_strided_slice %368 {offsets = [0, 128], sizes = [32, 128], strides = [1, 1]} : vector<32x256xf32> to vector<32x128xf32>
    %371 = vector.shape_cast %20 : vector<32x1xi1> to vector<32x1xi1>
    %372 = vector.broadcast %371 : vector<32x1xi1> to vector<32x128xi1>
    %373 = arith.select %372, %369, %370 : vector<32x128xi1>, vector<32x128xf32>
    %c11 = arith.constant 11 : index
    %c0_84 = arith.constant 0 : index
    %c0_85 = arith.constant 0 : index
    %374 = vector.load %arg1[%c11, %c0_84, %c0_85] : memref<15x32x128xf32, #tpu.memory_space<vmem>>, vector<1x32x128xf32>
    %375 = vector.shape_cast %374 : vector<1x32x128xf32> to vector<32x128xf32>
    %376 = arith.addf %375, %373 : vector<32x128xf32>
    %377 = arith.negf %376 : vector<32x128xf32>
    %378 = math.exp %377 : vector<32x128xf32>
    %cst_86 = arith.constant 1.000000e+00 : f32
    %379 = vector.broadcast %cst_86 : f32 to vector<32x128xf32>
    %380 = arith.addf %379, %378 : vector<32x128xf32>
    %381 = arith.divf %379, %380 : vector<32x128xf32>
    %382 = vector.extract_strided_slice %381 {offsets = [0, 0], sizes = [32, 32], strides = [1, 1]} : vector<32x128xf32> to vector<32x32xf32>
    %383 = vector.extract_strided_slice %381 {offsets = [0, 64], sizes = [32, 32], strides = [1, 1]} : vector<32x128xf32> to vector<32x32xf32>
    %384 = vector.extract_strided_slice %381 {offsets = [0, 96], sizes = [32, 32], strides = [1, 1]} : vector<32x128xf32> to vector<32x32xf32>
    %385 = vector.extract_strided_slice %376 {offsets = [0, 32], sizes = [32, 32], strides = [1, 1]} : vector<32x128xf32> to vector<32x32xf32>
    %386 = math.tanh %385 : vector<32x32xf32>
    %387 = arith.mulf %383, %359 : vector<32x32xf32>
    %388 = arith.mulf %382, %386 : vector<32x32xf32>
    %389 = arith.addf %387, %388 : vector<32x32xf32>
    %390 = math.tanh %359 : vector<32x32xf32>
    %391 = arith.mulf %390, %384 : vector<32x32xf32>
    %392 = tpu.concatenate %301, %331, %361, %391 in 1 : vector<32x32xf32>, vector<32x32xf32>, vector<32x32xf32>, vector<32x32xf32> -> vector<32x128xf32>
    %c2_87 = arith.constant 2 : index
    %c0_88 = arith.constant 0 : index
    %c0_89 = arith.constant 0 : index
    %393 = vector.load %arg5[%c2_87, %c0_88, %c0_89] : memref<4x32x128xf32, #tpu.memory_space<vmem>>, vector<1x32x128xf32>
    %394 = vector.shape_cast %393 : vector<1x32x128xf32> to vector<32x128xf32>
    %395 = vector.shape_cast %392 : vector<32x128xf32> to vector<1x32x128xf32>
    tpu.vector_store %arg5[%c2_87, %c0_88, %c0_89], %395 {strides = array<i32>} : memref<4x32x128xf32, #tpu.memory_space<vmem>>, vector<1x32x128xf32>,
    %c1_i32_90 = arith.constant 1 : i32
    %396 = tpu.dynamic_rotate %391 by %c1_i32_90 dim 0 : vector<32x32xf32>, i32 -> vector<32x32xf32>
    %cst_91 = arith.constant 0.000000e+00 : f32
    %397 = vector.shape_cast %18 : vector<32x1xi1> to vector<32x1xi1>
    %398 = vector.broadcast %397 : vector<32x1xi1> to vector<32x32xi1>
    %399 = vector.broadcast %cst_91 : f32 to vector<32x32xf32>
    %400 = arith.select %398, %396, %399 : vector<32x32xi1>, vector<32x32xf32>
    %401 = tpu.concatenate %400, %391 in 1 : vector<32x32xf32>, vector<32x32xf32> -> vector<32x64xf32>
    %cst_92 = arith.constant dense<0.000000e+00> : vector<32x256xf32>
    %402 = tpu.matmul %401, %21, %cst_92 {dimension_numbers = #tpu.dot_dimension_numbers<[1], [0], [0], [1], [0, 0, 1, 1], [], []>} : vector<32x64xf32>, vector<64x256xf32>, vector<32x256xf32> -> vector<32x256xf32>
    %403 = vector.extract_strided_slice %402 {offsets = [0, 0], sizes = [32, 128], strides = [1, 1]} : vector<32x256xf32> to vector<32x128xf32>
    %404 = vector.extract_strided_slice %402 {offsets = [0, 128], sizes = [32, 128], strides = [1, 1]} : vector<32x256xf32> to vector<32x128xf32>
    %405 = vector.shape_cast %20 : vector<32x1xi1> to vector<32x1xi1>
    %406 = vector.broadcast %405 : vector<32x1xi1> to vector<32x128xi1>
    %407 = arith.select %406, %403, %404 : vector<32x128xi1>, vector<32x128xf32>
    %c12 = arith.constant 12 : index
    %c0_93 = arith.constant 0 : index
    %c0_94 = arith.constant 0 : index
    %408 = vector.load %arg1[%c12, %c0_93, %c0_94] : memref<15x32x128xf32, #tpu.memory_space<vmem>>, vector<1x32x128xf32>
    %409 = vector.shape_cast %408 : vector<1x32x128xf32> to vector<32x128xf32>
    %410 = arith.addf %409, %407 : vector<32x128xf32>
    %411 = arith.negf %410 : vector<32x128xf32>
    %412 = math.exp %411 : vector<32x128xf32>
    %cst_95 = arith.constant 1.000000e+00 : f32
    %413 = vector.broadcast %cst_95 : f32 to vector<32x128xf32>
    %414 = arith.addf %413, %412 : vector<32x128xf32>
    %415 = arith.divf %413, %414 : vector<32x128xf32>
    %416 = vector.extract_strided_slice %415 {offsets = [0, 0], sizes = [32, 32], strides = [1, 1]} : vector<32x128xf32> to vector<32x32xf32>
    %417 = vector.extract_strided_slice %415 {offsets = [0, 64], sizes = [32, 32], strides = [1, 1]} : vector<32x128xf32> to vector<32x32xf32>
    %418 = vector.extract_strided_slice %415 {offsets = [0, 96], sizes = [32, 32], strides = [1, 1]} : vector<32x128xf32> to vector<32x32xf32>
    %419 = vector.extract_strided_slice %410 {offsets = [0, 32], sizes = [32, 32], strides = [1, 1]} : vector<32x128xf32> to vector<32x32xf32>
    %420 = math.tanh %419 : vector<32x32xf32>
    %421 = arith.mulf %417, %389 : vector<32x32xf32>
    %422 = arith.mulf %416, %420 : vector<32x32xf32>
    %423 = arith.addf %421, %422 : vector<32x32xf32>
    %424 = math.tanh %389 : vector<32x32xf32>
    %425 = arith.mulf %424, %418 : vector<32x32xf32>
    %c1_i32_96 = arith.constant 1 : i32
    %426 = tpu.dynamic_rotate %425 by %c1_i32_96 dim 0 : vector<32x32xf32>, i32 -> vector<32x32xf32>
    %cst_97 = arith.constant 0.000000e+00 : f32
    %427 = vector.shape_cast %18 : vector<32x1xi1> to vector<32x1xi1>
    %428 = vector.broadcast %427 : vector<32x1xi1> to vector<32x32xi1>
    %429 = vector.broadcast %cst_97 : f32 to vector<32x32xf32>
    %430 = arith.select %428, %426, %429 : vector<32x32xi1>, vector<32x32xf32>
    %431 = tpu.concatenate %430, %425 in 1 : vector<32x32xf32>, vector<32x32xf32> -> vector<32x64xf32>
    %cst_98 = arith.constant dense<0.000000e+00> : vector<32x256xf32>
    %432 = tpu.matmul %431, %21, %cst_98 {dimension_numbers = #tpu.dot_dimension_numbers<[1], [0], [0], [1], [0, 0, 1, 1], [], []>} : vector<32x64xf32>, vector<64x256xf32>, vector<32x256xf32> -> vector<32x256xf32>
    %433 = vector.extract_strided_slice %432 {offsets = [0, 0], sizes = [32, 128], strides = [1, 1]} : vector<32x256xf32> to vector<32x128xf32>
    %434 = vector.extract_strided_slice %432 {offsets = [0, 128], sizes = [32, 128], strides = [1, 1]} : vector<32x256xf32> to vector<32x128xf32>
    %435 = vector.shape_cast %20 : vector<32x1xi1> to vector<32x1xi1>
    %436 = vector.broadcast %435 : vector<32x1xi1> to vector<32x128xi1>
    %437 = arith.select %436, %433, %434 : vector<32x128xi1>, vector<32x128xf32>
    %c13 = arith.constant 13 : index
    %c0_99 = arith.constant 0 : index
    %c0_100 = arith.constant 0 : index
    %438 = vector.load %arg1[%c13, %c0_99, %c0_100] : memref<15x32x128xf32, #tpu.memory_space<vmem>>, vector<1x32x128xf32>
    %439 = vector.shape_cast %438 : vector<1x32x128xf32> to vector<32x128xf32>
    %440 = arith.addf %439, %437 : vector<32x128xf32>
    %441 = arith.negf %440 : vector<32x128xf32>
    %442 = math.exp %441 : vector<32x128xf32>
    %cst_101 = arith.constant 1.000000e+00 : f32
    %443 = vector.broadcast %cst_101 : f32 to vector<32x128xf32>
    %444 = arith.addf %443, %442 : vector<32x128xf32>
    %445 = arith.divf %443, %444 : vector<32x128xf32>
    %446 = vector.extract_strided_slice %445 {offsets = [0, 0], sizes = [32, 32], strides = [1, 1]} : vector<32x128xf32> to vector<32x32xf32>
    %447 = vector.extract_strided_slice %445 {offsets = [0, 64], sizes = [32, 32], strides = [1, 1]} : vector<32x128xf32> to vector<32x32xf32>
    %448 = vector.extract_strided_slice %445 {offsets = [0, 96], sizes = [32, 32], strides = [1, 1]} : vector<32x128xf32> to vector<32x32xf32>
    %449 = vector.extract_strided_slice %440 {offsets = [0, 32], sizes = [32, 32], strides = [1, 1]} : vector<32x128xf32> to vector<32x32xf32>
    %450 = math.tanh %449 : vector<32x32xf32>
    %451 = arith.mulf %447, %423 : vector<32x32xf32>
    %452 = arith.mulf %446, %450 : vector<32x32xf32>
    %453 = arith.addf %451, %452 : vector<32x32xf32>
    %454 = math.tanh %423 : vector<32x32xf32>
    %455 = arith.mulf %454, %448 : vector<32x32xf32>
    %c1_i32_102 = arith.constant 1 : i32
    %456 = tpu.dynamic_rotate %455 by %c1_i32_102 dim 0 : vector<32x32xf32>, i32 -> vector<32x32xf32>
    %cst_103 = arith.constant 0.000000e+00 : f32
    %457 = vector.shape_cast %18 : vector<32x1xi1> to vector<32x1xi1>
    %458 = vector.broadcast %457 : vector<32x1xi1> to vector<32x32xi1>
    %459 = vector.broadcast %cst_103 : f32 to vector<32x32xf32>
    %460 = arith.select %458, %456, %459 : vector<32x32xi1>, vector<32x32xf32>
    %461 = tpu.concatenate %460, %455 in 1 : vector<32x32xf32>, vector<32x32xf32> -> vector<32x64xf32>
    %cst_104 = arith.constant dense<0.000000e+00> : vector<32x256xf32>
    %462 = tpu.matmul %461, %21, %cst_104 {dimension_numbers = #tpu.dot_dimension_numbers<[1], [0], [0], [1], [0, 0, 1, 1], [], []>} : vector<32x64xf32>, vector<64x256xf32>, vector<32x256xf32> -> vector<32x256xf32>
    %463 = vector.extract_strided_slice %462 {offsets = [0, 0], sizes = [32, 128], strides = [1, 1]} : vector<32x256xf32> to vector<32x128xf32>
    %464 = vector.extract_strided_slice %462 {offsets = [0, 128], sizes = [32, 128], strides = [1, 1]} : vector<32x256xf32> to vector<32x128xf32>
    %465 = vector.shape_cast %20 : vector<32x1xi1> to vector<32x1xi1>
    %466 = vector.broadcast %465 : vector<32x1xi1> to vector<32x128xi1>
    %467 = arith.select %466, %463, %464 : vector<32x128xi1>, vector<32x128xf32>
    %c14 = arith.constant 14 : index
    %c0_105 = arith.constant 0 : index
    %c0_106 = arith.constant 0 : index
    %468 = vector.load %arg1[%c14, %c0_105, %c0_106] : memref<15x32x128xf32, #tpu.memory_space<vmem>>, vector<1x32x128xf32>
    %469 = vector.shape_cast %468 : vector<1x32x128xf32> to vector<32x128xf32>
    %470 = arith.addf %469, %467 : vector<32x128xf32>
    %471 = arith.negf %470 : vector<32x128xf32>
    %472 = math.exp %471 : vector<32x128xf32>
    %cst_107 = arith.constant 1.000000e+00 : f32
    %473 = vector.broadcast %cst_107 : f32 to vector<32x128xf32>
    %474 = arith.addf %473, %472 : vector<32x128xf32>
    %475 = arith.divf %473, %474 : vector<32x128xf32>
    %476 = vector.extract_strided_slice %475 {offsets = [0, 96], sizes = [32, 32], strides = [1, 1]} : vector<32x128xf32> to vector<32x32xf32>
    %477 = math.tanh %453 : vector<32x32xf32>
    %478 = arith.mulf %477, %476 : vector<32x32xf32>
    %cst_108 = arith.constant 0.000000e+00 : f32
    %479 = vector.broadcast %cst_108 : f32 to vector<32x32xf32>
    %480 = tpu.concatenate %425, %455, %478, %479 in 1 : vector<32x32xf32>, vector<32x32xf32>, vector<32x32xf32>, vector<32x32xf32> -> vector<32x128xf32>
    %c3_109 = arith.constant 3 : index
    %c0_110 = arith.constant 0 : index
    %c0_111 = arith.constant 0 : index
    %481 = vector.load %arg5[%c3_109, %c0_110, %c0_111] : memref<4x32x128xf32, #tpu.memory_space<vmem>>, vector<1x32x128xf32>
    %482 = vector.shape_cast %481 : vector<1x32x128xf32> to vector<32x128xf32>
    %483 = vector.shape_cast %480 : vector<32x128xf32> to vector<1x32x128xf32>
    tpu.vector_store %arg5[%c3_109, %c0_110, %c0_111], %483 {strides = array<i32>} : memref<4x32x128xf32, #tpu.memory_space<vmem>>, vector<1x32x128xf32>,
    return
  }
  func.func @transform_0(%arg0: i32) -> (i32, i32, i32) {
    %c0_i32 = arith.constant 0 : i32
    %c0_i32_0 = arith.constant 0 : i32
    %c0_i32_1 = arith.constant 0 : i32
    %c0_i32_2 = arith.constant 0 : i32
    return %c0_i32, %c0_i32_0, %c0_i32_1 : i32, i32, i32
  }
  func.func @transform_1(%arg0: i32) -> (i32, i32) {
    %c0_i32 = arith.constant 0 : i32
    %c0_i32_0 = arith.constant 0 : i32
    %c0_i32_1 = arith.constant 0 : i32
    return %c0_i32, %c0_i32_0 : i32, i32
  }
  func.func @transform_2(%arg0: i32) -> (i32, i32) {
    %c0_i32 = arith.constant 0 : i32
    %c0_i32_0 = arith.constant 0 : i32
    %c0_i32_1 = arith.constant 0 : i32
    return %c0_i32, %c0_i32_0 : i32, i32
  }
  func.func @transform_3(%arg0: i32) -> (i32, i32) {
    %c0_i32 = arith.constant 0 : i32
    %c0_i32_0 = arith.constant 0 : i32
    %c0_i32_1 = arith.constant 0 : i32
    return %c0_i32, %c0_i32_0 : i32, i32
  }
  func.func @transform_4(%arg0: i32) -> (i32, i32, i32) {
    %c0_i32 = arith.constant 0 : i32
    %c0_i32_0 = arith.constant 0 : i32
    %c0_i32_1 = arith.constant 0 : i32
    %c0_i32_2 = arith.constant 0 : i32
    return %c0_i32, %c0_i32_0, %c0_i32_1 : i32, i32, i32
  }
}

</mosaic_0001>

<llo_original>
// kernel: reverse
$region0: #{reverse}
  %s0 = inlined_call_operand.vmem [shape: f32[2,32,7,8], index: 0, kind: input, shape index: {}]
  %s1 = inlined_call_operand.vmem [shape: f32[2,32,7,8], index: 1, kind: output, shape index: {}]
  $region1: #{reverse} parent=0
    #allocation0 [shape = 'u8[57344]{0}', space=vmem, size = 0xe000, scoped, tag = 'operand span for operand 0']
    #allocation1 [shape = 'u8[57344]{0}', space=vmem, size = 0xe000, scoped, tag = 'operand span for operand 1']
    // Predicated region
    $region2: #{reverse} parent=1 // pred_check
      _
    $region3: #{reverse} parent=1 // pred_check_branch
      %3 = sbr.rel (0) target = $region5
    $region4: #{reverse} parent=1 // pred_region
      // Predicated region
      $region6: #{reverse} parent=4 // pred_check
        _
      $region7: #{reverse} parent=4 // pred_check_branch
        %5 = sbr.rel (0) target = $region9
      $region8: #{reverse} parent=4 // pred_region
        // Predicated region
        $region21: #{reverse} parent=8 // pred_check
          _
        $region22: #{reverse} parent=8 // pred_check_branch
          %47 = sbr.rel (0) target = $region24
        $region23: #{reverse} parent=8 // pred_region
          loop: start=0, step=1, limit=1
          $region25: #{reverse} parent=23 // loop_pre_header
            _
          $region26: #{reverse} parent=23 // loop_header
            %s49 = sphi 0, %s53
            %p50 = scmp.ge.s32.totalorder %s49, 1
            %s54 = sphi %s0, %s0
            %s55 = sphi [#allocation0], [#allocation0]
          $region27: #{reverse} parent=23 // loop_header_branch
            %52 = sbr.rel (%p50) target = $region31
          $region28: #{reverse} parent=23 // loop_body
            %v56 = vld [vmem:[%s54] sm:$0xff]
            %57 = vst [vmem:[%s55] sm:$0xff] %v56
            %v58 = vld [vmem:[%s54 + $0x8] sm:$0xff]
            %59 = vst [vmem:[%s55 + $0x8] sm:$0xff] %v58
            %v60 = vld [vmem:[%s54 + $0x10] sm:$0xff]
            %61 = vst [vmem:[%s55 + $0x10] sm:$0xff] %v60
            %v62 = vld [vmem:[%s54 + $0x18] sm:$0xff]
            %63 = vst [vmem:[%s55 + $0x18] sm:$0xff] %v62
            %v64 = vld [vmem:[%s54 + $0x20] sm:$0xff]
            %65 = vst [vmem:[%s55 + $0x20] sm:$0xff] %v64
            %v66 = vld [vmem:[%s54 + $0x28] sm:$0xff]
            %67 = vst [vmem:[%s55 + $0x28] sm:$0xff] %v66
            %v68 = vld [vmem:[%s54 + $0x30] sm:$0xff]
            %69 = vst [vmem:[%s55 + $0x30] sm:$0xff] %v68
            %v70 = vld [vmem:[%s54 + $0x38] sm:$0xff]
            %71 = vst [vmem:[%s55 + $0x38] sm:$0xff] %v70
            %v72 = vld [vmem:[%s54 + $0x40] sm:$0xff]
            %73 = vst [vmem:[%s55 + $0x40] sm:$0xff] %v72
            %v74 = vld [vmem:[%s54 + $0x48] sm:$0xff]
            %75 = vst [vmem:[%s55 + $0x48] sm:$0xff] %v74
            %v76 = vld [vmem:[%s54 + $0x50] sm:$0xff]
            %77 = vst [vmem:[%s55 + $0x50] sm:$0xff] %v76
            %v78 = vld [vmem:[%s54 + $0x58] sm:$0xff]
            %79 = vst [vmem:[%s55 + $0x58] sm:$0xff] %v78
            %v80 = vld [vmem:[%s54 + $0x60] sm:$0xff]
            %81 = vst [vmem:[%s55 + $0x60] sm:$0xff] %v80
            %v82 = vld [vmem:[%s54 + $0x68] sm:$0xff]
            %83 = vst [vmem:[%s55 + $0x68] sm:$0xff] %v82
          $region29: #{reverse} parent=23 // loop_footer
            %s53 = sadd.s32 1, %s49
          $region30: #{reverse} parent=23 // loop_footer_branch
            %48 = sbr.rel target = $region26
          $region31: #{reverse} parent=23 // loop_exit
            _
        $region24: #{reverse} parent=8 // pred_fallthru
          _
        // Predicated region
        $region32: #{reverse} parent=8 // pred_check
          _
        $region33: #{reverse} parent=8 // pred_check_branch
          %85 = sbr.rel target = $region35
        $region34: #{reverse} parent=8 // pred_region
          _
        $region35: #{reverse} parent=8 // pred_fallthru
          _
      $region9: #{reverse} parent=4 // pred_fallthru
        _
      // Predicated region
      $region10: #{reverse} parent=4 // pred_check
        _
      $region11: #{reverse} parent=4 // pred_check_branch
        %7 = sbr.rel target = $region13
      $region12: #{reverse} parent=4 // pred_region
        %s9 = ssub.s32 256, 1
        loop: start=0, step=1, limit=1
        $region14: #{reverse} parent=12 // loop_pre_header
          _
        $region15: #{reverse} parent=12 // loop_header
          %s11 = sphi 0, %s15
          %p12 = scmp.ge.s32.totalorder %s11, 1
          %s16 = sphi %s0, %s0
          %s17 = sphi [#allocation0], [#allocation0]
        $region16: #{reverse} parent=12 // loop_header_branch
          %14 = sbr.rel (%p12) target = $region20
        $region17: #{reverse} parent=12 // loop_body
          %v18 = vld [vmem:[%s16] sm:%s9]
          %19 = vst [vmem:[%s17] sm:%s9] %v18
          %v20 = vld [vmem:[%s16 + $0x8] sm:%s9]
          %21 = vst [vmem:[%s17 + $0x8] sm:%s9] %v20
          %v22 = vld [vmem:[%s16 + $0x10] sm:%s9]
          %23 = vst [vmem:[%s17 + $0x10] sm:%s9] %v22
          %v24 = vld [vmem:[%s16 + $0x18] sm:%s9]
          %25 = vst [vmem:[%s17 + $0x18] sm:%s9] %v24
          %v26 = vld [vmem:[%s16 + $0x20] sm:%s9]
          %27 = vst [vmem:[%s17 + $0x20] sm:%s9] %v26
          %v28 = vld [vmem:[%s16 + $0x28] sm:%s9]
          %29 = vst [vmem:[%s17 + $0x28] sm:%s9] %v28
          %v30 = vld [vmem:[%s16 + $0x30] sm:%s9]
          %31 = vst [vmem:[%s17 + $0x30] sm:%s9] %v30
          %v32 = vld [vmem:[%s16 + $0x38] sm:%s9]
          %33 = vst [vmem:[%s17 + $0x38] sm:%s9] %v32
          %v34 = vld [vmem:[%s16 + $0x40] sm:%s9]
          %35 = vst [vmem:[%s17 + $0x40] sm:%s9] %v34
          %v36 = vld [vmem:[%s16 + $0x48] sm:%s9]
          %37 = vst [vmem:[%s17 + $0x48] sm:%s9] %v36
          %v38 = vld [vmem:[%s16 + $0x50] sm:%s9]
          %39 = vst [vmem:[%s17 + $0x50] sm:%s9] %v38
          %v40 = vld [vmem:[%s16 + $0x58] sm:%s9]
          %41 = vst [vmem:[%s17 + $0x58] sm:%s9] %v40
          %v42 = vld [vmem:[%s16 + $0x60] sm:%s9]
          %43 = vst [vmem:[%s17 + $0x60] sm:%s9] %v42
          %v44 = vld [vmem:[%s16 + $0x68] sm:%s9]
          %45 = vst [vmem:[%s17 + $0x68] sm:%s9] %v44
        $region18: #{reverse} parent=12 // loop_footer
          %s15 = sadd.s32 1, %s11
        $region19: #{reverse} parent=12 // loop_footer_branch
          %10 = sbr.rel target = $region15
        $region20: #{reverse} parent=12 // loop_exit
          _
      $region13: #{reverse} parent=4 // pred_fallthru
        _
    $region5: #{reverse} parent=1 // pred_fallthru
      _
    %86 = vnop
    %s87 = scalar_lea.vmem [#allocation0], 7
    %v88 = vld [vmem:[%s87] ss:$-1 sm:$0xff]
    %89 = vst [vmem:[#allocation1] sm:$0xff] %v88
    %s90 = scalar_lea.vmem [#allocation1], 8
    %s91 = scalar_lea.vmem [#allocation0], 8
    %s92 = scalar_lea.vmem %s91, 7 [#allocation0]
    %v93 = vld [vmem:[%s92] ss:$-1 sm:$0xff]
    %94 = vst [vmem:[%s90] sm:$0xff] %v93
    %s95 = scalar_lea.vmem [#allocation1], 16
    %s96 = scalar_lea.vmem [#allocation0], 16
    %s97 = scalar_lea.vmem %s96, 7 [#allocation0]
    %v98 = vld [vmem:[%s97] ss:$-1 sm:$0xff]
    %99 = vst [vmem:[%s95] sm:$0xff] %v98
    %s100 = scalar_lea.vmem [#allocation1], 24
    %s101 = scalar_lea.vmem [#allocation0], 24
    %s102 = scalar_lea.vmem %s101, 7 [#allocation0]
    %v103 = vld [vmem:[%s102] ss:$-1 sm:$0xff]
    %104 = vst [vmem:[%s100] sm:$0xff] %v103
    %s105 = scalar_lea.vmem [#allocation1], 32
    %s106 = scalar_lea.vmem [#allocation0], 32
    %s107 = scalar_lea.vmem %s106, 7 [#allocation0]
    %v108 = vld [vmem:[%s107] ss:$-1 sm:$0xff]
    %109 = vst [vmem:[%s105] sm:$0xff] %v108
    %s110 = scalar_lea.vmem [#allocation1], 40
    %s111 = scalar_lea.vmem [#allocation0], 40
    %s112 = scalar_lea.vmem %s111, 7 [#allocation0]
    %v113 = vld [vmem:[%s112] ss:$-1 sm:$0xff]
    %114 = vst [vmem:[%s110] sm:$0xff] %v113
    %s115 = scalar_lea.vmem [#allocation1], 48
    %s116 = scalar_lea.vmem [#allocation0], 48
    %s117 = scalar_lea.vmem %s116, 7 [#allocation0]
    %v118 = vld [vmem:[%s117] ss:$-1 sm:$0xff]
    %119 = vst [vmem:[%s115] sm:$0xff] %v118
    %s120 = scalar_lea.vmem [#allocation1], 56
    %s121 = scalar_lea.vmem [#allocation0], 56
    %s122 = scalar_lea.vmem %s121, 7 [#allocation0]
    %v123 = vld [vmem:[%s122] ss:$-1 sm:$0xff]
    %124 = vst [vmem:[%s120] sm:$0xff] %v123
    %s125 = scalar_lea.vmem [#allocation1], 64
    %s126 = scalar_lea.vmem [#allocation0], 64
    %s127 = scalar_lea.vmem %s126, 7 [#allocation0]
    %v128 = vld [vmem:[%s127] ss:$-1 sm:$0xff]
    %129 = vst [vmem:[%s125] sm:$0xff] %v128
    %s130 = scalar_lea.vmem [#allocation1], 72
    %s131 = scalar_lea.vmem [#allocation0], 72
    %s132 = scalar_lea.vmem %s131, 7 [#allocation0]
    %v133 = vld [vmem:[%s132] ss:$-1 sm:$0xff]
    %134 = vst [vmem:[%s130] sm:$0xff] %v133
    %s135 = scalar_lea.vmem [#allocation1], 80
    %s136 = scalar_lea.vmem [#allocation0], 80
    %s137 = scalar_lea.vmem %s136, 7 [#allocation0]
    %v138 = vld [vmem:[%s137] ss:$-1 sm:$0xff]
    %139 = vst [vmem:[%s135] sm:$0xff] %v138
    %s140 = scalar_lea.vmem [#allocation1], 88
    %s141 = scalar_lea.vmem [#allocation0], 88
    %s142 = scalar_lea.vmem %s141, 7 [#allocation0]
    %v143 = vld [vmem:[%s142] ss:$-1 sm:$0xff]
    %144 = vst [vmem:[%s140] sm:$0xff] %v143
    %s145 = scalar_lea.vmem [#allocation1], 96
    %s146 = scalar_lea.vmem [#allocation0], 96
    %s147 = scalar_lea.vmem %s146, 7 [#allocation0]
    %v148 = vld [vmem:[%s147] ss:$-1 sm:$0xff]
    %149 = vst [vmem:[%s145] sm:$0xff] %v148
    %s150 = scalar_lea.vmem [#allocation1], 104
    %s151 = scalar_lea.vmem [#allocation0], 104
    %s152 = scalar_lea.vmem %s151, 7 [#allocation0]
    %v153 = vld [vmem:[%s152] ss:$-1 sm:$0xff]
    %154 = vst [vmem:[%s150] sm:$0xff] %v153
    // Predicated region
    $region36: #{reverse} parent=1 // pred_check
      _
    $region37: #{reverse} parent=1 // pred_check_branch
      %156 = sbr.rel (0) target = $region39
    $region38: #{reverse} parent=1 // pred_region
      // Predicated region
      $region40: #{reverse} parent=38 // pred_check
        _
      $region41: #{reverse} parent=38 // pred_check_branch
        %158 = sbr.rel (0) target = $region43
      $region42: #{reverse} parent=38 // pred_region
        // Predicated region
        $region55: #{reverse} parent=42 // pred_check
          _
        $region56: #{reverse} parent=42 // pred_check_branch
          %200 = sbr.rel (0) target = $region58
        $region57: #{reverse} parent=42 // pred_region
          loop: start=0, step=1, limit=1
          $region59: #{reverse} parent=57 // loop_pre_header
            _
          $region60: #{reverse} parent=57 // loop_header
            %s202 = sphi 0, %s206
            %p203 = scmp.ge.s32.totalorder %s202, 1
            %s207 = sphi [#allocation1], [#allocation1]
            %s208 = sphi %s1, %s1
          $region61: #{reverse} parent=57 // loop_header_branch
            %205 = sbr.rel (%p203) target = $region65
          $region62: #{reverse} parent=57 // loop_body
            %v209 = vld [vmem:[%s207] sm:$0xff]
            %210 = vst [vmem:[%s208] sm:$0xff] %v209
            %v211 = vld [vmem:[%s207 + $0x8] sm:$0xff]
            %212 = vst [vmem:[%s208 + $0x8] sm:$0xff] %v211
            %v213 = vld [vmem:[%s207 + $0x10] sm:$0xff]
            %214 = vst [vmem:[%s208 + $0x10] sm:$0xff] %v213
            %v215 = vld [vmem:[%s207 + $0x18] sm:$0xff]
            %216 = vst [vmem:[%s208 + $0x18] sm:$0xff] %v215
            %v217 = vld [vmem:[%s207 + $0x20] sm:$0xff]
            %218 = vst [vmem:[%s208 + $0x20] sm:$0xff] %v217
            %v219 = vld [vmem:[%s207 + $0x28] sm:$0xff]
            %220 = vst [vmem:[%s208 + $0x28] sm:$0xff] %v219
            %v221 = vld [vmem:[%s207 + $0x30] sm:$0xff]
            %222 = vst [vmem:[%s208 + $0x30] sm:$0xff] %v221
            %v223 = vld [vmem:[%s207 + $0x38] sm:$0xff]
            %224 = vst [vmem:[%s208 + $0x38] sm:$0xff] %v223
            %v225 = vld [vmem:[%s207 + $0x40] sm:$0xff]
            %226 = vst [vmem:[%s208 + $0x40] sm:$0xff] %v225
            %v227 = vld [vmem:[%s207 + $0x48] sm:$0xff]
            %228 = vst [vmem:[%s208 + $0x48] sm:$0xff] %v227
            %v229 = vld [vmem:[%s207 + $0x50] sm:$0xff]
            %230 = vst [vmem:[%s208 + $0x50] sm:$0xff] %v229
            %v231 = vld [vmem:[%s207 + $0x58] sm:$0xff]
            %232 = vst [vmem:[%s208 + $0x58] sm:$0xff] %v231
            %v233 = vld [vmem:[%s207 + $0x60] sm:$0xff]
            %234 = vst [vmem:[%s208 + $0x60] sm:$0xff] %v233
            %v235 = vld [vmem:[%s207 + $0x68] sm:$0xff]
            %236 = vst [vmem:[%s208 + $0x68] sm:$0xff] %v235
          $region63: #{reverse} parent=57 // loop_footer
            %s206 = sadd.s32 1, %s202
          $region64: #{reverse} parent=57 // loop_footer_branch
            %201 = sbr.rel target = $region60
          $region65: #{reverse} parent=57 // loop_exit
            _
        $region58: #{reverse} parent=42 // pred_fallthru
          _
        // Predicated region
        $region66: #{reverse} parent=42 // pred_check
          _
        $region67: #{reverse} parent=42 // pred_check_branch
          %238 = sbr.rel target = $region69
        $region68: #{reverse} parent=42 // pred_region
          _
        $region69: #{reverse} parent=42 // pred_fallthru
          _
      $region43: #{reverse} parent=38 // pred_fallthru
        _
      // Predicated region
      $region44: #{reverse} parent=38 // pred_check
        _
      $region45: #{reverse} parent=38 // pred_check_branch
        %160 = sbr.rel target = $region47
      $region46: #{reverse} parent=38 // pred_region
        %s162 = ssub.s32 256, 1
        loop: start=0, step=1, limit=1
        $region48: #{reverse} parent=46 // loop_pre_header
          _
        $region49: #{reverse} parent=46 // loop_header
          %s164 = sphi 0, %s168
          %p165 = scmp.ge.s32.totalorder %s164, 1
          %s169 = sphi [#allocation1], [#allocation1]
          %s170 = sphi %s1, %s1
        $region50: #{reverse} parent=46 // loop_header_branch
          %167 = sbr.rel (%p165) target = $region54
        $region51: #{reverse} parent=46 // loop_body
          %v171 = vld [vmem:[%s169] sm:%s162]
          %172 = vst [vmem:[%s170] sm:%s162] %v171
          %v173 = vld [vmem:[%s169 + $0x8] sm:%s162]
          %174 = vst [vmem:[%s170 + $0x8] sm:%s162] %v173
          %v175 = vld [vmem:[%s169 + $0x10] sm:%s162]
          %176 = vst [vmem:[%s170 + $0x10] sm:%s162] %v175
          %v177 = vld [vmem:[%s169 + $0x18] sm:%s162]
          %178 = vst [vmem:[%s170 + $0x18] sm:%s162] %v177
          %v179 = vld [vmem:[%s169 + $0x20] sm:%s162]
          %180 = vst [vmem:[%s170 + $0x20] sm:%s162] %v179
          %v181 = vld [vmem:[%s169 + $0x28] sm:%s162]
          %182 = vst [vmem:[%s170 + $0x28] sm:%s162] %v181
          %v183 = vld [vmem:[%s169 + $0x30] sm:%s162]
          %184 = vst [vmem:[%s170 + $0x30] sm:%s162] %v183
          %v185 = vld [vmem:[%s169 + $0x38] sm:%s162]
          %186 = vst [vmem:[%s170 + $0x38] sm:%s162] %v185
          %v187 = vld [vmem:[%s169 + $0x40] sm:%s162]
          %188 = vst [vmem:[%s170 + $0x40] sm:%s162] %v187
          %v189 = vld [vmem:[%s169 + $0x48] sm:%s162]
          %190 = vst [vmem:[%s170 + $0x48] sm:%s162] %v189
          %v191 = vld [vmem:[%s169 + $0x50] sm:%s162]
          %192 = vst [vmem:[%s170 + $0x50] sm:%s162] %v191
          %v193 = vld [vmem:[%s169 + $0x58] sm:%s162]
          %194 = vst [vmem:[%s170 + $0x58] sm:%s162] %v193
          %v195 = vld [vmem:[%s169 + $0x60] sm:%s162]
          %196 = vst [vmem:[%s170 + $0x60] sm:%s162] %v195
          %v197 = vld [vmem:[%s169 + $0x68] sm:%s162]
          %198 = vst [vmem:[%s170 + $0x68] sm:%s162] %v197
        $region52: #{reverse} parent=46 // loop_footer
          %s168 = sadd.s32 1, %s164
        $region53: #{reverse} parent=46 // loop_footer_branch
          %163 = sbr.rel target = $region49
        $region54: #{reverse} parent=46 // loop_exit
          _
      $region47: #{reverse} parent=38 // pred_fallthru
        _
    $region39: #{reverse} parent=1 // pred_fallthru
      _
    %239 = vnop

// kernel: diag_bilstm_pallas.1
$region0: #{diag_bilstm_pallas.1}
  #allocation0 [shape = 'u32[]', space=smem, size = 0x4, offset = 0x4, fixed_abs, tag = 'smem constant byte address 0x4 - core index']
  #allocation1 [shape = 'u32[144,128]{1,0:T(1,128)}', space=vmem, size = 0x12000, scoped, tag = 'internal scratch']
  %s0 = inlined_call_operand.vmem [shape: f32[15,32,128], index: 0, kind: input, shape index: {}]
  %s1 = inlined_call_operand.vmem [shape: f32[64,256], index: 1, kind: input, shape index: {}]
  %s2 = inlined_call_operand.vmem [shape: f32[32,32], index: 2, kind: input, shape index: {}]
  %s3 = inlined_call_operand.vmem [shape: f32[32,32], index: 3, kind: input, shape index: {}]
  %s4 = inlined_call_operand.vmem [shape: f32[4,32,128], index: 4, kind: output, shape index: {}]
  %s5 = sld [smem:[#allocation0]]
  $region26: #{diag_bilstm_pallas.1} parent=0
    _
  %s7 = ssub.s32 1, %s5
  %s8 = scalar_select 0, %s7, %s5
  // Predicated region
  $region2: #{diag_bilstm_pallas.1} parent=0 // pred_check
    _
  $region3: #{diag_bilstm_pallas.1} parent=0 // pred_check_branch
    %10 = sbr.rel (0) target = $region5
  $region4: #{diag_bilstm_pallas.1} parent=0 // pred_region
    _
  $region5: #{diag_bilstm_pallas.1} parent=0 // pred_fallthru
    _
  // Predicated region
  $region6: #{diag_bilstm_pallas.1} parent=0 // pred_check
    _
  $region7: #{diag_bilstm_pallas.1} parent=0 // pred_check_branch
    %12 = sbr.rel (0) target = $region9
  $region8: #{diag_bilstm_pallas.1} parent=0 // pred_region
    _
  $region9: #{diag_bilstm_pallas.1} parent=0 // pred_fallthru
    _
  // Predicated region
  $region10: #{diag_bilstm_pallas.1} parent=0 // pred_check
    _
  $region11: #{diag_bilstm_pallas.1} parent=0 // pred_check_branch
    %14 = sbr.rel (0) target = $region13
  $region12: #{diag_bilstm_pallas.1} parent=0 // pred_region
    _
  $region13: #{diag_bilstm_pallas.1} parent=0 // pred_fallthru
    _
  // Predicated region
  $region14: #{diag_bilstm_pallas.1} parent=0 // pred_check
    _
  $region15: #{diag_bilstm_pallas.1} parent=0 // pred_check_branch
    %16 = sbr.rel (0) target = $region17
  $region16: #{diag_bilstm_pallas.1} parent=0 // pred_region
    _
  $region17: #{diag_bilstm_pallas.1} parent=0 // pred_fallthru
    _
  %v17 = vlaneseq
  %v18 = vshrl.u32 %v17, 7
  %v19 = vadd.s32 %v18, 8
  %v20 = vadd.s32 %v18, 16
  %v21 = vadd.s32 %v18, 24
  %vm22 = vcmp.lt.s32.totalorder %v18, 0
  %v23 = vsub.s32 0, %v18
  %v24 = vsel %vm22, %v23, %v18
  %v25 = vshrl.u32 %v24, 3
  %v26 = vand.u32 %v24, 7
  %v27 = vsub.s32 0, %v26
  %v28 = vsel %vm22, %v27, %v26
  %vm29 = vcmp.lt.s32.totalorder %v19, 0
  %v30 = vsub.s32 0, %v19
  %v31 = vsel %vm29, %v30, %v19
  %v32 = vshrl.u32 %v31, 3
  %v33 = vand.u32 %v31, 7
  %v34 = vsub.s32 0, %v33
  %v35 = vsel %vm29, %v34, %v33
  %vm36 = vcmp.lt.s32.totalorder %v20, 0
  %v37 = vsub.s32 0, %v20
  %v38 = vsel %vm36, %v37, %v20
  %v39 = vshrl.u32 %v38, 3
  %v40 = vand.u32 %v38, 7
  %v41 = vsub.s32 0, %v40
  %v42 = vsel %vm36, %v41, %v40
  %vm43 = vcmp.lt.s32.totalorder %v21, 0
  %v44 = vsub.s32 0, %v21
  %v45 = vsel %vm43, %v44, %v21
  %v46 = vshrl.u32 %v45, 3
  %v47 = vand.u32 %v45, 7
  %v48 = vsub.s32 0, %v47
  %v49 = vsel %vm43, %v48, %v47
  %vm50 = vcmp.ne.s32.totalorder %v28, 0
  %vm51 = vcmp.ne.s32.totalorder %v35, 0
  %vm52 = vcmp.ne.s32.totalorder %v42, 0
  %vm53 = vcmp.ne.s32.totalorder %v49, 0
  %vm54 = vcmp.lt.s32.totalorder %v28, 0
  %vm55 = vcmp.lt.s32.totalorder %v35, 0
  %vm56 = vcmp.lt.s32.totalorder %v42, 0
  %vm57 = vcmp.lt.s32.totalorder %v49, 0
  %vm58 = vmand %vm54, %vm50
  %vm59 = vmand %vm55, %vm51
  %vm60 = vmand %vm56, %vm52
  %vm61 = vmand %vm57, %vm53
  %v62 = vadd.s32 %v28, 8
  %v63 = vadd.s32 %v35, 8
  %v64 = vadd.s32 %v42, 8
  %v65 = vadd.s32 %v49, 8
  %v66 = vsel %vm58, %v62, %v28
  %v67 = vsel %vm59, %v63, %v35
  %v68 = vsel %vm60, %v64, %v42
  %v69 = vsel %vm61, %v65, %v49
  %vm70 = vcmp.ne.s32.totalorder %v66, 0
  %vm71 = vcmp.ne.s32.totalorder %v67, 0
  %vm72 = vcmp.ne.s32.totalorder %v68, 0
  %vm73 = vcmp.ne.s32.totalorder %v69, 0
  %vm74 = vcmp.lt.s32.totalorder %v18, 16
  %vm75 = vcmp.lt.s32.totalorder %v19, 16
  %vm76 = vcmp.lt.s32.totalorder %v20, 16
  %vm77 = vcmp.lt.s32.totalorder %v21, 16
  %v78 = vld [vmem:[%s1] sm:$0xff]
  %v79 = vld [vmem:[%s1 + $0x8] sm:$0xff]
  %v80 = vld [vmem:[%s1 + $0x10] sm:$0xff]
  %v81 = vld [vmem:[%s1 + $0x18] sm:$0xff]
  %v82 = vld [vmem:[%s1 + $0x20] sm:$0xff]
  %v83 = vld [vmem:[%s1 + $0x28] sm:$0xff]
  %v84 = vld [vmem:[%s1 + $0x30] sm:$0xff]
  %v85 = vld [vmem:[%s1 + $0x38] sm:$0xff]
  %v86 = vld [vmem:[%s1 + $0x40] sm:$0xff]
  %v87 = vld [vmem:[%s1 + $0x48] sm:$0xff]
  %v88 = vld [vmem:[%s1 + $0x50] sm:$0xff]
  %v89 = vld [vmem:[%s1 + $0x58] sm:$0xff]
  %v90 = vld [vmem:[%s1 + $0x60] sm:$0xff]
  %v91 = vld [vmem:[%s1 + $0x68] sm:$0xff]
  %v92 = vld [vmem:[%s1 + $0x70] sm:$0xff]
  %v93 = vld [vmem:[%s1 + $0x78] sm:$0xff]
  %v94 = vld [vmem:[%s2] sm:$0xff]
  %v95 = vld [vmem:[%s2 + $0x8] sm:$0xff]
  %v96 = vld [vmem:[%s2 + $0x10] sm:$0xff]
  %v97 = vld [vmem:[%s2 + $0x18] sm:$0xff]
  %v98 = vld [vmem:[%s3] sm:$0xff]
  %v99 = vld [vmem:[%s3 + $0x8] sm:$0xff]
  %v100 = vld [vmem:[%s3 + $0x10] sm:$0xff]
  %v101 = vld [vmem:[%s3 + $0x18] sm:$0xff]
  %v102 = vrot.slane %v94, 7
  %v103 = vrot.slane %v95, 7
  %v104 = vrot.slane %v96, 7
  %v105 = vrot.slane %v97, 7
  %vm106 = vcmp.lt.s32.totalorder %v18, 1
  %v107 = vsel %vm106, %v104, %v105
  %v108 = vsel %vm106, %v103, %v104
  %v109 = vsel %vm106, %v102, %v103
  %v110 = vsel %vm106, %v105, %v102
  %v111 = vsel %vm70, 1, 0
  %v112 = vsel %vm71, 1, 0
  %v113 = vsel %vm72, 1, 0
  %v114 = vsel %vm73, 1, 0
  %vm115 = vcmp.eq.s32.totalorder %v111, 1
  %vm116 = vcmp.eq.s32.totalorder %v112, 1
  %vm117 = vcmp.eq.s32.totalorder %v113, 1
  %vm118 = vcmp.eq.s32.totalorder %v114, 1
  %v119 = vsel %vm115, %v110, 0.0
  %v120 = vsel %vm116, %v109, 0.0
  %v121 = vsel %vm117, %v108, 0.0
  %v122 = vsel %vm118, %v107, 0.0
  %127 = vrot.lane.b32.xlu0 %v94, 32
  %v128 = vpop.permute.xlu0 %127
  %129 = vrot.lane.b32.xlu0 %v95, 32
  %v130 = vpop.permute.xlu0 %129
  %131 = vrot.lane.b32.xlu0 %v96, 32
  %v132 = vpop.permute.xlu0 %131
  %133 = vrot.lane.b32.xlu0 %v97, 32
  %v134 = vpop.permute.xlu0 %133
  %vm139 = vcmask 261120
  %v140 = vsel %vm139, %v119, %v128
  %v141 = vsel %vm139, %v120, %v130
  %v142 = vsel %vm139, %v121, %v132
  %v143 = vsel %vm139, %v122, %v134
  %vm144 = vcmask 523264
  %v146 = vsel %vm144, %v140, 0
  %v149 = vsel %vm144, %v141, 0
  %v152 = vsel %vm144, %v142, 0
  %v155 = vsel %vm144, %v143, 0
  %157 = vmatprep.subr.mxu0 0.0
  %158 = vmatpush1.msra.mxu0 0.0
  %159 = vmatprep.subr.mxu0 0.0
  %160 = vmatpush1.msra.mxu0 0.0
  %161 = vmatprep.subr.mxu0 0.0
  %162 = vmatpush1.msra.mxu0 0.0
  %163 = vmatprep.subr.mxu0 0.0
  %164 = vmatpush1.msra.mxu0 0.0
  %165 = vmatprep.subr.mxu0 0.0
  %166 = vmatpush1.msra.mxu0 0.0
  %167 = vmatprep.subr.mxu0 0.0
  %168 = vmatpush1.msra.mxu0 0.0
  %169 = vmatprep.subr.mxu0 0.0
  %170 = vmatpush1.msra.mxu0 0.0
  %171 = vmatprep.subr.mxu0 0.0
  %172 = vmatpush1.msra.mxu0 0.0
  %173 = vmatprep.subr.mxu0 %v93
  %174 = vmatpush1.msra.mxu0 %v92
  %175 = vmatprep.subr.mxu0 %v91
  %176 = vmatpush1.msra.mxu0 %v90
  %177 = vmatprep.subr.mxu0 %v89
  %178 = vmatpush1.msra.mxu0 %v88
  %179 = vmatprep.subr.mxu0 %v87
  %180 = vmatpush1.msra.mxu0 %v86
  %181 = vmatprep.subr.mxu0 %v85
  %182 = vmatpush1.msra.mxu0 %v84
  %183 = vmatprep.subr.mxu0 %v83
  %184 = vmatpush1.msra.mxu0 %v82
  %185 = vmatprep.subr.mxu0 %v81
  %186 = vmatpush1.msra.mxu0 %v80
  %187 = vmatprep.subr.mxu0 %v79
  %188 = vmatpush1.msra.mxu0 %v78
  %189 = vmatprep.subr.mxu0 0.0
  %190 = vmatpush2.msra.mxu0 0.0
  %191 = vmatprep.subr.mxu0 0.0
  %192 = vmatpush2.msra.mxu0 0.0
  %193 = vmatprep.subr.mxu0 0.0
  %194 = vmatpush2.msra.mxu0 0.0
  %195 = vmatprep.subr.mxu0 0.0
  %196 = vmatpush2.msra.mxu0 0.0
  %197 = vmatprep.subr.mxu0 0.0
  %198 = vmatpush2.msra.mxu0 0.0
  %199 = vmatprep.subr.mxu0 0.0
  %200 = vmatpush2.msra.mxu0 0.0
  %201 = vmatprep.subr.mxu0 0.0
  %202 = vmatpush2.msra.mxu0 0.0
  %203 = vmatprep.subr.mxu0 0.0
  %204 = vmatpush2.msra.mxu0 0.0
  %205 = vmatprep.subr.mxu0 0.0
  %206 = vmatpush2.msra.mxu0 0.0
  %207 = vmatprep.subr.mxu0 0.0
  %208 = vmatpush2.msra.mxu0 0.0
  %209 = vmatprep.subr.mxu0 0.0
  %210 = vmatpush2.msra.mxu0 0.0
  %211 = vmatprep.subr.mxu0 0.0
  %212 = vmatpush2.msra.mxu0 0.0
  %213 = vmatprep.subr.mxu0 0.0
  %214 = vmatpush2.msra.mxu0 0.0
  %215 = vmatprep.subr.mxu0 0.0
  %216 = vmatpush2.msra.mxu0 0.0
  %217 = vmatprep.subr.mxu0 0.0
  %218 = vmatpush2.msra.mxu0 0.0
  %219 = vmatprep.subr.mxu0 0.0
  %220 = vmatpush2.msra.mxu0 0.0
  %221 = vmatprep.mubr.f32.mxu0 0.0
  %222 = vmatmul.mubr.f32.gmra.mxu0 %v146
  %v223 = vpop.f32.mrf.mxu0
  %v224 = vadd.f32 0.0, %v223
  %v225 = vpop.f32.mrf.mxu0
  %v226 = vadd.f32 0.0, %v225
  %227 = vmatprep.mubr.f32.mxu0 0.0
  %228 = vmatmul.mubr.f32.gmra.mxu0 %v149
  %v229 = vpop.f32.mrf.mxu0
  %v230 = vadd.f32 0.0, %v229
  %v231 = vpop.f32.mrf.mxu0
  %v232 = vadd.f32 0.0, %v231
  %233 = vmatprep.mubr.f32.mxu0 0.0
  %234 = vmatmul.mubr.f32.gmra.mxu0 %v152
  %v235 = vpop.f32.mrf.mxu0
  %v236 = vadd.f32 0.0, %v235
  %v237 = vpop.f32.mrf.mxu0
  %v238 = vadd.f32 0.0, %v237
  %239 = vmatprep.mubr.f32.mxu0 0.0
  %240 = vmatmul.mubr.f32.gmra.mxu0 %v155
  %v241 = vpop.f32.mrf.mxu0
  %v242 = vadd.f32 0.0, %v241
  %v243 = vpop.f32.mrf.mxu0
  %v244 = vadd.f32 0.0, %v243
  %245 = vdwg.mxu0
  %v246 = vsel %vm74, 1, 0
  %v247 = vsel %vm75, 1, 0
  %v248 = vsel %vm76, 1, 0
  %v249 = vsel %vm77, 1, 0
  %vm250 = vcmp.eq.s32.totalorder %v246, 1
  %vm251 = vcmp.eq.s32.totalorder %v247, 1
  %vm252 = vcmp.eq.s32.totalorder %v248, 1
  %vm253 = vcmp.eq.s32.totalorder %v249, 1
  %v254 = vsel %vm250, %v224, %v226
  %v255 = vsel %vm251, %v230, %v232
  %v256 = vsel %vm252, %v236, %v238
  %v257 = vsel %vm253, %v242, %v244
  %v258 = vld [vmem:[%s0] sm:$0xff]
  %v259 = vld [vmem:[%s0 + $0x8] sm:$0xff]
  %v260 = vld [vmem:[%s0 + $0x10] sm:$0xff]
  %v261 = vld [vmem:[%s0 + $0x18] sm:$0xff]
  %v262 = vadd.f32 %v258, %v254
  %v263 = vadd.f32 %v259, %v255
  %v264 = vadd.f32 %v260, %v256
  %v265 = vadd.f32 %v261, %v257
  %v266 = vxor.u32 %v262, 2147483648
  %v267 = vxor.u32 %v263, 2147483648
  %v268 = vxor.u32 %v264, 2147483648
  %v269 = vxor.u32 %v265, 2147483648
  %v270 = vmul.f32 %v266, 1.442695
  %v271 = vpow.pop %v270
  %v272 = vmul.f32 %v267, 1.442695
  %v273 = vpow.pop %v272
  %v274 = vmul.f32 %v268, 1.442695
  %v275 = vpow.pop %v274
  %v276 = vmul.f32 %v269, 1.442695
  %v277 = vpow.pop %v276
  %v278 = vadd.f32 %v271, 1.0
  %v279 = vadd.f32 %v273, 1.0
  %v280 = vadd.f32 %v275, 1.0
  %v281 = vadd.f32 %v277, 1.0
  %v282 = vrcp.pop %v278
  %v283 = vmul.f32 1.0, %v282
  %v284 = vrcp.pop %v279
  %v285 = vmul.f32 1.0, %v284
  %v286 = vrcp.pop %v280
  %v287 = vmul.f32 1.0, %v286
  %v288 = vrcp.pop %v281
  %v289 = vmul.f32 1.0, %v288
  %v290 = vtanh.pop %v262
  %v291 = vtanh.pop %v263
  %v292 = vtanh.pop %v264
  %v293 = vtanh.pop %v265
  %298 = vrot.lane.b32.xlu0 %v98, 64
  %v299 = vpop.permute.xlu0 %298
  %300 = vrot.lane.b32.xlu0 %v99, 64
  %v301 = vpop.permute.xlu0 %300
  %302 = vrot.lane.b32.xlu0 %v100, 64
  %v303 = vpop.permute.xlu0 %302
  %304 = vrot.lane.b32.xlu0 %v101, 64
  %v305 = vpop.permute.xlu0 %304
  %v310 = vmul.f32 %v283, %v299
  %v311 = vmul.f32 %v285, %v301
  %v312 = vmul.f32 %v287, %v303
  %v313 = vmul.f32 %v289, %v305
  %318 = vrot.lane.b32.xlu0 %v290, 96
  %v319 = vpop.permute.xlu0 %318
  %320 = vrot.lane.b32.xlu0 %v291, 96
  %v321 = vpop.permute.xlu0 %320
  %322 = vrot.lane.b32.xlu0 %v292, 96
  %v323 = vpop.permute.xlu0 %322
  %324 = vrot.lane.b32.xlu0 %v293, 96
  %v325 = vpop.permute.xlu0 %324
  %v330 = vmul.f32 %v283, %v319
  %v331 = vmul.f32 %v285, %v321
  %v332 = vmul.f32 %v287, %v323
  %v333 = vmul.f32 %v289, %v325
  %338 = vrot.lane.b32.xlu0 %v330, 64
  %v339 = vpop.permute.xlu0 %338
  %340 = vrot.lane.b32.xlu0 %v331, 64
  %v341 = vpop.permute.xlu0 %340
  %342 = vrot.lane.b32.xlu0 %v332, 64
  %v343 = vpop.permute.xlu0 %342
  %344 = vrot.lane.b32.xlu0 %v333, 64
  %v345 = vpop.permute.xlu0 %344
  %v350 = vadd.f32 %v310, %v339
  %v351 = vadd.f32 %v311, %v341
  %v352 = vadd.f32 %v312, %v343
  %v353 = vadd.f32 %v313, %v345
  %v354 = vtanh.pop %v98
  %v355 = vtanh.pop %v99
  %v356 = vtanh.pop %v100
  %v357 = vtanh.pop %v101
  %362 = vrot.lane.b32.xlu0 %v283, 32
  %v363 = vpop.permute.xlu0 %362
  %364 = vrot.lane.b32.xlu0 %v285, 32
  %v365 = vpop.permute.xlu0 %364
  %366 = vrot.lane.b32.xlu0 %v287, 32
  %v367 = vpop.permute.xlu0 %366
  %368 = vrot.lane.b32.xlu0 %v289, 32
  %v369 = vpop.permute.xlu0 %368
  %v374 = vmul.f32 %v354, %v363
  %v375 = vmul.f32 %v355, %v365
  %v376 = vmul.f32 %v356, %v367
  %v377 = vmul.f32 %v357, %v369
  %v378 = vrot.slane %v374, 7
  %v379 = vrot.slane %v375, 7
  %v380 = vrot.slane %v376, 7
  %v381 = vrot.slane %v377, 7
  %v382 = vsel %vm106, %v380, %v381
  %v383 = vsel %vm106, %v379, %v380
  %v384 = vsel %vm106, %v378, %v379
  %v385 = vsel %vm106, %v381, %v378
  %v386 = vsel %vm115, %v385, 0.0
  %v387 = vsel %vm116, %v384, 0.0
  %v388 = vsel %vm117, %v383, 0.0
  %v389 = vsel %vm118, %v382, 0.0
  %394 = vrot.lane.b32.xlu0 %v374, 32
  %v395 = vpop.permute.xlu0 %394
  %396 = vrot.lane.b32.xlu0 %v375, 32
  %v397 = vpop.permute.xlu0 %396
  %398 = vrot.lane.b32.xlu0 %v376, 32
  %v399 = vpop.permute.xlu0 %398
  %400 = vrot.lane.b32.xlu0 %v377, 32
  %v401 = vpop.permute.xlu0 %400
  %v406 = vsel %vm139, %v386, %v395
  %v407 = vsel %vm139, %v387, %v397
  %v408 = vsel %vm139, %v388, %v399
  %v409 = vsel %vm139, %v389, %v401
  %v411 = vsel %vm144, %v406, 0
  %v414 = vsel %vm144, %v407, 0
  %v417 = vsel %vm144, %v408, 0
  %v420 = vsel %vm144, %v409, 0
  %422 = vmatprep.subr.mxu0 0.0
  %423 = vmatpush1.msra.mxu0 0.0
  %424 = vmatprep.subr.mxu0 0.0
  %425 = vmatpush1.msra.mxu0 0.0
  %426 = vmatprep.subr.mxu0 0.0
  %427 = vmatpush1.msra.mxu0 0.0
  %428 = vmatprep.subr.mxu0 0.0
  %429 = vmatpush1.msra.mxu0 0.0
  %430 = vmatprep.subr.mxu0 0.0
  %431 = vmatpush1.msra.mxu0 0.0
  %432 = vmatprep.subr.mxu0 0.0
  %433 = vmatpush1.msra.mxu0 0.0
  %434 = vmatprep.subr.mxu0 0.0
  %435 = vmatpush1.msra.mxu0 0.0
  %436 = vmatprep.subr.mxu0 0.0
  %437 = vmatpush1.msra.mxu0 0.0
  %438 = vmatprep.subr.mxu0 %v93
  %439 = vmatpush1.msra.mxu0 %v92
  %440 = vmatprep.subr.mxu0 %v91
  %441 = vmatpush1.msra.mxu0 %v90
  %442 = vmatprep.subr.mxu0 %v89
  %443 = vmatpush1.msra.mxu0 %v88
  %444 = vmatprep.subr.mxu0 %v87
  %445 = vmatpush1.msra.mxu0 %v86
  %446 = vmatprep.subr.mxu0 %v85
  %447 = vmatpush1.msra.mxu0 %v84
  %448 = vmatprep.subr.mxu0 %v83
  %449 = vmatpush1.msra.mxu0 %v82
  %450 = vmatprep.subr.mxu0 %v81
  %451 = vmatpush1.msra.mxu0 %v80
  %452 = vmatprep.subr.mxu0 %v79
  %453 = vmatpush1.msra.mxu0 %v78
  %454 = vmatprep.subr.mxu0 0.0
  %455 = vmatpush2.msra.mxu0 0.0
  %456 = vmatprep.subr.mxu0 0.0
  %457 = vmatpush2.msra.mxu0 0.0
  %458 = vmatprep.subr.mxu0 0.0
  %459 = vmatpush2.msra.mxu0 0.0
  %460 = vmatprep.subr.mxu0 0.0
  %461 = vmatpush2.msra.mxu0 0.0
  %462 = vmatprep.subr.mxu0 0.0
  %463 = vmatpush2.msra.mxu0 0.0
  %464 = vmatprep.subr.mxu0 0.0
  %465 = vmatpush2.msra.mxu0 0.0
  %466 = vmatprep.subr.mxu0 0.0
  %467 = vmatpush2.msra.mxu0 0.0
  %468 = vmatprep.subr.mxu0 0.0
  %469 = vmatpush2.msra.mxu0 0.0
  %470 = vmatprep.subr.mxu0 0.0
  %471 = vmatpush2.msra.mxu0 0.0
  %472 = vmatprep.subr.mxu0 0.0
  %473 = vmatpush2.msra.mxu0 0.0
  %474 = vmatprep.subr.mxu0 0.0
  %475 = vmatpush2.msra.mxu0 0.0
  %476 = vmatprep.subr.mxu0 0.0
  %477 = vmatpush2.msra.mxu0 0.0
  %478 = vmatprep.subr.mxu0 0.0
  %479 = vmatpush2.msra.mxu0 0.0
  %480 = vmatprep.subr.mxu0 0.0
  %481 = vmatpush2.msra.mxu0 0.0
  %482 = vmatprep.subr.mxu0 0.0
  %483 = vmatpush2.msra.mxu0 0.0
  %484 = vmatprep.subr.mxu0 0.0
  %485 = vmatpush2.msra.mxu0 0.0
  %486 = vmatprep.mubr.f32.mxu0 0.0
  %487 = vmatmul.mubr.f32.gmra.mxu0 %v411
  %v488 = vpop.f32.mrf.mxu0
  %v489 = vadd.f32 0.0, %v488
  %v490 = vpop.f32.mrf.mxu0
  %v491 = vadd.f32 0.0, %v490
  %492 = vmatprep.mubr.f32.mxu0 0.0
  %493 = vmatmul.mubr.f32.gmra.mxu0 %v414
  %v494 = vpop.f32.mrf.mxu0
  %v495 = vadd.f32 0.0, %v494
  %v496 = vpop.f32.mrf.mxu0
  %v497 = vadd.f32 0.0, %v496
  %498 = vmatprep.mubr.f32.mxu0 0.0
  %499 = vmatmul.mubr.f32.gmra.mxu0 %v417
  %v500 = vpop.f32.mrf.mxu0
  %v501 = vadd.f32 0.0, %v500
  %v502 = vpop.f32.mrf.mxu0
  %v503 = vadd.f32 0.0, %v502
  %504 = vmatprep.mubr.f32.mxu0 0.0
  %505 = vmatmul.mubr.f32.gmra.mxu0 %v420
  %v506 = vpop.f32.mrf.mxu0
  %v507 = vadd.f32 0.0, %v506
  %v508 = vpop.f32.mrf.mxu0
  %v509 = vadd.f32 0.0, %v508
  %510 = vdwg.mxu0
  %v511 = vsel %vm250, %v489, %v491
  %v512 = vsel %vm251, %v495, %v497
  %v513 = vsel %vm252, %v501, %v503
  %v514 = vsel %vm253, %v507, %v509
  %s515 = scalar_lea.vmem %s0, 32
  %v516 = vld [vmem:[%s515] sm:$0xff]
  %v517 = vld [vmem:[%s515 + $0x8] sm:$0xff]
  %v518 = vld [vmem:[%s515 + $0x10] sm:$0xff]
  %v519 = vld [vmem:[%s515 + $0x18] sm:$0xff]
  %v520 = vadd.f32 %v516, %v511
  %v521 = vadd.f32 %v517, %v512
  %v522 = vadd.f32 %v518, %v513
  %v523 = vadd.f32 %v519, %v514
  %v524 = vxor.u32 %v520, 2147483648
  %v525 = vxor.u32 %v521, 2147483648
  %v526 = vxor.u32 %v522, 2147483648
  %v527 = vxor.u32 %v523, 2147483648
  %v528 = vmul.f32 %v524, 1.442695
  %v529 = vpow.pop %v528
  %v530 = vmul.f32 %v525, 1.442695
  %v531 = vpow.pop %v530
  %v532 = vmul.f32 %v526, 1.442695
  %v533 = vpow.pop %v532
  %v534 = vmul.f32 %v527, 1.442695
  %v535 = vpow.pop %v534
  %v536 = vadd.f32 %v529, 1.0
  %v537 = vadd.f32 %v531, 1.0
  %v538 = vadd.f32 %v533, 1.0
  %v539 = vadd.f32 %v535, 1.0
  %v540 = vrcp.pop %v536
  %v541 = vmul.f32 1.0, %v540
  %v542 = vrcp.pop %v537
  %v543 = vmul.f32 1.0, %v542
  %v544 = vrcp.pop %v538
  %v545 = vmul.f32 1.0, %v544
  %v546 = vrcp.pop %v539
  %v547 = vmul.f32 1.0, %v546
  %v548 = vtanh.pop %v520
  %v549 = vtanh.pop %v521
  %v550 = vtanh.pop %v522
  %v551 = vtanh.pop %v523
  %v552 = vmul.f32 %v541, %v350
  %v553 = vmul.f32 %v543, %v351
  %v554 = vmul.f32 %v545, %v352
  %v555 = vmul.f32 %v547, %v353
  %560 = vrot.lane.b32.xlu0 %v548, 96
  %v561 = vpop.permute.xlu0 %560
  %562 = vrot.lane.b32.xlu0 %v549, 96
  %v563 = vpop.permute.xlu0 %562
  %564 = vrot.lane.b32.xlu0 %v550, 96
  %v565 = vpop.permute.xlu0 %564
  %566 = vrot.lane.b32.xlu0 %v551, 96
  %v567 = vpop.permute.xlu0 %566
  %v572 = vmul.f32 %v541, %v561
  %v573 = vmul.f32 %v543, %v563
  %v574 = vmul.f32 %v545, %v565
  %v575 = vmul.f32 %v547, %v567
  %580 = vrot.lane.b32.xlu0 %v572, 64
  %v581 = vpop.permute.xlu0 %580
  %582 = vrot.lane.b32.xlu0 %v573, 64
  %v583 = vpop.permute.xlu0 %582
  %584 = vrot.lane.b32.xlu0 %v574, 64
  %v585 = vpop.permute.xlu0 %584
  %586 = vrot.lane.b32.xlu0 %v575, 64
  %v587 = vpop.permute.xlu0 %586
  %v592 = vadd.f32 %v552, %v581
  %v593 = vadd.f32 %v553, %v583
  %v594 = vadd.f32 %v554, %v585
  %v595 = vadd.f32 %v555, %v587
  %v596 = vtanh.pop %v350
  %v597 = vtanh.pop %v351
  %v598 = vtanh.pop %v352
  %v599 = vtanh.pop %v353
  %604 = vrot.lane.b32.xlu0 %v541, 96
  %v605 = vpop.permute.xlu0 %604
  %606 = vrot.lane.b32.xlu0 %v543, 96
  %v607 = vpop.permute.xlu0 %606
  %608 = vrot.lane.b32.xlu0 %v545, 96
  %v609 = vpop.permute.xlu0 %608
  %610 = vrot.lane.b32.xlu0 %v547, 96
  %v611 = vpop.permute.xlu0 %610
  %v616 = vmul.f32 %v596, %v605
  %v617 = vmul.f32 %v597, %v607
  %v618 = vmul.f32 %v598, %v609
  %v619 = vmul.f32 %v599, %v611
  %624 = vrot.lane.b32.xlu0 %v616, 64
  %v625 = vpop.permute.xlu0 %624
  %626 = vrot.lane.b32.xlu0 %v617, 64
  %v627 = vpop.permute.xlu0 %626
  %628 = vrot.lane.b32.xlu0 %v618, 64
  %v629 = vpop.permute.xlu0 %628
  %630 = vrot.lane.b32.xlu0 %v619, 64
  %v631 = vpop.permute.xlu0 %630
  %v636 = vrot.slane %v625, 7
  %v637 = vrot.slane %v627, 7
  %v638 = vrot.slane %v629, 7
  %v639 = vrot.slane %v631, 7
  %v640 = vsel %vm106, %v638, %v639
  %v641 = vsel %vm106, %v637, %v638
  %v642 = vsel %vm106, %v636, %v637
  %v643 = vsel %vm106, %v639, %v636
  %v644 = vsel %vm115, %v643, 0.0
  %v645 = vsel %vm116, %v642, 0.0
  %v646 = vsel %vm117, %v641, 0.0
  %v647 = vsel %vm118, %v640, 0.0
  %648 = vrot.lane.b32.xlu0 %v616, 96
  %v649 = vpop.permute.xlu0 %648
  %650 = vrot.lane.b32.xlu0 %v617, 96
  %v651 = vpop.permute.xlu0 %650
  %652 = vrot.lane.b32.xlu0 %v618, 96
  %v653 = vpop.permute.xlu0 %652
  %654 = vrot.lane.b32.xlu0 %v619, 96
  %v655 = vpop.permute.xlu0 %654
  %v660 = vsel %vm139, %v644, %v649
  %v661 = vsel %vm139, %v645, %v651
  %v662 = vsel %vm139, %v646, %v653
  %v663 = vsel %vm139, %v647, %v655
  %v665 = vsel %vm144, %v660, 0
  %v668 = vsel %vm144, %v661, 0
  %v671 = vsel %vm144, %v662, 0
  %v674 = vsel %vm144, %v663, 0
  %676 = vmatprep.subr.mxu0 0.0
  %677 = vmatpush1.msra.mxu0 0.0
  %678 = vmatprep.subr.mxu0 0.0
  %679 = vmatpush1.msra.mxu0 0.0
  %680 = vmatprep.subr.mxu0 0.0
  %681 = vmatpush1.msra.mxu0 0.0
  %682 = vmatprep.subr.mxu0 0.0
  %683 = vmatpush1.msra.mxu0 0.0
  %684 = vmatprep.subr.mxu0 0.0
  %685 = vmatpush1.msra.mxu0 0.0
  %686 = vmatprep.subr.mxu0 0.0
  %687 = vmatpush1.msra.mxu0 0.0
  %688 = vmatprep.subr.mxu0 0.0
  %689 = vmatpush1.msra.mxu0 0.0
  %690 = vmatprep.subr.mxu0 0.0
  %691 = vmatpush1.msra.mxu0 0.0
  %692 = vmatprep.subr.mxu0 %v93
  %693 = vmatpush1.msra.mxu0 %v92
  %694 = vmatprep.subr.mxu0 %v91
  %695 = vmatpush1.msra.mxu0 %v90
  %696 = vmatprep.subr.mxu0 %v89
  %697 = vmatpush1.msra.mxu0 %v88
  %698 = vmatprep.subr.mxu0 %v87
  %699 = vmatpush1.msra.mxu0 %v86
  %700 = vmatprep.subr.mxu0 %v85
  %701 = vmatpush1.msra.mxu0 %v84
  %702 = vmatprep.subr.mxu0 %v83
  %703 = vmatpush1.msra.mxu0 %v82
  %704 = vmatprep.subr.mxu0 %v81
  %705 = vmatpush1.msra.mxu0 %v80
  %706 = vmatprep.subr.mxu0 %v79
  %707 = vmatpush1.msra.mxu0 %v78
  %708 = vmatprep.subr.mxu0 0.0
  %709 = vmatpush2.msra.mxu0 0.0
  %710 = vmatprep.subr.mxu0 0.0
  %711 = vmatpush2.msra.mxu0 0.0
  %712 = vmatprep.subr.mxu0 0.0
  %713 = vmatpush2.msra.mxu0 0.0
  %714 = vmatprep.subr.mxu0 0.0
  %715 = vmatpush2.msra.mxu0 0.0
  %716 = vmatprep.subr.mxu0 0.0
  %717 = vmatpush2.msra.mxu0 0.0
  %718 = vmatprep.subr.mxu0 0.0
  %719 = vmatpush2.msra.mxu0 0.0
  %720 = vmatprep.subr.mxu0 0.0
  %721 = vmatpush2.msra.mxu0 0.0
  %722 = vmatprep.subr.mxu0 0.0
  %723 = vmatpush2.msra.mxu0 0.0
  %724 = vmatprep.subr.mxu0 0.0
  %725 = vmatpush2.msra.mxu0 0.0
  %726 = vmatprep.subr.mxu0 0.0
  %727 = vmatpush2.msra.mxu0 0.0
  %728 = vmatprep.subr.mxu0 0.0
  %729 = vmatpush2.msra.mxu0 0.0
  %730 = vmatprep.subr.mxu0 0.0
  %731 = vmatpush2.msra.mxu0 0.0
  %732 = vmatprep.subr.mxu0 0.0
  %733 = vmatpush2.msra.mxu0 0.0
  %734 = vmatprep.subr.mxu0 0.0
  %735 = vmatpush2.msra.mxu0 0.0
  %736 = vmatprep.subr.mxu0 0.0
  %737 = vmatpush2.msra.mxu0 0.0
  %738 = vmatprep.subr.mxu0 0.0
  %739 = vmatpush2.msra.mxu0 0.0
  %740 = vmatprep.mubr.f32.mxu0 0.0
  %741 = vmatmul.mubr.f32.gmra.mxu0 %v665
  %v742 = vpop.f32.mrf.mxu0
  %v743 = vadd.f32 0.0, %v742
  %v744 = vpop.f32.mrf.mxu0
  %v745 = vadd.f32 0.0, %v744
  %746 = vmatprep.mubr.f32.mxu0 0.0
  %747 = vmatmul.mubr.f32.gmra.mxu0 %v668
  %v748 = vpop.f32.mrf.mxu0
  %v749 = vadd.f32 0.0, %v748
  %v750 = vpop.f32.mrf.mxu0
  %v751 = vadd.f32 0.0, %v750
  %752 = vmatprep.mubr.f32.mxu0 0.0
  %753 = vmatmul.mubr.f32.gmra.mxu0 %v671
  %v754 = vpop.f32.mrf.mxu0
  %v755 = vadd.f32 0.0, %v754
  %v756 = vpop.f32.mrf.mxu0
  %v757 = vadd.f32 0.0, %v756
  %758 = vmatprep.mubr.f32.mxu0 0.0
  %759 = vmatmul.mubr.f32.gmra.mxu0 %v674
  %v760 = vpop.f32.mrf.mxu0
  %v761 = vadd.f32 0.0, %v760
  %v762 = vpop.f32.mrf.mxu0
  %v763 = vadd.f32 0.0, %v762
  %764 = vdwg.mxu0
  %v765 = vsel %vm250, %v743, %v745
  %v766 = vsel %vm251, %v749, %v751
  %v767 = vsel %vm252, %v755, %v757
  %v768 = vsel %vm253, %v761, %v763
  %s769 = scalar_lea.vmem %s0, 64
  %v770 = vld [vmem:[%s769] sm:$0xff]
  %v771 = vld [vmem:[%s769 + $0x8] sm:$0xff]
  %v772 = vld [vmem:[%s769 + $0x10] sm:$0xff]
  %v773 = vld [vmem:[%s769 + $0x18] sm:$0xff]
  %v774 = vadd.f32 %v770, %v765
  %v775 = vadd.f32 %v771, %v766
  %v776 = vadd.f32 %v772, %v767
  %v777 = vadd.f32 %v773, %v768
  %v778 = vxor.u32 %v774, 2147483648
  %v779 = vxor.u32 %v775, 2147483648
  %v780 = vxor.u32 %v776, 2147483648
  %v781 = vxor.u32 %v777, 2147483648
  %v782 = vmul.f32 %v778, 1.442695
  %v783 = vpow.pop %v782
  %v784 = vmul.f32 %v779, 1.442695
  %v785 = vpow.pop %v784
  %v786 = vmul.f32 %v780, 1.442695
  %v787 = vpow.pop %v786
  %v788 = vmul.f32 %v781, 1.442695
  %v789 = vpow.pop %v788
  %v790 = vadd.f32 %v783, 1.0
  %v791 = vadd.f32 %v785, 1.0
  %v792 = vadd.f32 %v787, 1.0
  %v793 = vadd.f32 %v789, 1.0
  %v794 = vrcp.pop %v790
  %v795 = vmul.f32 1.0, %v794
  %v796 = vrcp.pop %v791
  %v797 = vmul.f32 1.0, %v796
  %v798 = vrcp.pop %v792
  %v799 = vmul.f32 1.0, %v798
  %v800 = vrcp.pop %v793
  %v801 = vmul.f32 1.0, %v800
  %v802 = vtanh.pop %v774
  %v803 = vtanh.pop %v775
  %v804 = vtanh.pop %v776
  %v805 = vtanh.pop %v777
  %v806 = vmul.f32 %v795, %v592
  %v807 = vmul.f32 %v797, %v593
  %v808 = vmul.f32 %v799, %v594
  %v809 = vmul.f32 %v801, %v595
  %814 = vrot.lane.b32.xlu0 %v802, 96
  %v815 = vpop.permute.xlu0 %814
  %816 = vrot.lane.b32.xlu0 %v803, 96
  %v817 = vpop.permute.xlu0 %816
  %818 = vrot.lane.b32.xlu0 %v804, 96
  %v819 = vpop.permute.xlu0 %818
  %820 = vrot.lane.b32.xlu0 %v805, 96
  %v821 = vpop.permute.xlu0 %820
  %v826 = vmul.f32 %v795, %v815
  %v827 = vmul.f32 %v797, %v817
  %v828 = vmul.f32 %v799, %v819
  %v829 = vmul.f32 %v801, %v821
  %834 = vrot.lane.b32.xlu0 %v826, 64
  %v835 = vpop.permute.xlu0 %834
  %836 = vrot.lane.b32.xlu0 %v827, 64
  %v837 = vpop.permute.xlu0 %836
  %838 = vrot.lane.b32.xlu0 %v828, 64
  %v839 = vpop.permute.xlu0 %838
  %840 = vrot.lane.b32.xlu0 %v829, 64
  %v841 = vpop.permute.xlu0 %840
  %v846 = vadd.f32 %v806, %v835
  %v847 = vadd.f32 %v807, %v837
  %v848 = vadd.f32 %v808, %v839
  %v849 = vadd.f32 %v809, %v841
  %v850 = vtanh.pop %v592
  %v851 = vtanh.pop %v593
  %v852 = vtanh.pop %v594
  %v853 = vtanh.pop %v595
  %858 = vrot.lane.b32.xlu0 %v795, 96
  %v859 = vpop.permute.xlu0 %858
  %860 = vrot.lane.b32.xlu0 %v797, 96
  %v861 = vpop.permute.xlu0 %860
  %862 = vrot.lane.b32.xlu0 %v799, 96
  %v863 = vpop.permute.xlu0 %862
  %864 = vrot.lane.b32.xlu0 %v801, 96
  %v865 = vpop.permute.xlu0 %864
  %v870 = vmul.f32 %v850, %v859
  %v871 = vmul.f32 %v851, %v861
  %v872 = vmul.f32 %v852, %v863
  %v873 = vmul.f32 %v853, %v865
  %878 = vrot.lane.b32.xlu0 %v870, 64
  %v879 = vpop.permute.xlu0 %878
  %880 = vrot.lane.b32.xlu0 %v871, 64
  %v881 = vpop.permute.xlu0 %880
  %882 = vrot.lane.b32.xlu0 %v872, 64
  %v883 = vpop.permute.xlu0 %882
  %884 = vrot.lane.b32.xlu0 %v873, 64
  %v885 = vpop.permute.xlu0 %884
  %v890 = vrot.slane %v879, 7
  %v891 = vrot.slane %v881, 7
  %v892 = vrot.slane %v883, 7
  %v893 = vrot.slane %v885, 7
  %v894 = vsel %vm106, %v892, %v893
  %v895 = vsel %vm106, %v891, %v892
  %v896 = vsel %vm106, %v890, %v891
  %v897 = vsel %vm106, %v893, %v890
  %v898 = vsel %vm115, %v897, 0.0
  %v899 = vsel %vm116, %v896, 0.0
  %v900 = vsel %vm117, %v895, 0.0
  %v901 = vsel %vm118, %v894, 0.0
  %902 = vrot.lane.b32.xlu0 %v870, 96
  %v903 = vpop.permute.xlu0 %902
  %904 = vrot.lane.b32.xlu0 %v871, 96
  %v905 = vpop.permute.xlu0 %904
  %906 = vrot.lane.b32.xlu0 %v872, 96
  %v907 = vpop.permute.xlu0 %906
  %908 = vrot.lane.b32.xlu0 %v873, 96
  %v909 = vpop.permute.xlu0 %908
  %v914 = vsel %vm139, %v898, %v903
  %v915 = vsel %vm139, %v899, %v905
  %v916 = vsel %vm139, %v900, %v907
  %v917 = vsel %vm139, %v901, %v909
  %v919 = vsel %vm144, %v914, 0
  %v922 = vsel %vm144, %v915, 0
  %v925 = vsel %vm144, %v916, 0
  %v928 = vsel %vm144, %v917, 0
  %930 = vmatprep.subr.mxu0 0.0
  %931 = vmatpush1.msra.mxu0 0.0
  %932 = vmatprep.subr.mxu0 0.0
  %933 = vmatpush1.msra.mxu0 0.0
  %934 = vmatprep.subr.mxu0 0.0
  %935 = vmatpush1.msra.mxu0 0.0
  %936 = vmatprep.subr.mxu0 0.0
  %937 = vmatpush1.msra.mxu0 0.0
  %938 = vmatprep.subr.mxu0 0.0
  %939 = vmatpush1.msra.mxu0 0.0
  %940 = vmatprep.subr.mxu0 0.0
  %941 = vmatpush1.msra.mxu0 0.0
  %942 = vmatprep.subr.mxu0 0.0
  %943 = vmatpush1.msra.mxu0 0.0
  %944 = vmatprep.subr.mxu0 0.0
  %945 = vmatpush1.msra.mxu0 0.0
  %946 = vmatprep.subr.mxu0 %v93
  %947 = vmatpush1.msra.mxu0 %v92
  %948 = vmatprep.subr.mxu0 %v91
  %949 = vmatpush1.msra.mxu0 %v90
  %950 = vmatprep.subr.mxu0 %v89
  %951 = vmatpush1.msra.mxu0 %v88
  %952 = vmatprep.subr.mxu0 %v87
  %953 = vmatpush1.msra.mxu0 %v86
  %954 = vmatprep.subr.mxu0 %v85
  %955 = vmatpush1.msra.mxu0 %v84
  %956 = vmatprep.subr.mxu0 %v83
  %957 = vmatpush1.msra.mxu0 %v82
  %958 = vmatprep.subr.mxu0 %v81
  %959 = vmatpush1.msra.mxu0 %v80
  %960 = vmatprep.subr.mxu0 %v79
  %961 = vmatpush1.msra.mxu0 %v78
  %962 = vmatprep.subr.mxu0 0.0
  %963 = vmatpush2.msra.mxu0 0.0
  %964 = vmatprep.subr.mxu0 0.0
  %965 = vmatpush2.msra.mxu0 0.0
  %966 = vmatprep.subr.mxu0 0.0
  %967 = vmatpush2.msra.mxu0 0.0
  %968 = vmatprep.subr.mxu0 0.0
  %969 = vmatpush2.msra.mxu0 0.0
  %970 = vmatprep.subr.mxu0 0.0
  %971 = vmatpush2.msra.mxu0 0.0
  %972 = vmatprep.subr.mxu0 0.0
  %973 = vmatpush2.msra.mxu0 0.0
  %974 = vmatprep.subr.mxu0 0.0
  %975 = vmatpush2.msra.mxu0 0.0
  %976 = vmatprep.subr.mxu0 0.0
  %977 = vmatpush2.msra.mxu0 0.0
  %978 = vmatprep.subr.mxu0 0.0
  %979 = vmatpush2.msra.mxu0 0.0
  %980 = vmatprep.subr.mxu0 0.0
  %981 = vmatpush2.msra.mxu0 0.0
  %982 = vmatprep.subr.mxu0 0.0
  %983 = vmatpush2.msra.mxu0 0.0
  %984 = vmatprep.subr.mxu0 0.0
  %985 = vmatpush2.msra.mxu0 0.0
  %986 = vmatprep.subr.mxu0 0.0
  %987 = vmatpush2.msra.mxu0 0.0
  %988 = vmatprep.subr.mxu0 0.0
  %989 = vmatpush2.msra.mxu0 0.0
  %990 = vmatprep.subr.mxu0 0.0
  %991 = vmatpush2.msra.mxu0 0.0
  %992 = vmatprep.subr.mxu0 0.0
  %993 = vmatpush2.msra.mxu0 0.0
  %994 = vmatprep.mubr.f32.mxu0 0.0
  %995 = vmatmul.mubr.f32.gmra.mxu0 %v919
  %v996 = vpop.f32.mrf.mxu0
  %v997 = vadd.f32 0.0, %v996
  %v998 = vpop.f32.mrf.mxu0
  %v999 = vadd.f32 0.0, %v998
  %1000 = vmatprep.mubr.f32.mxu0 0.0
  %1001 = vmatmul.mubr.f32.gmra.mxu0 %v922
  %v1002 = vpop.f32.mrf.mxu0
  %v1003 = vadd.f32 0.0, %v1002
  %v1004 = vpop.f32.mrf.mxu0
  %v1005 = vadd.f32 0.0, %v1004
  %1006 = vmatprep.mubr.f32.mxu0 0.0
  %1007 = vmatmul.mubr.f32.gmra.mxu0 %v925
  %v1008 = vpop.f32.mrf.mxu0
  %v1009 = vadd.f32 0.0, %v1008
  %v1010 = vpop.f32.mrf.mxu0
  %v1011 = vadd.f32 0.0, %v1010
  %1012 = vmatprep.mubr.f32.mxu0 0.0
  %1013 = vmatmul.mubr.f32.gmra.mxu0 %v928
  %v1014 = vpop.f32.mrf.mxu0
  %v1015 = vadd.f32 0.0, %v1014
  %v1016 = vpop.f32.mrf.mxu0
  %v1017 = vadd.f32 0.0, %v1016
  %1018 = vdwg.mxu0
  %v1019 = vsel %vm250, %v997, %v999
  %v1020 = vsel %vm251, %v1003, %v1005
  %v1021 = vsel %vm252, %v1009, %v1011
  %v1022 = vsel %vm253, %v1015, %v1017
  %s1023 = scalar_lea.vmem %s0, 96
  %v1024 = vld [vmem:[%s1023] sm:$0xff]
  %v1025 = vld [vmem:[%s1023 + $0x8] sm:$0xff]
  %v1026 = vld [vmem:[%s1023 + $0x10] sm:$0xff]
  %v1027 = vld [vmem:[%s1023 + $0x18] sm:$0xff]
  %v1028 = vadd.f32 %v1024, %v1019
  %v1029 = vadd.f32 %v1025, %v1020
  %v1030 = vadd.f32 %v1026, %v1021
  %v1031 = vadd.f32 %v1027, %v1022
  %v1032 = vxor.u32 %v1028, 2147483648
  %v1033 = vxor.u32 %v1029, 2147483648
  %v1034 = vxor.u32 %v1030, 2147483648
  %v1035 = vxor.u32 %v1031, 2147483648
  %v1036 = vmul.f32 %v1032, 1.442695
  %v1037 = vpow.pop %v1036
  %v1038 = vmul.f32 %v1033, 1.442695
  %v1039 = vpow.pop %v1038
  %v1040 = vmul.f32 %v1034, 1.442695
  %v1041 = vpow.pop %v1040
  %v1042 = vmul.f32 %v1035, 1.442695
  %v1043 = vpow.pop %v1042
  %v1044 = vadd.f32 %v1037, 1.0
  %v1045 = vadd.f32 %v1039, 1.0
  %v1046 = vadd.f32 %v1041, 1.0
  %v1047 = vadd.f32 %v1043, 1.0
  %v1048 = vrcp.pop %v1044
  %v1049 = vmul.f32 1.0, %v1048
  %v1050 = vrcp.pop %v1045
  %v1051 = vmul.f32 1.0, %v1050
  %v1052 = vrcp.pop %v1046
  %v1053 = vmul.f32 1.0, %v1052
  %v1054 = vrcp.pop %v1047
  %v1055 = vmul.f32 1.0, %v1054
  %v1056 = vtanh.pop %v1028
  %v1057 = vtanh.pop %v1029
  %v1058 = vtanh.pop %v1030
  %v1059 = vtanh.pop %v1031
  %v1060 = vmul.f32 %v1049, %v846
  %v1061 = vmul.f32 %v1051, %v847
  %v1062 = vmul.f32 %v1053, %v848
  %v1063 = vmul.f32 %v1055, %v849
  %1068 = vrot.lane.b32.xlu0 %v1056, 96
  %v1069 = vpop.permute.xlu0 %1068
  %1070 = vrot.lane.b32.xlu0 %v1057, 96
  %v1071 = vpop.permute.xlu0 %1070
  %1072 = vrot.lane.b32.xlu0 %v1058, 96
  %v1073 = vpop.permute.xlu0 %1072
  %1074 = vrot.lane.b32.xlu0 %v1059, 96
  %v1075 = vpop.permute.xlu0 %1074
  %v1080 = vmul.f32 %v1049, %v1069
  %v1081 = vmul.f32 %v1051, %v1071
  %v1082 = vmul.f32 %v1053, %v1073
  %v1083 = vmul.f32 %v1055, %v1075
  %1088 = vrot.lane.b32.xlu0 %v1080, 64
  %v1089 = vpop.permute.xlu0 %1088
  %1090 = vrot.lane.b32.xlu0 %v1081, 64
  %v1091 = vpop.permute.xlu0 %1090
  %1092 = vrot.lane.b32.xlu0 %v1082, 64
  %v1093 = vpop.permute.xlu0 %1092
  %1094 = vrot.lane.b32.xlu0 %v1083, 64
  %v1095 = vpop.permute.xlu0 %1094
  %v1100 = vadd.f32 %v1060, %v1089
  %v1101 = vadd.f32 %v1061, %v1091
  %v1102 = vadd.f32 %v1062, %v1093
  %v1103 = vadd.f32 %v1063, %v1095
  %v1104 = vtanh.pop %v846
  %v1105 = vtanh.pop %v847
  %v1106 = vtanh.pop %v848
  %v1107 = vtanh.pop %v849
  %1112 = vrot.lane.b32.xlu0 %v1049, 96
  %v1113 = vpop.permute.xlu0 %1112
  %1114 = vrot.lane.b32.xlu0 %v1051, 96
  %v1115 = vpop.permute.xlu0 %1114
  %1116 = vrot.lane.b32.xlu0 %v1053, 96
  %v1117 = vpop.permute.xlu0 %1116
  %1118 = vrot.lane.b32.xlu0 %v1055, 96
  %v1119 = vpop.permute.xlu0 %1118
  %v1124 = vmul.f32 %v1104, %v1113
  %v1125 = vmul.f32 %v1105, %v1115
  %v1126 = vmul.f32 %v1106, %v1117
  %v1127 = vmul.f32 %v1107, %v1119
  %1132 = vrot.lane.b32.xlu0 %v1124, 32
  %v1133 = vpop.permute.xlu0 %1132
  %1134 = vrot.lane.b32.xlu0 %v1125, 32
  %v1135 = vpop.permute.xlu0 %1134
  %1136 = vrot.lane.b32.xlu0 %v1126, 32
  %v1137 = vpop.permute.xlu0 %1136
  %1138 = vrot.lane.b32.xlu0 %v1127, 32
  %v1139 = vpop.permute.xlu0 %1138
  %v1144 = vsel %vm139, %v374, %v649
  %v1145 = vsel %vm139, %v375, %v651
  %v1146 = vsel %vm139, %v376, %v653
  %v1147 = vsel %vm139, %v377, %v655
  %v1148 = vsel %vm144, %v1144, %v870
  %v1149 = vsel %vm144, %v1145, %v871
  %v1150 = vsel %vm144, %v1146, %v872
  %v1151 = vsel %vm144, %v1147, %v873
  %vm1152 = vcmask 785408
  %v1153 = vsel %vm1152, %v1148, %v1133
  %v1154 = vsel %vm1152, %v1149, %v1135
  %v1155 = vsel %vm1152, %v1150, %v1137
  %v1156 = vsel %vm1152, %v1151, %v1139
  %1157 = vst [vmem:[%s4] sm:$0xff] %v1153
  %1158 = vst [vmem:[%s4 + $0x8] sm:$0xff] %v1154
  %1159 = vst [vmem:[%s4 + $0x10] sm:$0xff] %v1155
  %1160 = vst [vmem:[%s4 + $0x18] sm:$0xff] %v1156
  %1161 = vrot.lane.b32.xlu0 %v1124, 64
  %v1162 = vpop.permute.xlu0 %1161
  %1163 = vrot.lane.b32.xlu0 %v1125, 64
  %v1164 = vpop.permute.xlu0 %1163
  %1165 = vrot.lane.b32.xlu0 %v1126, 64
  %v1166 = vpop.permute.xlu0 %1165
  %1167 = vrot.lane.b32.xlu0 %v1127, 64
  %v1168 = vpop.permute.xlu0 %1167
  %v1173 = vrot.slane %v1162, 7
  %v1174 = vrot.slane %v1164, 7
  %v1175 = vrot.slane %v1166, 7
  %v1176 = vrot.slane %v1168, 7
  %v1177 = vsel %vm106, %v1175, %v1176
  %v1178 = vsel %vm106, %v1174, %v1175
  %v1179 = vsel %vm106, %v1173, %v1174
  %v1180 = vsel %vm106, %v1176, %v1173
  %v1181 = vsel %vm115, %v1180, 0.0
  %v1182 = vsel %vm116, %v1179, 0.0
  %v1183 = vsel %vm117, %v1178, 0.0
  %v1184 = vsel %vm118, %v1177, 0.0
  %1185 = vrot.lane.b32.xlu0 %v1124, 96
  %v1186 = vpop.permute.xlu0 %1185
  %1187 = vrot.lane.b32.xlu0 %v1125, 96
  %v1188 = vpop.permute.xlu0 %1187
  %1189 = vrot.lane.b32.xlu0 %v1126, 96
  %v1190 = vpop.permute.xlu0 %1189
  %1191 = vrot.lane.b32.xlu0 %v1127, 96
  %v1192 = vpop.permute.xlu0 %1191
  %v1197 = vsel %vm139, %v1181, %v1186
  %v1198 = vsel %vm139, %v1182, %v1188
  %v1199 = vsel %vm139, %v1183, %v1190
  %v1200 = vsel %vm139, %v1184, %v1192
  %v1202 = vsel %vm144, %v1197, 0
  %v1205 = vsel %vm144, %v1198, 0
  %v1208 = vsel %vm144, %v1199, 0
  %v1211 = vsel %vm144, %v1200, 0
  %1213 = vmatprep.subr.mxu0 0.0
  %1214 = vmatpush1.msra.mxu0 0.0
  %1215 = vmatprep.subr.mxu0 0.0
  %1216 = vmatpush1.msra.mxu0 0.0
  %1217 = vmatprep.subr.mxu0 0.0
  %1218 = vmatpush1.msra.mxu0 0.0
  %1219 = vmatprep.subr.mxu0 0.0
  %1220 = vmatpush1.msra.mxu0 0.0
  %1221 = vmatprep.subr.mxu0 0.0
  %1222 = vmatpush1.msra.mxu0 0.0
  %1223 = vmatprep.subr.mxu0 0.0
  %1224 = vmatpush1.msra.mxu0 0.0
  %1225 = vmatprep.subr.mxu0 0.0
  %1226 = vmatpush1.msra.mxu0 0.0
  %1227 = vmatprep.subr.mxu0 0.0
  %1228 = vmatpush1.msra.mxu0 0.0
  %1229 = vmatprep.subr.mxu0 %v93
  %1230 = vmatpush1.msra.mxu0 %v92
  %1231 = vmatprep.subr.mxu0 %v91
  %1232 = vmatpush1.msra.mxu0 %v90
  %1233 = vmatprep.subr.mxu0 %v89
  %1234 = vmatpush1.msra.mxu0 %v88
  %1235 = vmatprep.subr.mxu0 %v87
  %1236 = vmatpush1.msra.mxu0 %v86
  %1237 = vmatprep.subr.mxu0 %v85
  %1238 = vmatpush1.msra.mxu0 %v84
  %1239 = vmatprep.subr.mxu0 %v83
  %1240 = vmatpush1.msra.mxu0 %v82
  %1241 = vmatprep.subr.mxu0 %v81
  %1242 = vmatpush1.msra.mxu0 %v80
  %1243 = vmatprep.subr.mxu0 %v79
  %1244 = vmatpush1.msra.mxu0 %v78
  %1245 = vmatprep.subr.mxu0 0.0
  %1246 = vmatpush2.msra.mxu0 0.0
  %1247 = vmatprep.subr.mxu0 0.0
  %1248 = vmatpush2.msra.mxu0 0.0
  %1249 = vmatprep.subr.mxu0 0.0
  %1250 = vmatpush2.msra.mxu0 0.0
  %1251 = vmatprep.subr.mxu0 0.0
  %1252 = vmatpush2.msra.mxu0 0.0
  %1253 = vmatprep.subr.mxu0 0.0
  %1254 = vmatpush2.msra.mxu0 0.0
  %1255 = vmatprep.subr.mxu0 0.0
  %1256 = vmatpush2.msra.mxu0 0.0
  %1257 = vmatprep.subr.mxu0 0.0
  %1258 = vmatpush2.msra.mxu0 0.0
  %1259 = vmatprep.subr.mxu0 0.0
  %1260 = vmatpush2.msra.mxu0 0.0
  %1261 = vmatprep.subr.mxu0 0.0
  %1262 = vmatpush2.msra.mxu0 0.0
  %1263 = vmatprep.subr.mxu0 0.0
  %1264 = vmatpush2.msra.mxu0 0.0
  %1265 = vmatprep.subr.mxu0 0.0
  %1266 = vmatpush2.msra.mxu0 0.0
  %1267 = vmatprep.subr.mxu0 0.0
  %1268 = vmatpush2.msra.mxu0 0.0
  %1269 = vmatprep.subr.mxu0 0.0
  %1270 = vmatpush2.msra.mxu0 0.0
  %1271 = vmatprep.subr.mxu0 0.0
  %1272 = vmatpush2.msra.mxu0 0.0
  %1273 = vmatprep.subr.mxu0 0.0
  %1274 = vmatpush2.msra.mxu0 0.0
  %1275 = vmatprep.subr.mxu0 0.0
  %1276 = vmatpush2.msra.mxu0 0.0
  %1277 = vmatprep.mubr.f32.mxu0 0.0
  %1278 = vmatmul.mubr.f32.gmra.mxu0 %v1202
  %v1279 = vpop.f32.mrf.mxu0
  %v1280 = vadd.f32 0.0, %v1279
  %v1281 = vpop.f32.mrf.mxu0
  %v1282 = vadd.f32 0.0, %v1281
  %1283 = vmatprep.mubr.f32.mxu0 0.0
  %1284 = vmatmul.mubr.f32.gmra.mxu0 %v1205
  %v1285 = vpop.f32.mrf.mxu0
  %v1286 = vadd.f32 0.0, %v1285
  %v1287 = vpop.f32.mrf.mxu0
  %v1288 = vadd.f32 0.0, %v1287
  %1289 = vmatprep.mubr.f32.mxu0 0.0
  %1290 = vmatmul.mubr.f32.gmra.mxu0 %v1208
  %v1291 = vpop.f32.mrf.mxu0
  %v1292 = vadd.f32 0.0, %v1291
  %v1293 = vpop.f32.mrf.mxu0
  %v1294 = vadd.f32 0.0, %v1293
  %1295 = vmatprep.mubr.f32.mxu0 0.0
  %1296 = vmatmul.mubr.f32.gmra.mxu0 %v1211
  %v1297 = vpop.f32.mrf.mxu0
  %v1298 = vadd.f32 0.0, %v1297
  %v1299 = vpop.f32.mrf.mxu0
  %v1300 = vadd.f32 0.0, %v1299
  %1301 = vdwg.mxu0
  %v1302 = vsel %vm250, %v1280, %v1282
  %v1303 = vsel %vm251, %v1286, %v1288
  %v1304 = vsel %vm252, %v1292, %v1294
  %v1305 = vsel %vm253, %v1298, %v1300
  %s1306 = scalar_lea.vmem %s0, 128
  %v1307 = vld [vmem:[%s1306] sm:$0xff]
  %v1308 = vld [vmem:[%s1306 + $0x8] sm:$0xff]
  %v1309 = vld [vmem:[%s1306 + $0x10] sm:$0xff]
  %v1310 = vld [vmem:[%s1306 + $0x18] sm:$0xff]
  %v1311 = vadd.f32 %v1307, %v1302
  %v1312 = vadd.f32 %v1308, %v1303
  %v1313 = vadd.f32 %v1309, %v1304
  %v1314 = vadd.f32 %v1310, %v1305
  %v1315 = vxor.u32 %v1311, 2147483648
  %v1316 = vxor.u32 %v1312, 2147483648
  %v1317 = vxor.u32 %v1313, 2147483648
  %v1318 = vxor.u32 %v1314, 2147483648
  %v1319 = vmul.f32 %v1315, 1.442695
  %v1320 = vpow.pop %v1319
  %v1321 = vmul.f32 %v1316, 1.442695
  %v1322 = vpow.pop %v1321
  %v1323 = vmul.f32 %v1317, 1.442695
  %v1324 = vpow.pop %v1323
  %v1325 = vmul.f32 %v1318, 1.442695
  %v1326 = vpow.pop %v1325
  %v1327 = vadd.f32 %v1320, 1.0
  %v1328 = vadd.f32 %v1322, 1.0
  %v1329 = vadd.f32 %v1324, 1.0
  %v1330 = vadd.f32 %v1326, 1.0
  %v1331 = vrcp.pop %v1327
  %v1332 = vmul.f32 1.0, %v1331
  %v1333 = vrcp.pop %v1328
  %v1334 = vmul.f32 1.0, %v1333
  %v1335 = vrcp.pop %v1329
  %v1336 = vmul.f32 1.0, %v1335
  %v1337 = vrcp.pop %v1330
  %v1338 = vmul.f32 1.0, %v1337
  %v1339 = vtanh.pop %v1311
  %v1340 = vtanh.pop %v1312
  %v1341 = vtanh.pop %v1313
  %v1342 = vtanh.pop %v1314
  %v1343 = vmul.f32 %v1332, %v1100
  %v1344 = vmul.f32 %v1334, %v1101
  %v1345 = vmul.f32 %v1336, %v1102
  %v1346 = vmul.f32 %v1338, %v1103
  %1351 = vrot.lane.b32.xlu0 %v1339, 96
  %v1352 = vpop.permute.xlu0 %1351
  %1353 = vrot.lane.b32.xlu0 %v1340, 96
  %v1354 = vpop.permute.xlu0 %1353
  %1355 = vrot.lane.b32.xlu0 %v1341, 96
  %v1356 = vpop.permute.xlu0 %1355
  %1357 = vrot.lane.b32.xlu0 %v1342, 96
  %v1358 = vpop.permute.xlu0 %1357
  %v1363 = vmul.f32 %v1332, %v1352
  %v1364 = vmul.f32 %v1334, %v1354
  %v1365 = vmul.f32 %v1336, %v1356
  %v1366 = vmul.f32 %v1338, %v1358
  %1371 = vrot.lane.b32.xlu0 %v1363, 64
  %v1372 = vpop.permute.xlu0 %1371
  %1373 = vrot.lane.b32.xlu0 %v1364, 64
  %v1374 = vpop.permute.xlu0 %1373
  %1375 = vrot.lane.b32.xlu0 %v1365, 64
  %v1376 = vpop.permute.xlu0 %1375
  %1377 = vrot.lane.b32.xlu0 %v1366, 64
  %v1378 = vpop.permute.xlu0 %1377
  %v1383 = vadd.f32 %v1343, %v1372
  %v1384 = vadd.f32 %v1344, %v1374
  %v1385 = vadd.f32 %v1345, %v1376
  %v1386 = vadd.f32 %v1346, %v1378
  %v1387 = vtanh.pop %v1100
  %v1388 = vtanh.pop %v1101
  %v1389 = vtanh.pop %v1102
  %v1390 = vtanh.pop %v1103
  %1395 = vrot.lane.b32.xlu0 %v1332, 96
  %v1396 = vpop.permute.xlu0 %1395
  %1397 = vrot.lane.b32.xlu0 %v1334, 96
  %v1398 = vpop.permute.xlu0 %1397
  %1399 = vrot.lane.b32.xlu0 %v1336, 96
  %v1400 = vpop.permute.xlu0 %1399
  %1401 = vrot.lane.b32.xlu0 %v1338, 96
  %v1402 = vpop.permute.xlu0 %1401
  %v1407 = vmul.f32 %v1387, %v1396
  %v1408 = vmul.f32 %v1388, %v1398
  %v1409 = vmul.f32 %v1389, %v1400
  %v1410 = vmul.f32 %v1390, %v1402
  %1415 = vrot.lane.b32.xlu0 %v1407, 64
  %v1416 = vpop.permute.xlu0 %1415
  %1417 = vrot.lane.b32.xlu0 %v1408, 64
  %v1418 = vpop.permute.xlu0 %1417
  %1419 = vrot.lane.b32.xlu0 %v1409, 64
  %v1420 = vpop.permute.xlu0 %1419
  %1421 = vrot.lane.b32.xlu0 %v1410, 64
  %v1422 = vpop.permute.xlu0 %1421
  %v1427 = vrot.slane %v1416, 7
  %v1428 = vrot.slane %v1418, 7
  %v1429 = vrot.slane %v1420, 7
  %v1430 = vrot.slane %v1422, 7
  %v1431 = vsel %vm106, %v1429, %v1430
  %v1432 = vsel %vm106, %v1428, %v1429
  %v1433 = vsel %vm106, %v1427, %v1428
  %v1434 = vsel %vm106, %v1430, %v1427
  %v1435 = vsel %vm115, %v1434, 0.0
  %v1436 = vsel %vm116, %v1433, 0.0
  %v1437 = vsel %vm117, %v1432, 0.0
  %v1438 = vsel %vm118, %v1431, 0.0
  %1439 = vrot.lane.b32.xlu0 %v1407, 96
  %v1440 = vpop.permute.xlu0 %1439
  %1441 = vrot.lane.b32.xlu0 %v1408, 96
  %v1442 = vpop.permute.xlu0 %1441
  %1443 = vrot.lane.b32.xlu0 %v1409, 96
  %v1444 = vpop.permute.xlu0 %1443
  %1445 = vrot.lane.b32.xlu0 %v1410, 96
  %v1446 = vpop.permute.xlu0 %1445
  %v1451 = vsel %vm139, %v1435, %v1440
  %v1452 = vsel %vm139, %v1436, %v1442
  %v1453 = vsel %vm139, %v1437, %v1444
  %v1454 = vsel %vm139, %v1438, %v1446
  %v1456 = vsel %vm144, %v1451, 0
  %v1459 = vsel %vm144, %v1452, 0
  %v1462 = vsel %vm144, %v1453, 0
  %v1465 = vsel %vm144, %v1454, 0
  %1467 = vmatprep.subr.mxu0 0.0
  %1468 = vmatpush1.msra.mxu0 0.0
  %1469 = vmatprep.subr.mxu0 0.0
  %1470 = vmatpush1.msra.mxu0 0.0
  %1471 = vmatprep.subr.mxu0 0.0
  %1472 = vmatpush1.msra.mxu0 0.0
  %1473 = vmatprep.subr.mxu0 0.0
  %1474 = vmatpush1.msra.mxu0 0.0
  %1475 = vmatprep.subr.mxu0 0.0
  %1476 = vmatpush1.msra.mxu0 0.0
  %1477 = vmatprep.subr.mxu0 0.0
  %1478 = vmatpush1.msra.mxu0 0.0
  %1479 = vmatprep.subr.mxu0 0.0
  %1480 = vmatpush1.msra.mxu0 0.0
  %1481 = vmatprep.subr.mxu0 0.0
  %1482 = vmatpush1.msra.mxu0 0.0
  %1483 = vmatprep.subr.mxu0 %v93
  %1484 = vmatpush1.msra.mxu0 %v92
  %1485 = vmatprep.subr.mxu0 %v91
  %1486 = vmatpush1.msra.mxu0 %v90
  %1487 = vmatprep.subr.mxu0 %v89
  %1488 = vmatpush1.msra.mxu0 %v88
  %1489 = vmatprep.subr.mxu0 %v87
  %1490 = vmatpush1.msra.mxu0 %v86
  %1491 = vmatprep.subr.mxu0 %v85
  %1492 = vmatpush1.msra.mxu0 %v84
  %1493 = vmatprep.subr.mxu0 %v83
  %1494 = vmatpush1.msra.mxu0 %v82
  %1495 = vmatprep.subr.mxu0 %v81
  %1496 = vmatpush1.msra.mxu0 %v80
  %1497 = vmatprep.subr.mxu0 %v79
  %1498 = vmatpush1.msra.mxu0 %v78
  %1499 = vmatprep.subr.mxu0 0.0
  %1500 = vmatpush2.msra.mxu0 0.0
  %1501 = vmatprep.subr.mxu0 0.0
  %1502 = vmatpush2.msra.mxu0 0.0
  %1503 = vmatprep.subr.mxu0 0.0
  %1504 = vmatpush2.msra.mxu0 0.0
  %1505 = vmatprep.subr.mxu0 0.0
  %1506 = vmatpush2.msra.mxu0 0.0
  %1507 = vmatprep.subr.mxu0 0.0
  %1508 = vmatpush2.msra.mxu0 0.0
  %1509 = vmatprep.subr.mxu0 0.0
  %1510 = vmatpush2.msra.mxu0 0.0
  %1511 = vmatprep.subr.mxu0 0.0
  %1512 = vmatpush2.msra.mxu0 0.0
  %1513 = vmatprep.subr.mxu0 0.0
  %1514 = vmatpush2.msra.mxu0 0.0
  %1515 = vmatprep.subr.mxu0 0.0
  %1516 = vmatpush2.msra.mxu0 0.0
  %1517 = vmatprep.subr.mxu0 0.0
  %1518 = vmatpush2.msra.mxu0 0.0
  %1519 = vmatprep.subr.mxu0 0.0
  %1520 = vmatpush2.msra.mxu0 0.0
  %1521 = vmatprep.subr.mxu0 0.0
  %1522 = vmatpush2.msra.mxu0 0.0
  %1523 = vmatprep.subr.mxu0 0.0
  %1524 = vmatpush2.msra.mxu0 0.0
  %1525 = vmatprep.subr.mxu0 0.0
  %1526 = vmatpush2.msra.mxu0 0.0
  %1527 = vmatprep.subr.mxu0 0.0
  %1528 = vmatpush2.msra.mxu0 0.0
  %1529 = vmatprep.subr.mxu0 0.0
  %1530 = vmatpush2.msra.mxu0 0.0
  %1531 = vmatprep.mubr.f32.mxu0 0.0
  %1532 = vmatmul.mubr.f32.gmra.mxu0 %v1456
  %v1533 = vpop.f32.mrf.mxu0
  %v1534 = vadd.f32 0.0, %v1533
  %v1535 = vpop.f32.mrf.mxu0
  %v1536 = vadd.f32 0.0, %v1535
  %1537 = vmatprep.mubr.f32.mxu0 0.0
  %1538 = vmatmul.mubr.f32.gmra.mxu0 %v1459
  %v1539 = vpop.f32.mrf.mxu0
  %v1540 = vadd.f32 0.0, %v1539
  %v1541 = vpop.f32.mrf.mxu0
  %v1542 = vadd.f32 0.0, %v1541
  %1543 = vmatprep.mubr.f32.mxu0 0.0
  %1544 = vmatmul.mubr.f32.gmra.mxu0 %v1462
  %v1545 = vpop.f32.mrf.mxu0
  %v1546 = vadd.f32 0.0, %v1545
  %v1547 = vpop.f32.mrf.mxu0
  %v1548 = vadd.f32 0.0, %v1547
  %1549 = vmatprep.mubr.f32.mxu0 0.0
  %1550 = vmatmul.mubr.f32.gmra.mxu0 %v1465
  %v1551 = vpop.f32.mrf.mxu0
  %v1552 = vadd.f32 0.0, %v1551
  %v1553 = vpop.f32.mrf.mxu0
  %v1554 = vadd.f32 0.0, %v1553
  %1555 = vdwg.mxu0
  %v1556 = vsel %vm250, %v1534, %v1536
  %v1557 = vsel %vm251, %v1540, %v1542
  %v1558 = vsel %vm252, %v1546, %v1548
  %v1559 = vsel %vm253, %v1552, %v1554
  %s1560 = scalar_lea.vmem %s0, 160
  %v1561 = vld [vmem:[%s1560] sm:$0xff]
  %v1562 = vld [vmem:[%s1560 + $0x8] sm:$0xff]
  %v1563 = vld [vmem:[%s1560 + $0x10] sm:$0xff]
  %v1564 = vld [vmem:[%s1560 + $0x18] sm:$0xff]
  %v1565 = vadd.f32 %v1561, %v1556
  %v1566 = vadd.f32 %v1562, %v1557
  %v1567 = vadd.f32 %v1563, %v1558
  %v1568 = vadd.f32 %v1564, %v1559
  %v1569 = vxor.u32 %v1565, 2147483648
  %v1570 = vxor.u32 %v1566, 2147483648
  %v1571 = vxor.u32 %v1567, 2147483648
  %v1572 = vxor.u32 %v1568, 2147483648
  %v1573 = vmul.f32 %v1569, 1.442695
  %v1574 = vpow.pop %v1573
  %v1575 = vmul.f32 %v1570, 1.442695
  %v1576 = vpow.pop %v1575
  %v1577 = vmul.f32 %v1571, 1.442695
  %v1578 = vpow.pop %v1577
  %v1579 = vmul.f32 %v1572, 1.442695
  %v1580 = vpow.pop %v1579
  %v1581 = vadd.f32 %v1574, 1.0
  %v1582 = vadd.f32 %v1576, 1.0
  %v1583 = vadd.f32 %v1578, 1.0
  %v1584 = vadd.f32 %v1580, 1.0
  %v1585 = vrcp.pop %v1581
  %v1586 = vmul.f32 1.0, %v1585
  %v1587 = vrcp.pop %v1582
  %v1588 = vmul.f32 1.0, %v1587
  %v1589 = vrcp.pop %v1583
  %v1590 = vmul.f32 1.0, %v1589
  %v1591 = vrcp.pop %v1584
  %v1592 = vmul.f32 1.0, %v1591
  %v1593 = vtanh.pop %v1565
  %v1594 = vtanh.pop %v1566
  %v1595 = vtanh.pop %v1567
  %v1596 = vtanh.pop %v1568
  %v1597 = vmul.f32 %v1586, %v1383
  %v1598 = vmul.f32 %v1588, %v1384
  %v1599 = vmul.f32 %v1590, %v1385
  %v1600 = vmul.f32 %v1592, %v1386
  %1605 = vrot.lane.b32.xlu0 %v1593, 96
  %v1606 = vpop.permute.xlu0 %1605
  %1607 = vrot.lane.b32.xlu0 %v1594, 96
  %v1608 = vpop.permute.xlu0 %1607
  %1609 = vrot.lane.b32.xlu0 %v1595, 96
  %v1610 = vpop.permute.xlu0 %1609
  %1611 = vrot.lane.b32.xlu0 %v1596, 96
  %v1612 = vpop.permute.xlu0 %1611
  %v1617 = vmul.f32 %v1586, %v1606
  %v1618 = vmul.f32 %v1588, %v1608
  %v1619 = vmul.f32 %v1590, %v1610
  %v1620 = vmul.f32 %v1592, %v1612
  %1625 = vrot.lane.b32.xlu0 %v1617, 64
  %v1626 = vpop.permute.xlu0 %1625
  %1627 = vrot.lane.b32.xlu0 %v1618, 64
  %v1628 = vpop.permute.xlu0 %1627
  %1629 = vrot.lane.b32.xlu0 %v1619, 64
  %v1630 = vpop.permute.xlu0 %1629
  %1631 = vrot.lane.b32.xlu0 %v1620, 64
  %v1632 = vpop.permute.xlu0 %1631
  %v1637 = vadd.f32 %v1597, %v1626
  %v1638 = vadd.f32 %v1598, %v1628
  %v1639 = vadd.f32 %v1599, %v1630
  %v1640 = vadd.f32 %v1600, %v1632
  %v1641 = vtanh.pop %v1383
  %v1642 = vtanh.pop %v1384
  %v1643 = vtanh.pop %v1385
  %v1644 = vtanh.pop %v1386
  %1649 = vrot.lane.b32.xlu0 %v1586, 96
  %v1650 = vpop.permute.xlu0 %1649
  %1651 = vrot.lane.b32.xlu0 %v1588, 96
  %v1652 = vpop.permute.xlu0 %1651
  %1653 = vrot.lane.b32.xlu0 %v1590, 96
  %v1654 = vpop.permute.xlu0 %1653
  %1655 = vrot.lane.b32.xlu0 %v1592, 96
  %v1656 = vpop.permute.xlu0 %1655
  %v1661 = vmul.f32 %v1641, %v1650
  %v1662 = vmul.f32 %v1642, %v1652
  %v1663 = vmul.f32 %v1643, %v1654
  %v1664 = vmul.f32 %v1644, %v1656
  %1669 = vrot.lane.b32.xlu0 %v1661, 64
  %v1670 = vpop.permute.xlu0 %1669
  %1671 = vrot.lane.b32.xlu0 %v1662, 64
  %v1672 = vpop.permute.xlu0 %1671
  %1673 = vrot.lane.b32.xlu0 %v1663, 64
  %v1674 = vpop.permute.xlu0 %1673
  %1675 = vrot.lane.b32.xlu0 %v1664, 64
  %v1676 = vpop.permute.xlu0 %1675
  %v1681 = vrot.slane %v1670, 7
  %v1682 = vrot.slane %v1672, 7
  %v1683 = vrot.slane %v1674, 7
  %v1684 = vrot.slane %v1676, 7
  %v1685 = vsel %vm106, %v1683, %v1684
  %v1686 = vsel %vm106, %v1682, %v1683
  %v1687 = vsel %vm106, %v1681, %v1682
  %v1688 = vsel %vm106, %v1684, %v1681
  %v1689 = vsel %vm115, %v1688, 0.0
  %v1690 = vsel %vm116, %v1687, 0.0
  %v1691 = vsel %vm117, %v1686, 0.0
  %v1692 = vsel %vm118, %v1685, 0.0
  %1693 = vrot.lane.b32.xlu0 %v1661, 96
  %v1694 = vpop.permute.xlu0 %1693
  %1695 = vrot.lane.b32.xlu0 %v1662, 96
  %v1696 = vpop.permute.xlu0 %1695
  %1697 = vrot.lane.b32.xlu0 %v1663, 96
  %v1698 = vpop.permute.xlu0 %1697
  %1699 = vrot.lane.b32.xlu0 %v1664, 96
  %v1700 = vpop.permute.xlu0 %1699
  %v1705 = vsel %vm139, %v1689, %v1694
  %v1706 = vsel %vm139, %v1690, %v1696
  %v1707 = vsel %vm139, %v1691, %v1698
  %v1708 = vsel %vm139, %v1692, %v1700
  %v1710 = vsel %vm144, %v1705, 0
  %v1713 = vsel %vm144, %v1706, 0
  %v1716 = vsel %vm144, %v1707, 0
  %v1719 = vsel %vm144, %v1708, 0
  %1721 = vmatprep.subr.mxu0 0.0
  %1722 = vmatpush1.msra.mxu0 0.0
  %1723 = vmatprep.subr.mxu0 0.0
  %1724 = vmatpush1.msra.mxu0 0.0
  %1725 = vmatprep.subr.mxu0 0.0
  %1726 = vmatpush1.msra.mxu0 0.0
  %1727 = vmatprep.subr.mxu0 0.0
  %1728 = vmatpush1.msra.mxu0 0.0
  %1729 = vmatprep.subr.mxu0 0.0
  %1730 = vmatpush1.msra.mxu0 0.0
  %1731 = vmatprep.subr.mxu0 0.0
  %1732 = vmatpush1.msra.mxu0 0.0
  %1733 = vmatprep.subr.mxu0 0.0
  %1734 = vmatpush1.msra.mxu0 0.0
  %1735 = vmatprep.subr.mxu0 0.0
  %1736 = vmatpush1.msra.mxu0 0.0
  %1737 = vmatprep.subr.mxu0 %v93
  %1738 = vmatpush1.msra.mxu0 %v92
  %1739 = vmatprep.subr.mxu0 %v91
  %1740 = vmatpush1.msra.mxu0 %v90
  %1741 = vmatprep.subr.mxu0 %v89
  %1742 = vmatpush1.msra.mxu0 %v88
  %1743 = vmatprep.subr.mxu0 %v87
  %1744 = vmatpush1.msra.mxu0 %v86
  %1745 = vmatprep.subr.mxu0 %v85
  %1746 = vmatpush1.msra.mxu0 %v84
  %1747 = vmatprep.subr.mxu0 %v83
  %1748 = vmatpush1.msra.mxu0 %v82
  %1749 = vmatprep.subr.mxu0 %v81
  %1750 = vmatpush1.msra.mxu0 %v80
  %1751 = vmatprep.subr.mxu0 %v79
  %1752 = vmatpush1.msra.mxu0 %v78
  %1753 = vmatprep.subr.mxu0 0.0
  %1754 = vmatpush2.msra.mxu0 0.0
  %1755 = vmatprep.subr.mxu0 0.0
  %1756 = vmatpush2.msra.mxu0 0.0
  %1757 = vmatprep.subr.mxu0 0.0
  %1758 = vmatpush2.msra.mxu0 0.0
  %1759 = vmatprep.subr.mxu0 0.0
  %1760 = vmatpush2.msra.mxu0 0.0
  %1761 = vmatprep.subr.mxu0 0.0
  %1762 = vmatpush2.msra.mxu0 0.0
  %1763 = vmatprep.subr.mxu0 0.0
  %1764 = vmatpush2.msra.mxu0 0.0
  %1765 = vmatprep.subr.mxu0 0.0
  %1766 = vmatpush2.msra.mxu0 0.0
  %1767 = vmatprep.subr.mxu0 0.0
  %1768 = vmatpush2.msra.mxu0 0.0
  %1769 = vmatprep.subr.mxu0 0.0
  %1770 = vmatpush2.msra.mxu0 0.0
  %1771 = vmatprep.subr.mxu0 0.0
  %1772 = vmatpush2.msra.mxu0 0.0
  %1773 = vmatprep.subr.mxu0 0.0
  %1774 = vmatpush2.msra.mxu0 0.0
  %1775 = vmatprep.subr.mxu0 0.0
  %1776 = vmatpush2.msra.mxu0 0.0
  %1777 = vmatprep.subr.mxu0 0.0
  %1778 = vmatpush2.msra.mxu0 0.0
  %1779 = vmatprep.subr.mxu0 0.0
  %1780 = vmatpush2.msra.mxu0 0.0
  %1781 = vmatprep.subr.mxu0 0.0
  %1782 = vmatpush2.msra.mxu0 0.0
  %1783 = vmatprep.subr.mxu0 0.0
  %1784 = vmatpush2.msra.mxu0 0.0
  %1785 = vmatprep.mubr.f32.mxu0 0.0
  %1786 = vmatmul.mubr.f32.gmra.mxu0 %v1710
  %v1787 = vpop.f32.mrf.mxu0
  %v1788 = vadd.f32 0.0, %v1787
  %v1789 = vpop.f32.mrf.mxu0
  %v1790 = vadd.f32 0.0, %v1789
  %1791 = vmatprep.mubr.f32.mxu0 0.0
  %1792 = vmatmul.mubr.f32.gmra.mxu0 %v1713
  %v1793 = vpop.f32.mrf.mxu0
  %v1794 = vadd.f32 0.0, %v1793
  %v1795 = vpop.f32.mrf.mxu0
  %v1796 = vadd.f32 0.0, %v1795
  %1797 = vmatprep.mubr.f32.mxu0 0.0
  %1798 = vmatmul.mubr.f32.gmra.mxu0 %v1716
  %v1799 = vpop.f32.mrf.mxu0
  %v1800 = vadd.f32 0.0, %v1799
  %v1801 = vpop.f32.mrf.mxu0
  %v1802 = vadd.f32 0.0, %v1801
  %1803 = vmatprep.mubr.f32.mxu0 0.0
  %1804 = vmatmul.mubr.f32.gmra.mxu0 %v1719
  %v1805 = vpop.f32.mrf.mxu0
  %v1806 = vadd.f32 0.0, %v1805
  %v1807 = vpop.f32.mrf.mxu0
  %v1808 = vadd.f32 0.0, %v1807
  %1809 = vdwg.mxu0
  %v1810 = vsel %vm250, %v1788, %v1790
  %v1811 = vsel %vm251, %v1794, %v1796
  %v1812 = vsel %vm252, %v1800, %v1802
  %v1813 = vsel %vm253, %v1806, %v1808
  %s1814 = scalar_lea.vmem %s0, 192
  %v1815 = vld [vmem:[%s1814] sm:$0xff]
  %v1816 = vld [vmem:[%s1814 + $0x8] sm:$0xff]
  %v1817 = vld [vmem:[%s1814 + $0x10] sm:$0xff]
  %v1818 = vld [vmem:[%s1814 + $0x18] sm:$0xff]
  %v1819 = vadd.f32 %v1815, %v1810
  %v1820 = vadd.f32 %v1816, %v1811
  %v1821 = vadd.f32 %v1817, %v1812
  %v1822 = vadd.f32 %v1818, %v1813
  %v1823 = vxor.u32 %v1819, 2147483648
  %v1824 = vxor.u32 %v1820, 2147483648
  %v1825 = vxor.u32 %v1821, 2147483648
  %v1826 = vxor.u32 %v1822, 2147483648
  %v1827 = vmul.f32 %v1823, 1.442695
  %v1828 = vpow.pop %v1827
  %v1829 = vmul.f32 %v1824, 1.442695
  %v1830 = vpow.pop %v1829
  %v1831 = vmul.f32 %v1825, 1.442695
  %v1832 = vpow.pop %v1831
  %v1833 = vmul.f32 %v1826, 1.442695
  %v1834 = vpow.pop %v1833
  %v1835 = vadd.f32 %v1828, 1.0
  %v1836 = vadd.f32 %v1830, 1.0
  %v1837 = vadd.f32 %v1832, 1.0
  %v1838 = vadd.f32 %v1834, 1.0
  %v1839 = vrcp.pop %v1835
  %v1840 = vmul.f32 1.0, %v1839
  %v1841 = vrcp.pop %v1836
  %v1842 = vmul.f32 1.0, %v1841
  %v1843 = vrcp.pop %v1837
  %v1844 = vmul.f32 1.0, %v1843
  %v1845 = vrcp.pop %v1838
  %v1846 = vmul.f32 1.0, %v1845
  %v1847 = vtanh.pop %v1819
  %v1848 = vtanh.pop %v1820
  %v1849 = vtanh.pop %v1821
  %v1850 = vtanh.pop %v1822
  %v1851 = vmul.f32 %v1840, %v1637
  %v1852 = vmul.f32 %v1842, %v1638
  %v1853 = vmul.f32 %v1844, %v1639
  %v1854 = vmul.f32 %v1846, %v1640
  %1859 = vrot.lane.b32.xlu0 %v1847, 96
  %v1860 = vpop.permute.xlu0 %1859
  %1861 = vrot.lane.b32.xlu0 %v1848, 96
  %v1862 = vpop.permute.xlu0 %1861
  %1863 = vrot.lane.b32.xlu0 %v1849, 96
  %v1864 = vpop.permute.xlu0 %1863
  %1865 = vrot.lane.b32.xlu0 %v1850, 96
  %v1866 = vpop.permute.xlu0 %1865
  %v1871 = vmul.f32 %v1840, %v1860
  %v1872 = vmul.f32 %v1842, %v1862
  %v1873 = vmul.f32 %v1844, %v1864
  %v1874 = vmul.f32 %v1846, %v1866
  %1879 = vrot.lane.b32.xlu0 %v1871, 64
  %v1880 = vpop.permute.xlu0 %1879
  %1881 = vrot.lane.b32.xlu0 %v1872, 64
  %v1882 = vpop.permute.xlu0 %1881
  %1883 = vrot.lane.b32.xlu0 %v1873, 64
  %v1884 = vpop.permute.xlu0 %1883
  %1885 = vrot.lane.b32.xlu0 %v1874, 64
  %v1886 = vpop.permute.xlu0 %1885
  %v1891 = vadd.f32 %v1851, %v1880
  %v1892 = vadd.f32 %v1852, %v1882
  %v1893 = vadd.f32 %v1853, %v1884
  %v1894 = vadd.f32 %v1854, %v1886
  %v1895 = vtanh.pop %v1637
  %v1896 = vtanh.pop %v1638
  %v1897 = vtanh.pop %v1639
  %v1898 = vtanh.pop %v1640
  %1903 = vrot.lane.b32.xlu0 %v1840, 96
  %v1904 = vpop.permute.xlu0 %1903
  %1905 = vrot.lane.b32.xlu0 %v1842, 96
  %v1906 = vpop.permute.xlu0 %1905
  %1907 = vrot.lane.b32.xlu0 %v1844, 96
  %v1908 = vpop.permute.xlu0 %1907
  %1909 = vrot.lane.b32.xlu0 %v1846, 96
  %v1910 = vpop.permute.xlu0 %1909
  %v1915 = vmul.f32 %v1895, %v1904
  %v1916 = vmul.f32 %v1896, %v1906
  %v1917 = vmul.f32 %v1897, %v1908
  %v1918 = vmul.f32 %v1898, %v1910
  %1923 = vrot.lane.b32.xlu0 %v1915, 64
  %v1924 = vpop.permute.xlu0 %1923
  %1925 = vrot.lane.b32.xlu0 %v1916, 64
  %v1926 = vpop.permute.xlu0 %1925
  %1927 = vrot.lane.b32.xlu0 %v1917, 64
  %v1928 = vpop.permute.xlu0 %1927
  %1929 = vrot.lane.b32.xlu0 %v1918, 64
  %v1930 = vpop.permute.xlu0 %1929
  %v1935 = vrot.slane %v1924, 7
  %v1936 = vrot.slane %v1926, 7
  %v1937 = vrot.slane %v1928, 7
  %v1938 = vrot.slane %v1930, 7
  %v1939 = vsel %vm106, %v1937, %v1938
  %v1940 = vsel %vm106, %v1936, %v1937
  %v1941 = vsel %vm106, %v1935, %v1936
  %v1942 = vsel %vm106, %v1938, %v1935
  %v1943 = vsel %vm115, %v1942, 0.0
  %v1944 = vsel %vm116, %v1941, 0.0
  %v1945 = vsel %vm117, %v1940, 0.0
  %v1946 = vsel %vm118, %v1939, 0.0
  %1947 = vrot.lane.b32.xlu0 %v1915, 96
  %v1948 = vpop.permute.xlu0 %1947
  %1949 = vrot.lane.b32.xlu0 %v1916, 96
  %v1950 = vpop.permute.xlu0 %1949
  %1951 = vrot.lane.b32.xlu0 %v1917, 96
  %v1952 = vpop.permute.xlu0 %1951
  %1953 = vrot.lane.b32.xlu0 %v1918, 96
  %v1954 = vpop.permute.xlu0 %1953
  %v1959 = vsel %vm139, %v1943, %v1948
  %v1960 = vsel %vm139, %v1944, %v1950
  %v1961 = vsel %vm139, %v1945, %v1952
  %v1962 = vsel %vm139, %v1946, %v1954
  %v1964 = vsel %vm144, %v1959, 0
  %v1967 = vsel %vm144, %v1960, 0
  %v1970 = vsel %vm144, %v1961, 0
  %v1973 = vsel %vm144, %v1962, 0
  %1975 = vmatprep.subr.mxu0 0.0
  %1976 = vmatpush1.msra.mxu0 0.0
  %1977 = vmatprep.subr.mxu0 0.0
  %1978 = vmatpush1.msra.mxu0 0.0
  %1979 = vmatprep.subr.mxu0 0.0
  %1980 = vmatpush1.msra.mxu0 0.0
  %1981 = vmatprep.subr.mxu0 0.0
  %1982 = vmatpush1.msra.mxu0 0.0
  %1983 = vmatprep.subr.mxu0 0.0
  %1984 = vmatpush1.msra.mxu0 0.0
  %1985 = vmatprep.subr.mxu0 0.0
  %1986 = vmatpush1.msra.mxu0 0.0
  %1987 = vmatprep.subr.mxu0 0.0
  %1988 = vmatpush1.msra.mxu0 0.0
  %1989 = vmatprep.subr.mxu0 0.0
  %1990 = vmatpush1.msra.mxu0 0.0
  %1991 = vmatprep.subr.mxu0 %v93
  %1992 = vmatpush1.msra.mxu0 %v92
  %1993 = vmatprep.subr.mxu0 %v91
  %1994 = vmatpush1.msra.mxu0 %v90
  %1995 = vmatprep.subr.mxu0 %v89
  %1996 = vmatpush1.msra.mxu0 %v88
  %1997 = vmatprep.subr.mxu0 %v87
  %1998 = vmatpush1.msra.mxu0 %v86
  %1999 = vmatprep.subr.mxu0 %v85
  %2000 = vmatpush1.msra.mxu0 %v84
  %2001 = vmatprep.subr.mxu0 %v83
  %2002 = vmatpush1.msra.mxu0 %v82
  %2003 = vmatprep.subr.mxu0 %v81
  %2004 = vmatpush1.msra.mxu0 %v80
  %2005 = vmatprep.subr.mxu0 %v79
  %2006 = vmatpush1.msra.mxu0 %v78
  %2007 = vmatprep.subr.mxu0 0.0
  %2008 = vmatpush2.msra.mxu0 0.0
  %2009 = vmatprep.subr.mxu0 0.0
  %2010 = vmatpush2.msra.mxu0 0.0
  %2011 = vmatprep.subr.mxu0 0.0
  %2012 = vmatpush2.msra.mxu0 0.0
  %2013 = vmatprep.subr.mxu0 0.0
  %2014 = vmatpush2.msra.mxu0 0.0
  %2015 = vmatprep.subr.mxu0 0.0
  %2016 = vmatpush2.msra.mxu0 0.0
  %2017 = vmatprep.subr.mxu0 0.0
  %2018 = vmatpush2.msra.mxu0 0.0
  %2019 = vmatprep.subr.mxu0 0.0
  %2020 = vmatpush2.msra.mxu0 0.0
  %2021 = vmatprep.subr.mxu0 0.0
  %2022 = vmatpush2.msra.mxu0 0.0
  %2023 = vmatprep.subr.mxu0 0.0
  %2024 = vmatpush2.msra.mxu0 0.0
  %2025 = vmatprep.subr.mxu0 0.0
  %2026 = vmatpush2.msra.mxu0 0.0
  %2027 = vmatprep.subr.mxu0 0.0
  %2028 = vmatpush2.msra.mxu0 0.0
  %2029 = vmatprep.subr.mxu0 0.0
  %2030 = vmatpush2.msra.mxu0 0.0
  %2031 = vmatprep.subr.mxu0 0.0
  %2032 = vmatpush2.msra.mxu0 0.0
  %2033 = vmatprep.subr.mxu0 0.0
  %2034 = vmatpush2.msra.mxu0 0.0
  %2035 = vmatprep.subr.mxu0 0.0
  %2036 = vmatpush2.msra.mxu0 0.0
  %2037 = vmatprep.subr.mxu0 0.0
  %2038 = vmatpush2.msra.mxu0 0.0
  %2039 = vmatprep.mubr.f32.mxu0 0.0
  %2040 = vmatmul.mubr.f32.gmra.mxu0 %v1964
  %v2041 = vpop.f32.mrf.mxu0
  %v2042 = vadd.f32 0.0, %v2041
  %v2043 = vpop.f32.mrf.mxu0
  %v2044 = vadd.f32 0.0, %v2043
  %2045 = vmatprep.mubr.f32.mxu0 0.0
  %2046 = vmatmul.mubr.f32.gmra.mxu0 %v1967
  %v2047 = vpop.f32.mrf.mxu0
  %v2048 = vadd.f32 0.0, %v2047
  %v2049 = vpop.f32.mrf.mxu0
  %v2050 = vadd.f32 0.0, %v2049
  %2051 = vmatprep.mubr.f32.mxu0 0.0
  %2052 = vmatmul.mubr.f32.gmra.mxu0 %v1970
  %v2053 = vpop.f32.mrf.mxu0
  %v2054 = vadd.f32 0.0, %v2053
  %v2055 = vpop.f32.mrf.mxu0
  %v2056 = vadd.f32 0.0, %v2055
  %2057 = vmatprep.mubr.f32.mxu0 0.0
  %2058 = vmatmul.mubr.f32.gmra.mxu0 %v1973
  %v2059 = vpop.f32.mrf.mxu0
  %v2060 = vadd.f32 0.0, %v2059
  %v2061 = vpop.f32.mrf.mxu0
  %v2062 = vadd.f32 0.0, %v2061
  %2063 = vdwg.mxu0
  %v2064 = vsel %vm250, %v2042, %v2044
  %v2065 = vsel %vm251, %v2048, %v2050
  %v2066 = vsel %vm252, %v2054, %v2056
  %v2067 = vsel %vm253, %v2060, %v2062
  %s2068 = scalar_lea.vmem %s0, 224
  %v2069 = vld [vmem:[%s2068] sm:$0xff]
  %v2070 = vld [vmem:[%s2068 + $0x8] sm:$0xff]
  %v2071 = vld [vmem:[%s2068 + $0x10] sm:$0xff]
  %v2072 = vld [vmem:[%s2068 + $0x18] sm:$0xff]
  %v2073 = vadd.f32 %v2069, %v2064
  %v2074 = vadd.f32 %v2070, %v2065
  %v2075 = vadd.f32 %v2071, %v2066
  %v2076 = vadd.f32 %v2072, %v2067
  %v2077 = vxor.u32 %v2073, 2147483648
  %v2078 = vxor.u32 %v2074, 2147483648
  %v2079 = vxor.u32 %v2075, 2147483648
  %v2080 = vxor.u32 %v2076, 2147483648
  %v2081 = vmul.f32 %v2077, 1.442695
  %v2082 = vpow.pop %v2081
  %v2083 = vmul.f32 %v2078, 1.442695
  %v2084 = vpow.pop %v2083
  %v2085 = vmul.f32 %v2079, 1.442695
  %v2086 = vpow.pop %v2085
  %v2087 = vmul.f32 %v2080, 1.442695
  %v2088 = vpow.pop %v2087
  %v2089 = vadd.f32 %v2082, 1.0
  %v2090 = vadd.f32 %v2084, 1.0
  %v2091 = vadd.f32 %v2086, 1.0
  %v2092 = vadd.f32 %v2088, 1.0
  %v2093 = vrcp.pop %v2089
  %v2094 = vmul.f32 1.0, %v2093
  %v2095 = vrcp.pop %v2090
  %v2096 = vmul.f32 1.0, %v2095
  %v2097 = vrcp.pop %v2091
  %v2098 = vmul.f32 1.0, %v2097
  %v2099 = vrcp.pop %v2092
  %v2100 = vmul.f32 1.0, %v2099
  %v2101 = vtanh.pop %v2073
  %v2102 = vtanh.pop %v2074
  %v2103 = vtanh.pop %v2075
  %v2104 = vtanh.pop %v2076
  %v2105 = vmul.f32 %v2094, %v1891
  %v2106 = vmul.f32 %v2096, %v1892
  %v2107 = vmul.f32 %v2098, %v1893
  %v2108 = vmul.f32 %v2100, %v1894
  %2113 = vrot.lane.b32.xlu0 %v2101, 96
  %v2114 = vpop.permute.xlu0 %2113
  %2115 = vrot.lane.b32.xlu0 %v2102, 96
  %v2116 = vpop.permute.xlu0 %2115
  %2117 = vrot.lane.b32.xlu0 %v2103, 96
  %v2118 = vpop.permute.xlu0 %2117
  %2119 = vrot.lane.b32.xlu0 %v2104, 96
  %v2120 = vpop.permute.xlu0 %2119
  %v2125 = vmul.f32 %v2094, %v2114
  %v2126 = vmul.f32 %v2096, %v2116
  %v2127 = vmul.f32 %v2098, %v2118
  %v2128 = vmul.f32 %v2100, %v2120
  %2133 = vrot.lane.b32.xlu0 %v2125, 64
  %v2134 = vpop.permute.xlu0 %2133
  %2135 = vrot.lane.b32.xlu0 %v2126, 64
  %v2136 = vpop.permute.xlu0 %2135
  %2137 = vrot.lane.b32.xlu0 %v2127, 64
  %v2138 = vpop.permute.xlu0 %2137
  %2139 = vrot.lane.b32.xlu0 %v2128, 64
  %v2140 = vpop.permute.xlu0 %2139
  %v2145 = vadd.f32 %v2105, %v2134
  %v2146 = vadd.f32 %v2106, %v2136
  %v2147 = vadd.f32 %v2107, %v2138
  %v2148 = vadd.f32 %v2108, %v2140
  %v2149 = vtanh.pop %v1891
  %v2150 = vtanh.pop %v1892
  %v2151 = vtanh.pop %v1893
  %v2152 = vtanh.pop %v1894
  %2157 = vrot.lane.b32.xlu0 %v2094, 96
  %v2158 = vpop.permute.xlu0 %2157
  %2159 = vrot.lane.b32.xlu0 %v2096, 96
  %v2160 = vpop.permute.xlu0 %2159
  %2161 = vrot.lane.b32.xlu0 %v2098, 96
  %v2162 = vpop.permute.xlu0 %2161
  %2163 = vrot.lane.b32.xlu0 %v2100, 96
  %v2164 = vpop.permute.xlu0 %2163
  %v2169 = vmul.f32 %v2149, %v2158
  %v2170 = vmul.f32 %v2150, %v2160
  %v2171 = vmul.f32 %v2151, %v2162
  %v2172 = vmul.f32 %v2152, %v2164
  %2177 = vrot.lane.b32.xlu0 %v2169, 32
  %v2178 = vpop.permute.xlu0 %2177
  %2179 = vrot.lane.b32.xlu0 %v2170, 32
  %v2180 = vpop.permute.xlu0 %2179
  %2181 = vrot.lane.b32.xlu0 %v2171, 32
  %v2182 = vpop.permute.xlu0 %2181
  %2183 = vrot.lane.b32.xlu0 %v2172, 32
  %v2184 = vpop.permute.xlu0 %2183
  %v2189 = vsel %vm139, %v1416, %v1694
  %v2190 = vsel %vm139, %v1418, %v1696
  %v2191 = vsel %vm139, %v1420, %v1698
  %v2192 = vsel %vm139, %v1422, %v1700
  %v2193 = vsel %vm144, %v2189, %v1915
  %v2194 = vsel %vm144, %v2190, %v1916
  %v2195 = vsel %vm144, %v2191, %v1917
  %v2196 = vsel %vm144, %v2192, %v1918
  %v2197 = vsel %vm1152, %v2193, %v2178
  %v2198 = vsel %vm1152, %v2194, %v2180
  %v2199 = vsel %vm1152, %v2195, %v2182
  %v2200 = vsel %vm1152, %v2196, %v2184
  %s2201 = scalar_lea.vmem %s4, 32
  %2202 = vst [vmem:[%s2201] sm:$0xff] %v2197
  %2203 = vst [vmem:[%s2201 + $0x8] sm:$0xff] %v2198
  %2204 = vst [vmem:[%s2201 + $0x10] sm:$0xff] %v2199
  %2205 = vst [vmem:[%s2201 + $0x18] sm:$0xff] %v2200
  %2206 = vrot.lane.b32.xlu0 %v2169, 64
  %v2207 = vpop.permute.xlu0 %2206
  %2208 = vrot.lane.b32.xlu0 %v2170, 64
  %v2209 = vpop.permute.xlu0 %2208
  %2210 = vrot.lane.b32.xlu0 %v2171, 64
  %v2211 = vpop.permute.xlu0 %2210
  %2212 = vrot.lane.b32.xlu0 %v2172, 64
  %v2213 = vpop.permute.xlu0 %2212
  %v2218 = vrot.slane %v2207, 7
  %v2219 = vrot.slane %v2209, 7
  %v2220 = vrot.slane %v2211, 7
  %v2221 = vrot.slane %v2213, 7
  %v2222 = vsel %vm106, %v2220, %v2221
  %v2223 = vsel %vm106, %v2219, %v2220
  %v2224 = vsel %vm106, %v2218, %v2219
  %v2225 = vsel %vm106, %v2221, %v2218
  %v2226 = vsel %vm115, %v2225, 0.0
  %v2227 = vsel %vm116, %v2224, 0.0
  %v2228 = vsel %vm117, %v2223, 0.0
  %v2229 = vsel %vm118, %v2222, 0.0
  %2230 = vrot.lane.b32.xlu0 %v2169, 96
  %v2231 = vpop.permute.xlu0 %2230
  %2232 = vrot.lane.b32.xlu0 %v2170, 96
  %v2233 = vpop.permute.xlu0 %2232
  %2234 = vrot.lane.b32.xlu0 %v2171, 96
  %v2235 = vpop.permute.xlu0 %2234
  %2236 = vrot.lane.b32.xlu0 %v2172, 96
  %v2237 = vpop.permute.xlu0 %2236
  %v2242 = vsel %vm139, %v2226, %v2231
  %v2243 = vsel %vm139, %v2227, %v2233
  %v2244 = vsel %vm139, %v2228, %v2235
  %v2245 = vsel %vm139, %v2229, %v2237
  %v2247 = vsel %vm144, %v2242, 0
  %v2250 = vsel %vm144, %v2243, 0
  %v2253 = vsel %vm144, %v2244, 0
  %v2256 = vsel %vm144, %v2245, 0
  %2258 = vmatprep.subr.mxu0 0.0
  %2259 = vmatpush1.msra.mxu0 0.0
  %2260 = vmatprep.subr.mxu0 0.0
  %2261 = vmatpush1.msra.mxu0 0.0
  %2262 = vmatprep.subr.mxu0 0.0
  %2263 = vmatpush1.msra.mxu0 0.0
  %2264 = vmatprep.subr.mxu0 0.0
  %2265 = vmatpush1.msra.mxu0 0.0
  %2266 = vmatprep.subr.mxu0 0.0
  %2267 = vmatpush1.msra.mxu0 0.0
  %2268 = vmatprep.subr.mxu0 0.0
  %2269 = vmatpush1.msra.mxu0 0.0
  %2270 = vmatprep.subr.mxu0 0.0
  %2271 = vmatpush1.msra.mxu0 0.0
  %2272 = vmatprep.subr.mxu0 0.0
  %2273 = vmatpush1.msra.mxu0 0.0
  %2274 = vmatprep.subr.mxu0 %v93
  %2275 = vmatpush1.msra.mxu0 %v92
  %2276 = vmatprep.subr.mxu0 %v91
  %2277 = vmatpush1.msra.mxu0 %v90
  %2278 = vmatprep.subr.mxu0 %v89
  %2279 = vmatpush1.msra.mxu0 %v88
  %2280 = vmatprep.subr.mxu0 %v87
  %2281 = vmatpush1.msra.mxu0 %v86
  %2282 = vmatprep.subr.mxu0 %v85
  %2283 = vmatpush1.msra.mxu0 %v84
  %2284 = vmatprep.subr.mxu0 %v83
  %2285 = vmatpush1.msra.mxu0 %v82
  %2286 = vmatprep.subr.mxu0 %v81
  %2287 = vmatpush1.msra.mxu0 %v80
  %2288 = vmatprep.subr.mxu0 %v79
  %2289 = vmatpush1.msra.mxu0 %v78
  %2290 = vmatprep.subr.mxu0 0.0
  %2291 = vmatpush2.msra.mxu0 0.0
  %2292 = vmatprep.subr.mxu0 0.0
  %2293 = vmatpush2.msra.mxu0 0.0
  %2294 = vmatprep.subr.mxu0 0.0
  %2295 = vmatpush2.msra.mxu0 0.0
  %2296 = vmatprep.subr.mxu0 0.0
  %2297 = vmatpush2.msra.mxu0 0.0
  %2298 = vmatprep.subr.mxu0 0.0
  %2299 = vmatpush2.msra.mxu0 0.0
  %2300 = vmatprep.subr.mxu0 0.0
  %2301 = vmatpush2.msra.mxu0 0.0
  %2302 = vmatprep.subr.mxu0 0.0
  %2303 = vmatpush2.msra.mxu0 0.0
  %2304 = vmatprep.subr.mxu0 0.0
  %2305 = vmatpush2.msra.mxu0 0.0
  %2306 = vmatprep.subr.mxu0 0.0
  %2307 = vmatpush2.msra.mxu0 0.0
  %2308 = vmatprep.subr.mxu0 0.0
  %2309 = vmatpush2.msra.mxu0 0.0
  %2310 = vmatprep.subr.mxu0 0.0
  %2311 = vmatpush2.msra.mxu0 0.0
  %2312 = vmatprep.subr.mxu0 0.0
  %2313 = vmatpush2.msra.mxu0 0.0
  %2314 = vmatprep.subr.mxu0 0.0
  %2315 = vmatpush2.msra.mxu0 0.0
  %2316 = vmatprep.subr.mxu0 0.0
  %2317 = vmatpush2.msra.mxu0 0.0
  %2318 = vmatprep.subr.mxu0 0.0
  %2319 = vmatpush2.msra.mxu0 0.0
  %2320 = vmatprep.subr.mxu0 0.0
  %2321 = vmatpush2.msra.mxu0 0.0
  %2322 = vmatprep.mubr.f32.mxu0 0.0
  %2323 = vmatmul.mubr.f32.gmra.mxu0 %v2247
  %v2324 = vpop.f32.mrf.mxu0
  %v2325 = vadd.f32 0.0, %v2324
  %v2326 = vpop.f32.mrf.mxu0
  %v2327 = vadd.f32 0.0, %v2326
  %2328 = vmatprep.mubr.f32.mxu0 0.0
  %2329 = vmatmul.mubr.f32.gmra.mxu0 %v2250
  %v2330 = vpop.f32.mrf.mxu0
  %v2331 = vadd.f32 0.0, %v2330
  %v2332 = vpop.f32.mrf.mxu0
  %v2333 = vadd.f32 0.0, %v2332
  %2334 = vmatprep.mubr.f32.mxu0 0.0
  %2335 = vmatmul.mubr.f32.gmra.mxu0 %v2253
  %v2336 = vpop.f32.mrf.mxu0
  %v2337 = vadd.f32 0.0, %v2336
  %v2338 = vpop.f32.mrf.mxu0
  %v2339 = vadd.f32 0.0, %v2338
  %2340 = vmatprep.mubr.f32.mxu0 0.0
  %2341 = vmatmul.mubr.f32.gmra.mxu0 %v2256
  %v2342 = vpop.f32.mrf.mxu0
  %v2343 = vadd.f32 0.0, %v2342
  %v2344 = vpop.f32.mrf.mxu0
  %v2345 = vadd.f32 0.0, %v2344
  %2346 = vdwg.mxu0
  %v2347 = vsel %vm250, %v2325, %v2327
  %v2348 = vsel %vm251, %v2331, %v2333
  %v2349 = vsel %vm252, %v2337, %v2339
  %v2350 = vsel %vm253, %v2343, %v2345
  %s2351 = scalar_lea.vmem %s0, 256
  %v2352 = vld [vmem:[%s2351] sm:$0xff]
  %v2353 = vld [vmem:[%s2351 + $0x8] sm:$0xff]
  %v2354 = vld [vmem:[%s2351 + $0x10] sm:$0xff]
  %v2355 = vld [vmem:[%s2351 + $0x18] sm:$0xff]
  %v2356 = vadd.f32 %v2352, %v2347
  %v2357 = vadd.f32 %v2353, %v2348
  %v2358 = vadd.f32 %v2354, %v2349
  %v2359 = vadd.f32 %v2355, %v2350
  %v2360 = vxor.u32 %v2356, 2147483648
  %v2361 = vxor.u32 %v2357, 2147483648
  %v2362 = vxor.u32 %v2358, 2147483648
  %v2363 = vxor.u32 %v2359, 2147483648
  %v2364 = vmul.f32 %v2360, 1.442695
  %v2365 = vpow.pop %v2364
  %v2366 = vmul.f32 %v2361, 1.442695
  %v2367 = vpow.pop %v2366
  %v2368 = vmul.f32 %v2362, 1.442695
  %v2369 = vpow.pop %v2368
  %v2370 = vmul.f32 %v2363, 1.442695
  %v2371 = vpow.pop %v2370
  %v2372 = vadd.f32 %v2365, 1.0
  %v2373 = vadd.f32 %v2367, 1.0
  %v2374 = vadd.f32 %v2369, 1.0
  %v2375 = vadd.f32 %v2371, 1.0
  %v2376 = vrcp.pop %v2372
  %v2377 = vmul.f32 1.0, %v2376
  %v2378 = vrcp.pop %v2373
  %v2379 = vmul.f32 1.0, %v2378
  %v2380 = vrcp.pop %v2374
  %v2381 = vmul.f32 1.0, %v2380
  %v2382 = vrcp.pop %v2375
  %v2383 = vmul.f32 1.0, %v2382
  %v2384 = vtanh.pop %v2356
  %v2385 = vtanh.pop %v2357
  %v2386 = vtanh.pop %v2358
  %v2387 = vtanh.pop %v2359
  %v2388 = vmul.f32 %v2377, %v2145
  %v2389 = vmul.f32 %v2379, %v2146
  %v2390 = vmul.f32 %v2381, %v2147
  %v2391 = vmul.f32 %v2383, %v2148
  %2396 = vrot.lane.b32.xlu0 %v2384, 96
  %v2397 = vpop.permute.xlu0 %2396
  %2398 = vrot.lane.b32.xlu0 %v2385, 96
  %v2399 = vpop.permute.xlu0 %2398
  %2400 = vrot.lane.b32.xlu0 %v2386, 96
  %v2401 = vpop.permute.xlu0 %2400
  %2402 = vrot.lane.b32.xlu0 %v2387, 96
  %v2403 = vpop.permute.xlu0 %2402
  %v2408 = vmul.f32 %v2377, %v2397
  %v2409 = vmul.f32 %v2379, %v2399
  %v2410 = vmul.f32 %v2381, %v2401
  %v2411 = vmul.f32 %v2383, %v2403
  %2416 = vrot.lane.b32.xlu0 %v2408, 64
  %v2417 = vpop.permute.xlu0 %2416
  %2418 = vrot.lane.b32.xlu0 %v2409, 64
  %v2419 = vpop.permute.xlu0 %2418
  %2420 = vrot.lane.b32.xlu0 %v2410, 64
  %v2421 = vpop.permute.xlu0 %2420
  %2422 = vrot.lane.b32.xlu0 %v2411, 64
  %v2423 = vpop.permute.xlu0 %2422
  %v2428 = vadd.f32 %v2388, %v2417
  %v2429 = vadd.f32 %v2389, %v2419
  %v2430 = vadd.f32 %v2390, %v2421
  %v2431 = vadd.f32 %v2391, %v2423
  %v2432 = vtanh.pop %v2145
  %v2433 = vtanh.pop %v2146
  %v2434 = vtanh.pop %v2147
  %v2435 = vtanh.pop %v2148
  %2440 = vrot.lane.b32.xlu0 %v2377, 96
  %v2441 = vpop.permute.xlu0 %2440
  %2442 = vrot.lane.b32.xlu0 %v2379, 96
  %v2443 = vpop.permute.xlu0 %2442
  %2444 = vrot.lane.b32.xlu0 %v2381, 96
  %v2445 = vpop.permute.xlu0 %2444
  %2446 = vrot.lane.b32.xlu0 %v2383, 96
  %v2447 = vpop.permute.xlu0 %2446
  %v2452 = vmul.f32 %v2432, %v2441
  %v2453 = vmul.f32 %v2433, %v2443
  %v2454 = vmul.f32 %v2434, %v2445
  %v2455 = vmul.f32 %v2435, %v2447
  %2460 = vrot.lane.b32.xlu0 %v2452, 64
  %v2461 = vpop.permute.xlu0 %2460
  %2462 = vrot.lane.b32.xlu0 %v2453, 64
  %v2463 = vpop.permute.xlu0 %2462
  %2464 = vrot.lane.b32.xlu0 %v2454, 64
  %v2465 = vpop.permute.xlu0 %2464
  %2466 = vrot.lane.b32.xlu0 %v2455, 64
  %v2467 = vpop.permute.xlu0 %2466
  %v2472 = vrot.slane %v2461, 7
  %v2473 = vrot.slane %v2463, 7
  %v2474 = vrot.slane %v2465, 7
  %v2475 = vrot.slane %v2467, 7
  %v2476 = vsel %vm106, %v2474, %v2475
  %v2477 = vsel %vm106, %v2473, %v2474
  %v2478 = vsel %vm106, %v2472, %v2473
  %v2479 = vsel %vm106, %v2475, %v2472
  %v2480 = vsel %vm115, %v2479, 0.0
  %v2481 = vsel %vm116, %v2478, 0.0
  %v2482 = vsel %vm117, %v2477, 0.0
  %v2483 = vsel %vm118, %v2476, 0.0
  %2484 = vrot.lane.b32.xlu0 %v2452, 96
  %v2485 = vpop.permute.xlu0 %2484
  %2486 = vrot.lane.b32.xlu0 %v2453, 96
  %v2487 = vpop.permute.xlu0 %2486
  %2488 = vrot.lane.b32.xlu0 %v2454, 96
  %v2489 = vpop.permute.xlu0 %2488
  %2490 = vrot.lane.b32.xlu0 %v2455, 96
  %v2491 = vpop.permute.xlu0 %2490
  %v2496 = vsel %vm139, %v2480, %v2485
  %v2497 = vsel %vm139, %v2481, %v2487
  %v2498 = vsel %vm139, %v2482, %v2489
  %v2499 = vsel %vm139, %v2483, %v2491
  %v2501 = vsel %vm144, %v2496, 0
  %v2504 = vsel %vm144, %v2497, 0
  %v2507 = vsel %vm144, %v2498, 0
  %v2510 = vsel %vm144, %v2499, 0
  %2512 = vmatprep.subr.mxu0 0.0
  %2513 = vmatpush1.msra.mxu0 0.0
  %2514 = vmatprep.subr.mxu0 0.0
  %2515 = vmatpush1.msra.mxu0 0.0
  %2516 = vmatprep.subr.mxu0 0.0
  %2517 = vmatpush1.msra.mxu0 0.0
  %2518 = vmatprep.subr.mxu0 0.0
  %2519 = vmatpush1.msra.mxu0 0.0
  %2520 = vmatprep.subr.mxu0 0.0
  %2521 = vmatpush1.msra.mxu0 0.0
  %2522 = vmatprep.subr.mxu0 0.0
  %2523 = vmatpush1.msra.mxu0 0.0
  %2524 = vmatprep.subr.mxu0 0.0
  %2525 = vmatpush1.msra.mxu0 0.0
  %2526 = vmatprep.subr.mxu0 0.0
  %2527 = vmatpush1.msra.mxu0 0.0
  %2528 = vmatprep.subr.mxu0 %v93
  %2529 = vmatpush1.msra.mxu0 %v92
  %2530 = vmatprep.subr.mxu0 %v91
  %2531 = vmatpush1.msra.mxu0 %v90
  %2532 = vmatprep.subr.mxu0 %v89
  %2533 = vmatpush1.msra.mxu0 %v88
  %2534 = vmatprep.subr.mxu0 %v87
  %2535 = vmatpush1.msra.mxu0 %v86
  %2536 = vmatprep.subr.mxu0 %v85
  %2537 = vmatpush1.msra.mxu0 %v84
  %2538 = vmatprep.subr.mxu0 %v83
  %2539 = vmatpush1.msra.mxu0 %v82
  %2540 = vmatprep.subr.mxu0 %v81
  %2541 = vmatpush1.msra.mxu0 %v80
  %2542 = vmatprep.subr.mxu0 %v79
  %2543 = vmatpush1.msra.mxu0 %v78
  %2544 = vmatprep.subr.mxu0 0.0
  %2545 = vmatpush2.msra.mxu0 0.0
  %2546 = vmatprep.subr.mxu0 0.0
  %2547 = vmatpush2.msra.mxu0 0.0
  %2548 = vmatprep.subr.mxu0 0.0
  %2549 = vmatpush2.msra.mxu0 0.0
  %2550 = vmatprep.subr.mxu0 0.0
  %2551 = vmatpush2.msra.mxu0 0.0
  %2552 = vmatprep.subr.mxu0 0.0
  %2553 = vmatpush2.msra.mxu0 0.0
  %2554 = vmatprep.subr.mxu0 0.0
  %2555 = vmatpush2.msra.mxu0 0.0
  %2556 = vmatprep.subr.mxu0 0.0
  %2557 = vmatpush2.msra.mxu0 0.0
  %2558 = vmatprep.subr.mxu0 0.0
  %2559 = vmatpush2.msra.mxu0 0.0
  %2560 = vmatprep.subr.mxu0 0.0
  %2561 = vmatpush2.msra.mxu0 0.0
  %2562 = vmatprep.subr.mxu0 0.0
  %2563 = vmatpush2.msra.mxu0 0.0
  %2564 = vmatprep.subr.mxu0 0.0
  %2565 = vmatpush2.msra.mxu0 0.0
  %2566 = vmatprep.subr.mxu0 0.0
  %2567 = vmatpush2.msra.mxu0 0.0
  %2568 = vmatprep.subr.mxu0 0.0
  %2569 = vmatpush2.msra.mxu0 0.0
  %2570 = vmatprep.subr.mxu0 0.0
  %2571 = vmatpush2.msra.mxu0 0.0
  %2572 = vmatprep.subr.mxu0 0.0
  %2573 = vmatpush2.msra.mxu0 0.0
  %2574 = vmatprep.subr.mxu0 0.0
  %2575 = vmatpush2.msra.mxu0 0.0
  %2576 = vmatprep.mubr.f32.mxu0 0.0
  %2577 = vmatmul.mubr.f32.gmra.mxu0 %v2501
  %v2578 = vpop.f32.mrf.mxu0
  %v2579 = vadd.f32 0.0, %v2578
  %v2580 = vpop.f32.mrf.mxu0
  %v2581 = vadd.f32 0.0, %v2580
  %2582 = vmatprep.mubr.f32.mxu0 0.0
  %2583 = vmatmul.mubr.f32.gmra.mxu0 %v2504
  %v2584 = vpop.f32.mrf.mxu0
  %v2585 = vadd.f32 0.0, %v2584
  %v2586 = vpop.f32.mrf.mxu0
  %v2587 = vadd.f32 0.0, %v2586
  %2588 = vmatprep.mubr.f32.mxu0 0.0
  %2589 = vmatmul.mubr.f32.gmra.mxu0 %v2507
  %v2590 = vpop.f32.mrf.mxu0
  %v2591 = vadd.f32 0.0, %v2590
  %v2592 = vpop.f32.mrf.mxu0
  %v2593 = vadd.f32 0.0, %v2592
  %2594 = vmatprep.mubr.f32.mxu0 0.0
  %2595 = vmatmul.mubr.f32.gmra.mxu0 %v2510
  %v2596 = vpop.f32.mrf.mxu0
  %v2597 = vadd.f32 0.0, %v2596
  %v2598 = vpop.f32.mrf.mxu0
  %v2599 = vadd.f32 0.0, %v2598
  %2600 = vdwg.mxu0
  %v2601 = vsel %vm250, %v2579, %v2581
  %v2602 = vsel %vm251, %v2585, %v2587
  %v2603 = vsel %vm252, %v2591, %v2593
  %v2604 = vsel %vm253, %v2597, %v2599
  %s2605 = scalar_lea.vmem %s0, 288
  %v2606 = vld [vmem:[%s2605] sm:$0xff]
  %v2607 = vld [vmem:[%s2605 + $0x8] sm:$0xff]
  %v2608 = vld [vmem:[%s2605 + $0x10] sm:$0xff]
  %v2609 = vld [vmem:[%s2605 + $0x18] sm:$0xff]
  %v2610 = vadd.f32 %v2606, %v2601
  %v2611 = vadd.f32 %v2607, %v2602
  %v2612 = vadd.f32 %v2608, %v2603
  %v2613 = vadd.f32 %v2609, %v2604
  %v2614 = vxor.u32 %v2610, 2147483648
  %v2615 = vxor.u32 %v2611, 2147483648
  %v2616 = vxor.u32 %v2612, 2147483648
  %v2617 = vxor.u32 %v2613, 2147483648
  %v2618 = vmul.f32 %v2614, 1.442695
  %v2619 = vpow.pop %v2618
  %v2620 = vmul.f32 %v2615, 1.442695
  %v2621 = vpow.pop %v2620
  %v2622 = vmul.f32 %v2616, 1.442695
  %v2623 = vpow.pop %v2622
  %v2624 = vmul.f32 %v2617, 1.442695
  %v2625 = vpow.pop %v2624
  %v2626 = vadd.f32 %v2619, 1.0
  %v2627 = vadd.f32 %v2621, 1.0
  %v2628 = vadd.f32 %v2623, 1.0
  %v2629 = vadd.f32 %v2625, 1.0
  %v2630 = vrcp.pop %v2626
  %v2631 = vmul.f32 1.0, %v2630
  %v2632 = vrcp.pop %v2627
  %v2633 = vmul.f32 1.0, %v2632
  %v2634 = vrcp.pop %v2628
  %v2635 = vmul.f32 1.0, %v2634
  %v2636 = vrcp.pop %v2629
  %v2637 = vmul.f32 1.0, %v2636
  %v2638 = vtanh.pop %v2610
  %v2639 = vtanh.pop %v2611
  %v2640 = vtanh.pop %v2612
  %v2641 = vtanh.pop %v2613
  %v2642 = vmul.f32 %v2631, %v2428
  %v2643 = vmul.f32 %v2633, %v2429
  %v2644 = vmul.f32 %v2635, %v2430
  %v2645 = vmul.f32 %v2637, %v2431
  %2650 = vrot.lane.b32.xlu0 %v2638, 96
  %v2651 = vpop.permute.xlu0 %2650
  %2652 = vrot.lane.b32.xlu0 %v2639, 96
  %v2653 = vpop.permute.xlu0 %2652
  %2654 = vrot.lane.b32.xlu0 %v2640, 96
  %v2655 = vpop.permute.xlu0 %2654
  %2656 = vrot.lane.b32.xlu0 %v2641, 96
  %v2657 = vpop.permute.xlu0 %2656
  %v2662 = vmul.f32 %v2631, %v2651
  %v2663 = vmul.f32 %v2633, %v2653
  %v2664 = vmul.f32 %v2635, %v2655
  %v2665 = vmul.f32 %v2637, %v2657
  %2670 = vrot.lane.b32.xlu0 %v2662, 64
  %v2671 = vpop.permute.xlu0 %2670
  %2672 = vrot.lane.b32.xlu0 %v2663, 64
  %v2673 = vpop.permute.xlu0 %2672
  %2674 = vrot.lane.b32.xlu0 %v2664, 64
  %v2675 = vpop.permute.xlu0 %2674
  %2676 = vrot.lane.b32.xlu0 %v2665, 64
  %v2677 = vpop.permute.xlu0 %2676
  %v2682 = vadd.f32 %v2642, %v2671
  %v2683 = vadd.f32 %v2643, %v2673
  %v2684 = vadd.f32 %v2644, %v2675
  %v2685 = vadd.f32 %v2645, %v2677
  %v2686 = vtanh.pop %v2428
  %v2687 = vtanh.pop %v2429
  %v2688 = vtanh.pop %v2430
  %v2689 = vtanh.pop %v2431
  %2694 = vrot.lane.b32.xlu0 %v2631, 96
  %v2695 = vpop.permute.xlu0 %2694
  %2696 = vrot.lane.b32.xlu0 %v2633, 96
  %v2697 = vpop.permute.xlu0 %2696
  %2698 = vrot.lane.b32.xlu0 %v2635, 96
  %v2699 = vpop.permute.xlu0 %2698
  %2700 = vrot.lane.b32.xlu0 %v2637, 96
  %v2701 = vpop.permute.xlu0 %2700
  %v2706 = vmul.f32 %v2686, %v2695
  %v2707 = vmul.f32 %v2687, %v2697
  %v2708 = vmul.f32 %v2688, %v2699
  %v2709 = vmul.f32 %v2689, %v2701
  %2714 = vrot.lane.b32.xlu0 %v2706, 64
  %v2715 = vpop.permute.xlu0 %2714
  %2716 = vrot.lane.b32.xlu0 %v2707, 64
  %v2717 = vpop.permute.xlu0 %2716
  %2718 = vrot.lane.b32.xlu0 %v2708, 64
  %v2719 = vpop.permute.xlu0 %2718
  %2720 = vrot.lane.b32.xlu0 %v2709, 64
  %v2721 = vpop.permute.xlu0 %2720
  %v2726 = vrot.slane %v2715, 7
  %v2727 = vrot.slane %v2717, 7
  %v2728 = vrot.slane %v2719, 7
  %v2729 = vrot.slane %v2721, 7
  %v2730 = vsel %vm106, %v2728, %v2729
  %v2731 = vsel %vm106, %v2727, %v2728
  %v2732 = vsel %vm106, %v2726, %v2727
  %v2733 = vsel %vm106, %v2729, %v2726
  %v2734 = vsel %vm115, %v2733, 0.0
  %v2735 = vsel %vm116, %v2732, 0.0
  %v2736 = vsel %vm117, %v2731, 0.0
  %v2737 = vsel %vm118, %v2730, 0.0
  %2738 = vrot.lane.b32.xlu0 %v2706, 96
  %v2739 = vpop.permute.xlu0 %2738
  %2740 = vrot.lane.b32.xlu0 %v2707, 96
  %v2741 = vpop.permute.xlu0 %2740
  %2742 = vrot.lane.b32.xlu0 %v2708, 96
  %v2743 = vpop.permute.xlu0 %2742
  %2744 = vrot.lane.b32.xlu0 %v2709, 96
  %v2745 = vpop.permute.xlu0 %2744
  %v2750 = vsel %vm139, %v2734, %v2739
  %v2751 = vsel %vm139, %v2735, %v2741
  %v2752 = vsel %vm139, %v2736, %v2743
  %v2753 = vsel %vm139, %v2737, %v2745
  %v2755 = vsel %vm144, %v2750, 0
  %v2758 = vsel %vm144, %v2751, 0
  %v2761 = vsel %vm144, %v2752, 0
  %v2764 = vsel %vm144, %v2753, 0
  %2766 = vmatprep.subr.mxu0 0.0
  %2767 = vmatpush1.msra.mxu0 0.0
  %2768 = vmatprep.subr.mxu0 0.0
  %2769 = vmatpush1.msra.mxu0 0.0
  %2770 = vmatprep.subr.mxu0 0.0
  %2771 = vmatpush1.msra.mxu0 0.0
  %2772 = vmatprep.subr.mxu0 0.0
  %2773 = vmatpush1.msra.mxu0 0.0
  %2774 = vmatprep.subr.mxu0 0.0
  %2775 = vmatpush1.msra.mxu0 0.0
  %2776 = vmatprep.subr.mxu0 0.0
  %2777 = vmatpush1.msra.mxu0 0.0
  %2778 = vmatprep.subr.mxu0 0.0
  %2779 = vmatpush1.msra.mxu0 0.0
  %2780 = vmatprep.subr.mxu0 0.0
  %2781 = vmatpush1.msra.mxu0 0.0
  %2782 = vmatprep.subr.mxu0 %v93
  %2783 = vmatpush1.msra.mxu0 %v92
  %2784 = vmatprep.subr.mxu0 %v91
  %2785 = vmatpush1.msra.mxu0 %v90
  %2786 = vmatprep.subr.mxu0 %v89
  %2787 = vmatpush1.msra.mxu0 %v88
  %2788 = vmatprep.subr.mxu0 %v87
  %2789 = vmatpush1.msra.mxu0 %v86
  %2790 = vmatprep.subr.mxu0 %v85
  %2791 = vmatpush1.msra.mxu0 %v84
  %2792 = vmatprep.subr.mxu0 %v83
  %2793 = vmatpush1.msra.mxu0 %v82
  %2794 = vmatprep.subr.mxu0 %v81
  %2795 = vmatpush1.msra.mxu0 %v80
  %2796 = vmatprep.subr.mxu0 %v79
  %2797 = vmatpush1.msra.mxu0 %v78
  %2798 = vmatprep.subr.mxu0 0.0
  %2799 = vmatpush2.msra.mxu0 0.0
  %2800 = vmatprep.subr.mxu0 0.0
  %2801 = vmatpush2.msra.mxu0 0.0
  %2802 = vmatprep.subr.mxu0 0.0
  %2803 = vmatpush2.msra.mxu0 0.0
  %2804 = vmatprep.subr.mxu0 0.0
  %2805 = vmatpush2.msra.mxu0 0.0
  %2806 = vmatprep.subr.mxu0 0.0
  %2807 = vmatpush2.msra.mxu0 0.0
  %2808 = vmatprep.subr.mxu0 0.0
  %2809 = vmatpush2.msra.mxu0 0.0
  %2810 = vmatprep.subr.mxu0 0.0
  %2811 = vmatpush2.msra.mxu0 0.0
  %2812 = vmatprep.subr.mxu0 0.0
  %2813 = vmatpush2.msra.mxu0 0.0
  %2814 = vmatprep.subr.mxu0 0.0
  %2815 = vmatpush2.msra.mxu0 0.0
  %2816 = vmatprep.subr.mxu0 0.0
  %2817 = vmatpush2.msra.mxu0 0.0
  %2818 = vmatprep.subr.mxu0 0.0
  %2819 = vmatpush2.msra.mxu0 0.0
  %2820 = vmatprep.subr.mxu0 0.0
  %2821 = vmatpush2.msra.mxu0 0.0
  %2822 = vmatprep.subr.mxu0 0.0
  %2823 = vmatpush2.msra.mxu0 0.0
  %2824 = vmatprep.subr.mxu0 0.0
  %2825 = vmatpush2.msra.mxu0 0.0
  %2826 = vmatprep.subr.mxu0 0.0
  %2827 = vmatpush2.msra.mxu0 0.0
  %2828 = vmatprep.subr.mxu0 0.0
  %2829 = vmatpush2.msra.mxu0 0.0
  %2830 = vmatprep.mubr.f32.mxu0 0.0
  %2831 = vmatmul.mubr.f32.gmra.mxu0 %v2755
  %v2832 = vpop.f32.mrf.mxu0
  %v2833 = vadd.f32 0.0, %v2832
  %v2834 = vpop.f32.mrf.mxu0
  %v2835 = vadd.f32 0.0, %v2834
  %2836 = vmatprep.mubr.f32.mxu0 0.0
  %2837 = vmatmul.mubr.f32.gmra.mxu0 %v2758
  %v2838 = vpop.f32.mrf.mxu0
  %v2839 = vadd.f32 0.0, %v2838
  %v2840 = vpop.f32.mrf.mxu0
  %v2841 = vadd.f32 0.0, %v2840
  %2842 = vmatprep.mubr.f32.mxu0 0.0
  %2843 = vmatmul.mubr.f32.gmra.mxu0 %v2761
  %v2844 = vpop.f32.mrf.mxu0
  %v2845 = vadd.f32 0.0, %v2844
  %v2846 = vpop.f32.mrf.mxu0
  %v2847 = vadd.f32 0.0, %v2846
  %2848 = vmatprep.mubr.f32.mxu0 0.0
  %2849 = vmatmul.mubr.f32.gmra.mxu0 %v2764
  %v2850 = vpop.f32.mrf.mxu0
  %v2851 = vadd.f32 0.0, %v2850
  %v2852 = vpop.f32.mrf.mxu0
  %v2853 = vadd.f32 0.0, %v2852
  %2854 = vdwg.mxu0
  %v2855 = vsel %vm250, %v2833, %v2835
  %v2856 = vsel %vm251, %v2839, %v2841
  %v2857 = vsel %vm252, %v2845, %v2847
  %v2858 = vsel %vm253, %v2851, %v2853
  %s2859 = scalar_lea.vmem %s0, 320
  %v2860 = vld [vmem:[%s2859] sm:$0xff]
  %v2861 = vld [vmem:[%s2859 + $0x8] sm:$0xff]
  %v2862 = vld [vmem:[%s2859 + $0x10] sm:$0xff]
  %v2863 = vld [vmem:[%s2859 + $0x18] sm:$0xff]
  %v2864 = vadd.f32 %v2860, %v2855
  %v2865 = vadd.f32 %v2861, %v2856
  %v2866 = vadd.f32 %v2862, %v2857
  %v2867 = vadd.f32 %v2863, %v2858
  %v2868 = vxor.u32 %v2864, 2147483648
  %v2869 = vxor.u32 %v2865, 2147483648
  %v2870 = vxor.u32 %v2866, 2147483648
  %v2871 = vxor.u32 %v2867, 2147483648
  %v2872 = vmul.f32 %v2868, 1.442695
  %v2873 = vpow.pop %v2872
  %v2874 = vmul.f32 %v2869, 1.442695
  %v2875 = vpow.pop %v2874
  %v2876 = vmul.f32 %v2870, 1.442695
  %v2877 = vpow.pop %v2876
  %v2878 = vmul.f32 %v2871, 1.442695
  %v2879 = vpow.pop %v2878
  %v2880 = vadd.f32 %v2873, 1.0
  %v2881 = vadd.f32 %v2875, 1.0
  %v2882 = vadd.f32 %v2877, 1.0
  %v2883 = vadd.f32 %v2879, 1.0
  %v2884 = vrcp.pop %v2880
  %v2885 = vmul.f32 1.0, %v2884
  %v2886 = vrcp.pop %v2881
  %v2887 = vmul.f32 1.0, %v2886
  %v2888 = vrcp.pop %v2882
  %v2889 = vmul.f32 1.0, %v2888
  %v2890 = vrcp.pop %v2883
  %v2891 = vmul.f32 1.0, %v2890
  %v2892 = vtanh.pop %v2864
  %v2893 = vtanh.pop %v2865
  %v2894 = vtanh.pop %v2866
  %v2895 = vtanh.pop %v2867
  %v2896 = vmul.f32 %v2885, %v2682
  %v2897 = vmul.f32 %v2887, %v2683
  %v2898 = vmul.f32 %v2889, %v2684
  %v2899 = vmul.f32 %v2891, %v2685
  %2904 = vrot.lane.b32.xlu0 %v2892, 96
  %v2905 = vpop.permute.xlu0 %2904
  %2906 = vrot.lane.b32.xlu0 %v2893, 96
  %v2907 = vpop.permute.xlu0 %2906
  %2908 = vrot.lane.b32.xlu0 %v2894, 96
  %v2909 = vpop.permute.xlu0 %2908
  %2910 = vrot.lane.b32.xlu0 %v2895, 96
  %v2911 = vpop.permute.xlu0 %2910
  %v2916 = vmul.f32 %v2885, %v2905
  %v2917 = vmul.f32 %v2887, %v2907
  %v2918 = vmul.f32 %v2889, %v2909
  %v2919 = vmul.f32 %v2891, %v2911
  %2924 = vrot.lane.b32.xlu0 %v2916, 64
  %v2925 = vpop.permute.xlu0 %2924
  %2926 = vrot.lane.b32.xlu0 %v2917, 64
  %v2927 = vpop.permute.xlu0 %2926
  %2928 = vrot.lane.b32.xlu0 %v2918, 64
  %v2929 = vpop.permute.xlu0 %2928
  %2930 = vrot.lane.b32.xlu0 %v2919, 64
  %v2931 = vpop.permute.xlu0 %2930
  %v2936 = vadd.f32 %v2896, %v2925
  %v2937 = vadd.f32 %v2897, %v2927
  %v2938 = vadd.f32 %v2898, %v2929
  %v2939 = vadd.f32 %v2899, %v2931
  %v2940 = vtanh.pop %v2682
  %v2941 = vtanh.pop %v2683
  %v2942 = vtanh.pop %v2684
  %v2943 = vtanh.pop %v2685
  %2948 = vrot.lane.b32.xlu0 %v2885, 96
  %v2949 = vpop.permute.xlu0 %2948
  %2950 = vrot.lane.b32.xlu0 %v2887, 96
  %v2951 = vpop.permute.xlu0 %2950
  %2952 = vrot.lane.b32.xlu0 %v2889, 96
  %v2953 = vpop.permute.xlu0 %2952
  %2954 = vrot.lane.b32.xlu0 %v2891, 96
  %v2955 = vpop.permute.xlu0 %2954
  %v2960 = vmul.f32 %v2940, %v2949
  %v2961 = vmul.f32 %v2941, %v2951
  %v2962 = vmul.f32 %v2942, %v2953
  %v2963 = vmul.f32 %v2943, %v2955
  %2968 = vrot.lane.b32.xlu0 %v2960, 64
  %v2969 = vpop.permute.xlu0 %2968
  %2970 = vrot.lane.b32.xlu0 %v2961, 64
  %v2971 = vpop.permute.xlu0 %2970
  %2972 = vrot.lane.b32.xlu0 %v2962, 64
  %v2973 = vpop.permute.xlu0 %2972
  %2974 = vrot.lane.b32.xlu0 %v2963, 64
  %v2975 = vpop.permute.xlu0 %2974
  %v2980 = vrot.slane %v2969, 7
  %v2981 = vrot.slane %v2971, 7
  %v2982 = vrot.slane %v2973, 7
  %v2983 = vrot.slane %v2975, 7
  %v2984 = vsel %vm106, %v2982, %v2983
  %v2985 = vsel %vm106, %v2981, %v2982
  %v2986 = vsel %vm106, %v2980, %v2981
  %v2987 = vsel %vm106, %v2983, %v2980
  %v2988 = vsel %vm115, %v2987, 0.0
  %v2989 = vsel %vm116, %v2986, 0.0
  %v2990 = vsel %vm117, %v2985, 0.0
  %v2991 = vsel %vm118, %v2984, 0.0
  %2992 = vrot.lane.b32.xlu0 %v2960, 96
  %v2993 = vpop.permute.xlu0 %2992
  %2994 = vrot.lane.b32.xlu0 %v2961, 96
  %v2995 = vpop.permute.xlu0 %2994
  %2996 = vrot.lane.b32.xlu0 %v2962, 96
  %v2997 = vpop.permute.xlu0 %2996
  %2998 = vrot.lane.b32.xlu0 %v2963, 96
  %v2999 = vpop.permute.xlu0 %2998
  %v3004 = vsel %vm139, %v2988, %v2993
  %v3005 = vsel %vm139, %v2989, %v2995
  %v3006 = vsel %vm139, %v2990, %v2997
  %v3007 = vsel %vm139, %v2991, %v2999
  %v3009 = vsel %vm144, %v3004, 0
  %v3012 = vsel %vm144, %v3005, 0
  %v3015 = vsel %vm144, %v3006, 0
  %v3018 = vsel %vm144, %v3007, 0
  %3020 = vmatprep.subr.mxu0 0.0
  %3021 = vmatpush1.msra.mxu0 0.0
  %3022 = vmatprep.subr.mxu0 0.0
  %3023 = vmatpush1.msra.mxu0 0.0
  %3024 = vmatprep.subr.mxu0 0.0
  %3025 = vmatpush1.msra.mxu0 0.0
  %3026 = vmatprep.subr.mxu0 0.0
  %3027 = vmatpush1.msra.mxu0 0.0
  %3028 = vmatprep.subr.mxu0 0.0
  %3029 = vmatpush1.msra.mxu0 0.0
  %3030 = vmatprep.subr.mxu0 0.0
  %3031 = vmatpush1.msra.mxu0 0.0
  %3032 = vmatprep.subr.mxu0 0.0
  %3033 = vmatpush1.msra.mxu0 0.0
  %3034 = vmatprep.subr.mxu0 0.0
  %3035 = vmatpush1.msra.mxu0 0.0
  %3036 = vmatprep.subr.mxu0 %v93
  %3037 = vmatpush1.msra.mxu0 %v92
  %3038 = vmatprep.subr.mxu0 %v91
  %3039 = vmatpush1.msra.mxu0 %v90
  %3040 = vmatprep.subr.mxu0 %v89
  %3041 = vmatpush1.msra.mxu0 %v88
  %3042 = vmatprep.subr.mxu0 %v87
  %3043 = vmatpush1.msra.mxu0 %v86
  %3044 = vmatprep.subr.mxu0 %v85
  %3045 = vmatpush1.msra.mxu0 %v84
  %3046 = vmatprep.subr.mxu0 %v83
  %3047 = vmatpush1.msra.mxu0 %v82
  %3048 = vmatprep.subr.mxu0 %v81
  %3049 = vmatpush1.msra.mxu0 %v80
  %3050 = vmatprep.subr.mxu0 %v79
  %3051 = vmatpush1.msra.mxu0 %v78
  %3052 = vmatprep.subr.mxu0 0.0
  %3053 = vmatpush2.msra.mxu0 0.0
  %3054 = vmatprep.subr.mxu0 0.0
  %3055 = vmatpush2.msra.mxu0 0.0
  %3056 = vmatprep.subr.mxu0 0.0
  %3057 = vmatpush2.msra.mxu0 0.0
  %3058 = vmatprep.subr.mxu0 0.0
  %3059 = vmatpush2.msra.mxu0 0.0
  %3060 = vmatprep.subr.mxu0 0.0
  %3061 = vmatpush2.msra.mxu0 0.0
  %3062 = vmatprep.subr.mxu0 0.0
  %3063 = vmatpush2.msra.mxu0 0.0
  %3064 = vmatprep.subr.mxu0 0.0
  %3065 = vmatpush2.msra.mxu0 0.0
  %3066 = vmatprep.subr.mxu0 0.0
  %3067 = vmatpush2.msra.mxu0 0.0
  %3068 = vmatprep.subr.mxu0 0.0
  %3069 = vmatpush2.msra.mxu0 0.0
  %3070 = vmatprep.subr.mxu0 0.0
  %3071 = vmatpush2.msra.mxu0 0.0
  %3072 = vmatprep.subr.mxu0 0.0
  %3073 = vmatpush2.msra.mxu0 0.0
  %3074 = vmatprep.subr.mxu0 0.0
  %3075 = vmatpush2.msra.mxu0 0.0
  %3076 = vmatprep.subr.mxu0 0.0
  %3077 = vmatpush2.msra.mxu0 0.0
  %3078 = vmatprep.subr.mxu0 0.0
  %3079 = vmatpush2.msra.mxu0 0.0
  %3080 = vmatprep.subr.mxu0 0.0
  %3081 = vmatpush2.msra.mxu0 0.0
  %3082 = vmatprep.subr.mxu0 0.0
  %3083 = vmatpush2.msra.mxu0 0.0
  %3084 = vmatprep.mubr.f32.mxu0 0.0
  %3085 = vmatmul.mubr.f32.gmra.mxu0 %v3009
  %v3086 = vpop.f32.mrf.mxu0
  %v3087 = vadd.f32 0.0, %v3086
  %v3088 = vpop.f32.mrf.mxu0
  %v3089 = vadd.f32 0.0, %v3088
  %3090 = vmatprep.mubr.f32.mxu0 0.0
  %3091 = vmatmul.mubr.f32.gmra.mxu0 %v3012
  %v3092 = vpop.f32.mrf.mxu0
  %v3093 = vadd.f32 0.0, %v3092
  %v3094 = vpop.f32.mrf.mxu0
  %v3095 = vadd.f32 0.0, %v3094
  %3096 = vmatprep.mubr.f32.mxu0 0.0
  %3097 = vmatmul.mubr.f32.gmra.mxu0 %v3015
  %v3098 = vpop.f32.mrf.mxu0
  %v3099 = vadd.f32 0.0, %v3098
  %v3100 = vpop.f32.mrf.mxu0
  %v3101 = vadd.f32 0.0, %v3100
  %3102 = vmatprep.mubr.f32.mxu0 0.0
  %3103 = vmatmul.mubr.f32.gmra.mxu0 %v3018
  %v3104 = vpop.f32.mrf.mxu0
  %v3105 = vadd.f32 0.0, %v3104
  %v3106 = vpop.f32.mrf.mxu0
  %v3107 = vadd.f32 0.0, %v3106
  %3108 = vdwg.mxu0
  %v3109 = vsel %vm250, %v3087, %v3089
  %v3110 = vsel %vm251, %v3093, %v3095
  %v3111 = vsel %vm252, %v3099, %v3101
  %v3112 = vsel %vm253, %v3105, %v3107
  %s3113 = scalar_lea.vmem %s0, 352
  %v3114 = vld [vmem:[%s3113] sm:$0xff]
  %v3115 = vld [vmem:[%s3113 + $0x8] sm:$0xff]
  %v3116 = vld [vmem:[%s3113 + $0x10] sm:$0xff]
  %v3117 = vld [vmem:[%s3113 + $0x18] sm:$0xff]
  %v3118 = vadd.f32 %v3114, %v3109
  %v3119 = vadd.f32 %v3115, %v3110
  %v3120 = vadd.f32 %v3116, %v3111
  %v3121 = vadd.f32 %v3117, %v3112
  %v3122 = vxor.u32 %v3118, 2147483648
  %v3123 = vxor.u32 %v3119, 2147483648
  %v3124 = vxor.u32 %v3120, 2147483648
  %v3125 = vxor.u32 %v3121, 2147483648
  %v3126 = vmul.f32 %v3122, 1.442695
  %v3127 = vpow.pop %v3126
  %v3128 = vmul.f32 %v3123, 1.442695
  %v3129 = vpow.pop %v3128
  %v3130 = vmul.f32 %v3124, 1.442695
  %v3131 = vpow.pop %v3130
  %v3132 = vmul.f32 %v3125, 1.442695
  %v3133 = vpow.pop %v3132
  %v3134 = vadd.f32 %v3127, 1.0
  %v3135 = vadd.f32 %v3129, 1.0
  %v3136 = vadd.f32 %v3131, 1.0
  %v3137 = vadd.f32 %v3133, 1.0
  %v3138 = vrcp.pop %v3134
  %v3139 = vmul.f32 1.0, %v3138
  %v3140 = vrcp.pop %v3135
  %v3141 = vmul.f32 1.0, %v3140
  %v3142 = vrcp.pop %v3136
  %v3143 = vmul.f32 1.0, %v3142
  %v3144 = vrcp.pop %v3137
  %v3145 = vmul.f32 1.0, %v3144
  %v3146 = vtanh.pop %v3118
  %v3147 = vtanh.pop %v3119
  %v3148 = vtanh.pop %v3120
  %v3149 = vtanh.pop %v3121
  %v3150 = vmul.f32 %v3139, %v2936
  %v3151 = vmul.f32 %v3141, %v2937
  %v3152 = vmul.f32 %v3143, %v2938
  %v3153 = vmul.f32 %v3145, %v2939
  %3158 = vrot.lane.b32.xlu0 %v3146, 96
  %v3159 = vpop.permute.xlu0 %3158
  %3160 = vrot.lane.b32.xlu0 %v3147, 96
  %v3161 = vpop.permute.xlu0 %3160
  %3162 = vrot.lane.b32.xlu0 %v3148, 96
  %v3163 = vpop.permute.xlu0 %3162
  %3164 = vrot.lane.b32.xlu0 %v3149, 96
  %v3165 = vpop.permute.xlu0 %3164
  %v3170 = vmul.f32 %v3139, %v3159
  %v3171 = vmul.f32 %v3141, %v3161
  %v3172 = vmul.f32 %v3143, %v3163
  %v3173 = vmul.f32 %v3145, %v3165
  %3178 = vrot.lane.b32.xlu0 %v3170, 64
  %v3179 = vpop.permute.xlu0 %3178
  %3180 = vrot.lane.b32.xlu0 %v3171, 64
  %v3181 = vpop.permute.xlu0 %3180
  %3182 = vrot.lane.b32.xlu0 %v3172, 64
  %v3183 = vpop.permute.xlu0 %3182
  %3184 = vrot.lane.b32.xlu0 %v3173, 64
  %v3185 = vpop.permute.xlu0 %3184
  %v3190 = vadd.f32 %v3150, %v3179
  %v3191 = vadd.f32 %v3151, %v3181
  %v3192 = vadd.f32 %v3152, %v3183
  %v3193 = vadd.f32 %v3153, %v3185
  %v3194 = vtanh.pop %v2936
  %v3195 = vtanh.pop %v2937
  %v3196 = vtanh.pop %v2938
  %v3197 = vtanh.pop %v2939
  %3202 = vrot.lane.b32.xlu0 %v3139, 96
  %v3203 = vpop.permute.xlu0 %3202
  %3204 = vrot.lane.b32.xlu0 %v3141, 96
  %v3205 = vpop.permute.xlu0 %3204
  %3206 = vrot.lane.b32.xlu0 %v3143, 96
  %v3207 = vpop.permute.xlu0 %3206
  %3208 = vrot.lane.b32.xlu0 %v3145, 96
  %v3209 = vpop.permute.xlu0 %3208
  %v3214 = vmul.f32 %v3194, %v3203
  %v3215 = vmul.f32 %v3195, %v3205
  %v3216 = vmul.f32 %v3196, %v3207
  %v3217 = vmul.f32 %v3197, %v3209
  %3222 = vrot.lane.b32.xlu0 %v3214, 32
  %v3223 = vpop.permute.xlu0 %3222
  %3224 = vrot.lane.b32.xlu0 %v3215, 32
  %v3225 = vpop.permute.xlu0 %3224
  %3226 = vrot.lane.b32.xlu0 %v3216, 32
  %v3227 = vpop.permute.xlu0 %3226
  %3228 = vrot.lane.b32.xlu0 %v3217, 32
  %v3229 = vpop.permute.xlu0 %3228
  %v3234 = vsel %vm139, %v2461, %v2739
  %v3235 = vsel %vm139, %v2463, %v2741
  %v3236 = vsel %vm139, %v2465, %v2743
  %v3237 = vsel %vm139, %v2467, %v2745
  %v3238 = vsel %vm144, %v3234, %v2960
  %v3239 = vsel %vm144, %v3235, %v2961
  %v3240 = vsel %vm144, %v3236, %v2962
  %v3241 = vsel %vm144, %v3237, %v2963
  %v3242 = vsel %vm1152, %v3238, %v3223
  %v3243 = vsel %vm1152, %v3239, %v3225
  %v3244 = vsel %vm1152, %v3240, %v3227
  %v3245 = vsel %vm1152, %v3241, %v3229
  %s3246 = scalar_lea.vmem %s4, 64
  %3247 = vst [vmem:[%s3246] sm:$0xff] %v3242
  %3248 = vst [vmem:[%s3246 + $0x8] sm:$0xff] %v3243
  %3249 = vst [vmem:[%s3246 + $0x10] sm:$0xff] %v3244
  %3250 = vst [vmem:[%s3246 + $0x18] sm:$0xff] %v3245
  %3251 = vrot.lane.b32.xlu0 %v3214, 64
  %v3252 = vpop.permute.xlu0 %3251
  %3253 = vrot.lane.b32.xlu0 %v3215, 64
  %v3254 = vpop.permute.xlu0 %3253
  %3255 = vrot.lane.b32.xlu0 %v3216, 64
  %v3256 = vpop.permute.xlu0 %3255
  %3257 = vrot.lane.b32.xlu0 %v3217, 64
  %v3258 = vpop.permute.xlu0 %3257
  %v3263 = vrot.slane %v3252, 7
  %v3264 = vrot.slane %v3254, 7
  %v3265 = vrot.slane %v3256, 7
  %v3266 = vrot.slane %v3258, 7
  %v3267 = vsel %vm106, %v3265, %v3266
  %v3268 = vsel %vm106, %v3264, %v3265
  %v3269 = vsel %vm106, %v3263, %v3264
  %v3270 = vsel %vm106, %v3266, %v3263
  %v3271 = vsel %vm115, %v3270, 0.0
  %v3272 = vsel %vm116, %v3269, 0.0
  %v3273 = vsel %vm117, %v3268, 0.0
  %v3274 = vsel %vm118, %v3267, 0.0
  %3275 = vrot.lane.b32.xlu0 %v3214, 96
  %v3276 = vpop.permute.xlu0 %3275
  %3277 = vrot.lane.b32.xlu0 %v3215, 96
  %v3278 = vpop.permute.xlu0 %3277
  %3279 = vrot.lane.b32.xlu0 %v3216, 96
  %v3280 = vpop.permute.xlu0 %3279
  %3281 = vrot.lane.b32.xlu0 %v3217, 96
  %v3282 = vpop.permute.xlu0 %3281
  %v3287 = vsel %vm139, %v3271, %v3276
  %v3288 = vsel %vm139, %v3272, %v3278
  %v3289 = vsel %vm139, %v3273, %v3280
  %v3290 = vsel %vm139, %v3274, %v3282
  %v3292 = vsel %vm144, %v3287, 0
  %v3295 = vsel %vm144, %v3288, 0
  %v3298 = vsel %vm144, %v3289, 0
  %v3301 = vsel %vm144, %v3290, 0
  %3303 = vmatprep.subr.mxu0 0.0
  %3304 = vmatpush1.msra.mxu0 0.0
  %3305 = vmatprep.subr.mxu0 0.0
  %3306 = vmatpush1.msra.mxu0 0.0
  %3307 = vmatprep.subr.mxu0 0.0
  %3308 = vmatpush1.msra.mxu0 0.0
  %3309 = vmatprep.subr.mxu0 0.0
  %3310 = vmatpush1.msra.mxu0 0.0
  %3311 = vmatprep.subr.mxu0 0.0
  %3312 = vmatpush1.msra.mxu0 0.0
  %3313 = vmatprep.subr.mxu0 0.0
  %3314 = vmatpush1.msra.mxu0 0.0
  %3315 = vmatprep.subr.mxu0 0.0
  %3316 = vmatpush1.msra.mxu0 0.0
  %3317 = vmatprep.subr.mxu0 0.0
  %3318 = vmatpush1.msra.mxu0 0.0
  %3319 = vmatprep.subr.mxu0 %v93
  %3320 = vmatpush1.msra.mxu0 %v92
  %3321 = vmatprep.subr.mxu0 %v91
  %3322 = vmatpush1.msra.mxu0 %v90
  %3323 = vmatprep.subr.mxu0 %v89
  %3324 = vmatpush1.msra.mxu0 %v88
  %3325 = vmatprep.subr.mxu0 %v87
  %3326 = vmatpush1.msra.mxu0 %v86
  %3327 = vmatprep.subr.mxu0 %v85
  %3328 = vmatpush1.msra.mxu0 %v84
  %3329 = vmatprep.subr.mxu0 %v83
  %3330 = vmatpush1.msra.mxu0 %v82
  %3331 = vmatprep.subr.mxu0 %v81
  %3332 = vmatpush1.msra.mxu0 %v80
  %3333 = vmatprep.subr.mxu0 %v79
  %3334 = vmatpush1.msra.mxu0 %v78
  %3335 = vmatprep.subr.mxu0 0.0
  %3336 = vmatpush2.msra.mxu0 0.0
  %3337 = vmatprep.subr.mxu0 0.0
  %3338 = vmatpush2.msra.mxu0 0.0
  %3339 = vmatprep.subr.mxu0 0.0
  %3340 = vmatpush2.msra.mxu0 0.0
  %3341 = vmatprep.subr.mxu0 0.0
  %3342 = vmatpush2.msra.mxu0 0.0
  %3343 = vmatprep.subr.mxu0 0.0
  %3344 = vmatpush2.msra.mxu0 0.0
  %3345 = vmatprep.subr.mxu0 0.0
  %3346 = vmatpush2.msra.mxu0 0.0
  %3347 = vmatprep.subr.mxu0 0.0
  %3348 = vmatpush2.msra.mxu0 0.0
  %3349 = vmatprep.subr.mxu0 0.0
  %3350 = vmatpush2.msra.mxu0 0.0
  %3351 = vmatprep.subr.mxu0 0.0
  %3352 = vmatpush2.msra.mxu0 0.0
  %3353 = vmatprep.subr.mxu0 0.0
  %3354 = vmatpush2.msra.mxu0 0.0
  %3355 = vmatprep.subr.mxu0 0.0
  %3356 = vmatpush2.msra.mxu0 0.0
  %3357 = vmatprep.subr.mxu0 0.0
  %3358 = vmatpush2.msra.mxu0 0.0
  %3359 = vmatprep.subr.mxu0 0.0
  %3360 = vmatpush2.msra.mxu0 0.0
  %3361 = vmatprep.subr.mxu0 0.0
  %3362 = vmatpush2.msra.mxu0 0.0
  %3363 = vmatprep.subr.mxu0 0.0
  %3364 = vmatpush2.msra.mxu0 0.0
  %3365 = vmatprep.subr.mxu0 0.0
  %3366 = vmatpush2.msra.mxu0 0.0
  %3367 = vmatprep.mubr.f32.mxu0 0.0
  %3368 = vmatmul.mubr.f32.gmra.mxu0 %v3292
  %v3369 = vpop.f32.mrf.mxu0
  %v3370 = vadd.f32 0.0, %v3369
  %v3371 = vpop.f32.mrf.mxu0
  %v3372 = vadd.f32 0.0, %v3371
  %3373 = vmatprep.mubr.f32.mxu0 0.0
  %3374 = vmatmul.mubr.f32.gmra.mxu0 %v3295
  %v3375 = vpop.f32.mrf.mxu0
  %v3376 = vadd.f32 0.0, %v3375
  %v3377 = vpop.f32.mrf.mxu0
  %v3378 = vadd.f32 0.0, %v3377
  %3379 = vmatprep.mubr.f32.mxu0 0.0
  %3380 = vmatmul.mubr.f32.gmra.mxu0 %v3298
  %v3381 = vpop.f32.mrf.mxu0
  %v3382 = vadd.f32 0.0, %v3381
  %v3383 = vpop.f32.mrf.mxu0
  %v3384 = vadd.f32 0.0, %v3383
  %3385 = vmatprep.mubr.f32.mxu0 0.0
  %3386 = vmatmul.mubr.f32.gmra.mxu0 %v3301
  %v3387 = vpop.f32.mrf.mxu0
  %v3388 = vadd.f32 0.0, %v3387
  %v3389 = vpop.f32.mrf.mxu0
  %v3390 = vadd.f32 0.0, %v3389
  %3391 = vdwg.mxu0
  %v3392 = vsel %vm250, %v3370, %v3372
  %v3393 = vsel %vm251, %v3376, %v3378
  %v3394 = vsel %vm252, %v3382, %v3384
  %v3395 = vsel %vm253, %v3388, %v3390
  %s3396 = scalar_lea.vmem %s0, 384
  %v3397 = vld [vmem:[%s3396] sm:$0xff]
  %v3398 = vld [vmem:[%s3396 + $0x8] sm:$0xff]
  %v3399 = vld [vmem:[%s3396 + $0x10] sm:$0xff]
  %v3400 = vld [vmem:[%s3396 + $0x18] sm:$0xff]
  %v3401 = vadd.f32 %v3397, %v3392
  %v3402 = vadd.f32 %v3398, %v3393
  %v3403 = vadd.f32 %v3399, %v3394
  %v3404 = vadd.f32 %v3400, %v3395
  %v3405 = vxor.u32 %v3401, 2147483648
  %v3406 = vxor.u32 %v3402, 2147483648
  %v3407 = vxor.u32 %v3403, 2147483648
  %v3408 = vxor.u32 %v3404, 2147483648
  %v3409 = vmul.f32 %v3405, 1.442695
  %v3410 = vpow.pop %v3409
  %v3411 = vmul.f32 %v3406, 1.442695
  %v3412 = vpow.pop %v3411
  %v3413 = vmul.f32 %v3407, 1.442695
  %v3414 = vpow.pop %v3413
  %v3415 = vmul.f32 %v3408, 1.442695
  %v3416 = vpow.pop %v3415
  %v3417 = vadd.f32 %v3410, 1.0
  %v3418 = vadd.f32 %v3412, 1.0
  %v3419 = vadd.f32 %v3414, 1.0
  %v3420 = vadd.f32 %v3416, 1.0
  %v3421 = vrcp.pop %v3417
  %v3422 = vmul.f32 1.0, %v3421
  %v3423 = vrcp.pop %v3418
  %v3424 = vmul.f32 1.0, %v3423
  %v3425 = vrcp.pop %v3419
  %v3426 = vmul.f32 1.0, %v3425
  %v3427 = vrcp.pop %v3420
  %v3428 = vmul.f32 1.0, %v3427
  %v3429 = vtanh.pop %v3401
  %v3430 = vtanh.pop %v3402
  %v3431 = vtanh.pop %v3403
  %v3432 = vtanh.pop %v3404
  %v3433 = vmul.f32 %v3422, %v3190
  %v3434 = vmul.f32 %v3424, %v3191
  %v3435 = vmul.f32 %v3426, %v3192
  %v3436 = vmul.f32 %v3428, %v3193
  %3441 = vrot.lane.b32.xlu0 %v3429, 96
  %v3442 = vpop.permute.xlu0 %3441
  %3443 = vrot.lane.b32.xlu0 %v3430, 96
  %v3444 = vpop.permute.xlu0 %3443
  %3445 = vrot.lane.b32.xlu0 %v3431, 96
  %v3446 = vpop.permute.xlu0 %3445
  %3447 = vrot.lane.b32.xlu0 %v3432, 96
  %v3448 = vpop.permute.xlu0 %3447
  %v3453 = vmul.f32 %v3422, %v3442
  %v3454 = vmul.f32 %v3424, %v3444
  %v3455 = vmul.f32 %v3426, %v3446
  %v3456 = vmul.f32 %v3428, %v3448
  %3461 = vrot.lane.b32.xlu0 %v3453, 64
  %v3462 = vpop.permute.xlu0 %3461
  %3463 = vrot.lane.b32.xlu0 %v3454, 64
  %v3464 = vpop.permute.xlu0 %3463
  %3465 = vrot.lane.b32.xlu0 %v3455, 64
  %v3466 = vpop.permute.xlu0 %3465
  %3467 = vrot.lane.b32.xlu0 %v3456, 64
  %v3468 = vpop.permute.xlu0 %3467
  %v3473 = vadd.f32 %v3433, %v3462
  %v3474 = vadd.f32 %v3434, %v3464
  %v3475 = vadd.f32 %v3435, %v3466
  %v3476 = vadd.f32 %v3436, %v3468
  %v3477 = vtanh.pop %v3190
  %v3478 = vtanh.pop %v3191
  %v3479 = vtanh.pop %v3192
  %v3480 = vtanh.pop %v3193
  %3485 = vrot.lane.b32.xlu0 %v3422, 96
  %v3486 = vpop.permute.xlu0 %3485
  %3487 = vrot.lane.b32.xlu0 %v3424, 96
  %v3488 = vpop.permute.xlu0 %3487
  %3489 = vrot.lane.b32.xlu0 %v3426, 96
  %v3490 = vpop.permute.xlu0 %3489
  %3491 = vrot.lane.b32.xlu0 %v3428, 96
  %v3492 = vpop.permute.xlu0 %3491
  %v3497 = vmul.f32 %v3477, %v3486
  %v3498 = vmul.f32 %v3478, %v3488
  %v3499 = vmul.f32 %v3479, %v3490
  %v3500 = vmul.f32 %v3480, %v3492
  %3505 = vrot.lane.b32.xlu0 %v3497, 64
  %v3506 = vpop.permute.xlu0 %3505
  %3507 = vrot.lane.b32.xlu0 %v3498, 64
  %v3508 = vpop.permute.xlu0 %3507
  %3509 = vrot.lane.b32.xlu0 %v3499, 64
  %v3510 = vpop.permute.xlu0 %3509
  %3511 = vrot.lane.b32.xlu0 %v3500, 64
  %v3512 = vpop.permute.xlu0 %3511
  %v3517 = vrot.slane %v3506, 7
  %v3518 = vrot.slane %v3508, 7
  %v3519 = vrot.slane %v3510, 7
  %v3520 = vrot.slane %v3512, 7
  %v3521 = vsel %vm106, %v3519, %v3520
  %v3522 = vsel %vm106, %v3518, %v3519
  %v3523 = vsel %vm106, %v3517, %v3518
  %v3524 = vsel %vm106, %v3520, %v3517
  %v3525 = vsel %vm115, %v3524, 0.0
  %v3526 = vsel %vm116, %v3523, 0.0
  %v3527 = vsel %vm117, %v3522, 0.0
  %v3528 = vsel %vm118, %v3521, 0.0
  %3529 = vrot.lane.b32.xlu0 %v3497, 96
  %v3530 = vpop.permute.xlu0 %3529
  %3531 = vrot.lane.b32.xlu0 %v3498, 96
  %v3532 = vpop.permute.xlu0 %3531
  %3533 = vrot.lane.b32.xlu0 %v3499, 96
  %v3534 = vpop.permute.xlu0 %3533
  %3535 = vrot.lane.b32.xlu0 %v3500, 96
  %v3536 = vpop.permute.xlu0 %3535
  %v3541 = vsel %vm139, %v3525, %v3530
  %v3542 = vsel %vm139, %v3526, %v3532
  %v3543 = vsel %vm139, %v3527, %v3534
  %v3544 = vsel %vm139, %v3528, %v3536
  %v3546 = vsel %vm144, %v3541, 0
  %v3549 = vsel %vm144, %v3542, 0
  %v3552 = vsel %vm144, %v3543, 0
  %v3555 = vsel %vm144, %v3544, 0
  %3557 = vmatprep.subr.mxu0 0.0
  %3558 = vmatpush1.msra.mxu0 0.0
  %3559 = vmatprep.subr.mxu0 0.0
  %3560 = vmatpush1.msra.mxu0 0.0
  %3561 = vmatprep.subr.mxu0 0.0
  %3562 = vmatpush1.msra.mxu0 0.0
  %3563 = vmatprep.subr.mxu0 0.0
  %3564 = vmatpush1.msra.mxu0 0.0
  %3565 = vmatprep.subr.mxu0 0.0
  %3566 = vmatpush1.msra.mxu0 0.0
  %3567 = vmatprep.subr.mxu0 0.0
  %3568 = vmatpush1.msra.mxu0 0.0
  %3569 = vmatprep.subr.mxu0 0.0
  %3570 = vmatpush1.msra.mxu0 0.0
  %3571 = vmatprep.subr.mxu0 0.0
  %3572 = vmatpush1.msra.mxu0 0.0
  %3573 = vmatprep.subr.mxu0 %v93
  %3574 = vmatpush1.msra.mxu0 %v92
  %3575 = vmatprep.subr.mxu0 %v91
  %3576 = vmatpush1.msra.mxu0 %v90
  %3577 = vmatprep.subr.mxu0 %v89
  %3578 = vmatpush1.msra.mxu0 %v88
  %3579 = vmatprep.subr.mxu0 %v87
  %3580 = vmatpush1.msra.mxu0 %v86
  %3581 = vmatprep.subr.mxu0 %v85
  %3582 = vmatpush1.msra.mxu0 %v84
  %3583 = vmatprep.subr.mxu0 %v83
  %3584 = vmatpush1.msra.mxu0 %v82
  %3585 = vmatprep.subr.mxu0 %v81
  %3586 = vmatpush1.msra.mxu0 %v80
  %3587 = vmatprep.subr.mxu0 %v79
  %3588 = vmatpush1.msra.mxu0 %v78
  %3589 = vmatprep.subr.mxu0 0.0
  %3590 = vmatpush2.msra.mxu0 0.0
  %3591 = vmatprep.subr.mxu0 0.0
  %3592 = vmatpush2.msra.mxu0 0.0
  %3593 = vmatprep.subr.mxu0 0.0
  %3594 = vmatpush2.msra.mxu0 0.0
  %3595 = vmatprep.subr.mxu0 0.0
  %3596 = vmatpush2.msra.mxu0 0.0
  %3597 = vmatprep.subr.mxu0 0.0
  %3598 = vmatpush2.msra.mxu0 0.0
  %3599 = vmatprep.subr.mxu0 0.0
  %3600 = vmatpush2.msra.mxu0 0.0
  %3601 = vmatprep.subr.mxu0 0.0
  %3602 = vmatpush2.msra.mxu0 0.0
  %3603 = vmatprep.subr.mxu0 0.0
  %3604 = vmatpush2.msra.mxu0 0.0
  %3605 = vmatprep.subr.mxu0 0.0
  %3606 = vmatpush2.msra.mxu0 0.0
  %3607 = vmatprep.subr.mxu0 0.0
  %3608 = vmatpush2.msra.mxu0 0.0
  %3609 = vmatprep.subr.mxu0 0.0
  %3610 = vmatpush2.msra.mxu0 0.0
  %3611 = vmatprep.subr.mxu0 0.0
  %3612 = vmatpush2.msra.mxu0 0.0
  %3613 = vmatprep.subr.mxu0 0.0
  %3614 = vmatpush2.msra.mxu0 0.0
  %3615 = vmatprep.subr.mxu0 0.0
  %3616 = vmatpush2.msra.mxu0 0.0
  %3617 = vmatprep.subr.mxu0 0.0
  %3618 = vmatpush2.msra.mxu0 0.0
  %3619 = vmatprep.subr.mxu0 0.0
  %3620 = vmatpush2.msra.mxu0 0.0
  %3621 = vmatprep.mubr.f32.mxu0 0.0
  %3622 = vmatmul.mubr.f32.gmra.mxu0 %v3546
  %v3623 = vpop.f32.mrf.mxu0
  %v3624 = vadd.f32 0.0, %v3623
  %v3625 = vpop.f32.mrf.mxu0
  %v3626 = vadd.f32 0.0, %v3625
  %3627 = vmatprep.mubr.f32.mxu0 0.0
  %3628 = vmatmul.mubr.f32.gmra.mxu0 %v3549
  %v3629 = vpop.f32.mrf.mxu0
  %v3630 = vadd.f32 0.0, %v3629
  %v3631 = vpop.f32.mrf.mxu0
  %v3632 = vadd.f32 0.0, %v3631
  %3633 = vmatprep.mubr.f32.mxu0 0.0
  %3634 = vmatmul.mubr.f32.gmra.mxu0 %v3552
  %v3635 = vpop.f32.mrf.mxu0
  %v3636 = vadd.f32 0.0, %v3635
  %v3637 = vpop.f32.mrf.mxu0
  %v3638 = vadd.f32 0.0, %v3637
  %3639 = vmatprep.mubr.f32.mxu0 0.0
  %3640 = vmatmul.mubr.f32.gmra.mxu0 %v3555
  %v3641 = vpop.f32.mrf.mxu0
  %v3642 = vadd.f32 0.0, %v3641
  %v3643 = vpop.f32.mrf.mxu0
  %v3644 = vadd.f32 0.0, %v3643
  %3645 = vdwg.mxu0
  %v3646 = vsel %vm250, %v3624, %v3626
  %v3647 = vsel %vm251, %v3630, %v3632
  %v3648 = vsel %vm252, %v3636, %v3638
  %v3649 = vsel %vm253, %v3642, %v3644
  %s3650 = scalar_lea.vmem %s0, 416
  %v3651 = vld [vmem:[%s3650] sm:$0xff]
  %v3652 = vld [vmem:[%s3650 + $0x8] sm:$0xff]
  %v3653 = vld [vmem:[%s3650 + $0x10] sm:$0xff]
  %v3654 = vld [vmem:[%s3650 + $0x18] sm:$0xff]
  %v3655 = vadd.f32 %v3651, %v3646
  %v3656 = vadd.f32 %v3652, %v3647
  %v3657 = vadd.f32 %v3653, %v3648
  %v3658 = vadd.f32 %v3654, %v3649
  %v3659 = vxor.u32 %v3655, 2147483648
  %v3660 = vxor.u32 %v3656, 2147483648
  %v3661 = vxor.u32 %v3657, 2147483648
  %v3662 = vxor.u32 %v3658, 2147483648
  %v3663 = vmul.f32 %v3659, 1.442695
  %v3664 = vpow.pop %v3663
  %v3665 = vmul.f32 %v3660, 1.442695
  %v3666 = vpow.pop %v3665
  %v3667 = vmul.f32 %v3661, 1.442695
  %v3668 = vpow.pop %v3667
  %v3669 = vmul.f32 %v3662, 1.442695
  %v3670 = vpow.pop %v3669
  %v3671 = vadd.f32 %v3664, 1.0
  %v3672 = vadd.f32 %v3666, 1.0
  %v3673 = vadd.f32 %v3668, 1.0
  %v3674 = vadd.f32 %v3670, 1.0
  %v3675 = vrcp.pop %v3671
  %v3676 = vmul.f32 1.0, %v3675
  %v3677 = vrcp.pop %v3672
  %v3678 = vmul.f32 1.0, %v3677
  %v3679 = vrcp.pop %v3673
  %v3680 = vmul.f32 1.0, %v3679
  %v3681 = vrcp.pop %v3674
  %v3682 = vmul.f32 1.0, %v3681
  %v3683 = vtanh.pop %v3655
  %v3684 = vtanh.pop %v3656
  %v3685 = vtanh.pop %v3657
  %v3686 = vtanh.pop %v3658
  %v3687 = vmul.f32 %v3676, %v3473
  %v3688 = vmul.f32 %v3678, %v3474
  %v3689 = vmul.f32 %v3680, %v3475
  %v3690 = vmul.f32 %v3682, %v3476
  %3695 = vrot.lane.b32.xlu0 %v3683, 96
  %v3696 = vpop.permute.xlu0 %3695
  %3697 = vrot.lane.b32.xlu0 %v3684, 96
  %v3698 = vpop.permute.xlu0 %3697
  %3699 = vrot.lane.b32.xlu0 %v3685, 96
  %v3700 = vpop.permute.xlu0 %3699
  %3701 = vrot.lane.b32.xlu0 %v3686, 96
  %v3702 = vpop.permute.xlu0 %3701
  %v3707 = vmul.f32 %v3676, %v3696
  %v3708 = vmul.f32 %v3678, %v3698
  %v3709 = vmul.f32 %v3680, %v3700
  %v3710 = vmul.f32 %v3682, %v3702
  %3715 = vrot.lane.b32.xlu0 %v3707, 64
  %v3716 = vpop.permute.xlu0 %3715
  %3717 = vrot.lane.b32.xlu0 %v3708, 64
  %v3718 = vpop.permute.xlu0 %3717
  %3719 = vrot.lane.b32.xlu0 %v3709, 64
  %v3720 = vpop.permute.xlu0 %3719
  %3721 = vrot.lane.b32.xlu0 %v3710, 64
  %v3722 = vpop.permute.xlu0 %3721
  %v3727 = vadd.f32 %v3687, %v3716
  %v3728 = vadd.f32 %v3688, %v3718
  %v3729 = vadd.f32 %v3689, %v3720
  %v3730 = vadd.f32 %v3690, %v3722
  %v3731 = vtanh.pop %v3473
  %v3732 = vtanh.pop %v3474
  %v3733 = vtanh.pop %v3475
  %v3734 = vtanh.pop %v3476
  %3739 = vrot.lane.b32.xlu0 %v3676, 96
  %v3740 = vpop.permute.xlu0 %3739
  %3741 = vrot.lane.b32.xlu0 %v3678, 96
  %v3742 = vpop.permute.xlu0 %3741
  %3743 = vrot.lane.b32.xlu0 %v3680, 96
  %v3744 = vpop.permute.xlu0 %3743
  %3745 = vrot.lane.b32.xlu0 %v3682, 96
  %v3746 = vpop.permute.xlu0 %3745
  %v3751 = vmul.f32 %v3731, %v3740
  %v3752 = vmul.f32 %v3732, %v3742
  %v3753 = vmul.f32 %v3733, %v3744
  %v3754 = vmul.f32 %v3734, %v3746
  %3759 = vrot.lane.b32.xlu0 %v3751, 64
  %v3760 = vpop.permute.xlu0 %3759
  %3761 = vrot.lane.b32.xlu0 %v3752, 64
  %v3762 = vpop.permute.xlu0 %3761
  %3763 = vrot.lane.b32.xlu0 %v3753, 64
  %v3764 = vpop.permute.xlu0 %3763
  %3765 = vrot.lane.b32.xlu0 %v3754, 64
  %v3766 = vpop.permute.xlu0 %3765
  %v3771 = vrot.slane %v3760, 7
  %v3772 = vrot.slane %v3762, 7
  %v3773 = vrot.slane %v3764, 7
  %v3774 = vrot.slane %v3766, 7
  %v3775 = vsel %vm106, %v3773, %v3774
  %v3776 = vsel %vm106, %v3772, %v3773
  %v3777 = vsel %vm106, %v3771, %v3772
  %v3778 = vsel %vm106, %v3774, %v3771
  %v3779 = vsel %vm115, %v3778, 0.0
  %v3780 = vsel %vm116, %v3777, 0.0
  %v3781 = vsel %vm117, %v3776, 0.0
  %v3782 = vsel %vm118, %v3775, 0.0
  %3783 = vrot.lane.b32.xlu0 %v3751, 96
  %v3784 = vpop.permute.xlu0 %3783
  %3785 = vrot.lane.b32.xlu0 %v3752, 96
  %v3786 = vpop.permute.xlu0 %3785
  %3787 = vrot.lane.b32.xlu0 %v3753, 96
  %v3788 = vpop.permute.xlu0 %3787
  %3789 = vrot.lane.b32.xlu0 %v3754, 96
  %v3790 = vpop.permute.xlu0 %3789
  %v3795 = vsel %vm139, %v3779, %v3784
  %v3796 = vsel %vm139, %v3780, %v3786
  %v3797 = vsel %vm139, %v3781, %v3788
  %v3798 = vsel %vm139, %v3782, %v3790
  %v3800 = vsel %vm144, %v3795, 0
  %v3803 = vsel %vm144, %v3796, 0
  %v3806 = vsel %vm144, %v3797, 0
  %v3809 = vsel %vm144, %v3798, 0
  %3811 = vmatprep.subr.mxu0 0.0
  %3812 = vmatpush1.msra.mxu0 0.0
  %3813 = vmatprep.subr.mxu0 0.0
  %3814 = vmatpush1.msra.mxu0 0.0
  %3815 = vmatprep.subr.mxu0 0.0
  %3816 = vmatpush1.msra.mxu0 0.0
  %3817 = vmatprep.subr.mxu0 0.0
  %3818 = vmatpush1.msra.mxu0 0.0
  %3819 = vmatprep.subr.mxu0 0.0
  %3820 = vmatpush1.msra.mxu0 0.0
  %3821 = vmatprep.subr.mxu0 0.0
  %3822 = vmatpush1.msra.mxu0 0.0
  %3823 = vmatprep.subr.mxu0 0.0
  %3824 = vmatpush1.msra.mxu0 0.0
  %3825 = vmatprep.subr.mxu0 0.0
  %3826 = vmatpush1.msra.mxu0 0.0
  %3827 = vmatprep.subr.mxu0 %v93
  %3828 = vmatpush1.msra.mxu0 %v92
  %3829 = vmatprep.subr.mxu0 %v91
  %3830 = vmatpush1.msra.mxu0 %v90
  %3831 = vmatprep.subr.mxu0 %v89
  %3832 = vmatpush1.msra.mxu0 %v88
  %3833 = vmatprep.subr.mxu0 %v87
  %3834 = vmatpush1.msra.mxu0 %v86
  %3835 = vmatprep.subr.mxu0 %v85
  %3836 = vmatpush1.msra.mxu0 %v84
  %3837 = vmatprep.subr.mxu0 %v83
  %3838 = vmatpush1.msra.mxu0 %v82
  %3839 = vmatprep.subr.mxu0 %v81
  %3840 = vmatpush1.msra.mxu0 %v80
  %3841 = vmatprep.subr.mxu0 %v79
  %3842 = vmatpush1.msra.mxu0 %v78
  %3843 = vmatprep.subr.mxu0 0.0
  %3844 = vmatpush2.msra.mxu0 0.0
  %3845 = vmatprep.subr.mxu0 0.0
  %3846 = vmatpush2.msra.mxu0 0.0
  %3847 = vmatprep.subr.mxu0 0.0
  %3848 = vmatpush2.msra.mxu0 0.0
  %3849 = vmatprep.subr.mxu0 0.0
  %3850 = vmatpush2.msra.mxu0 0.0
  %3851 = vmatprep.subr.mxu0 0.0
  %3852 = vmatpush2.msra.mxu0 0.0
  %3853 = vmatprep.subr.mxu0 0.0
  %3854 = vmatpush2.msra.mxu0 0.0
  %3855 = vmatprep.subr.mxu0 0.0
  %3856 = vmatpush2.msra.mxu0 0.0
  %3857 = vmatprep.subr.mxu0 0.0
  %3858 = vmatpush2.msra.mxu0 0.0
  %3859 = vmatprep.subr.mxu0 0.0
  %3860 = vmatpush2.msra.mxu0 0.0
  %3861 = vmatprep.subr.mxu0 0.0
  %3862 = vmatpush2.msra.mxu0 0.0
  %3863 = vmatprep.subr.mxu0 0.0
  %3864 = vmatpush2.msra.mxu0 0.0
  %3865 = vmatprep.subr.mxu0 0.0
  %3866 = vmatpush2.msra.mxu0 0.0
  %3867 = vmatprep.subr.mxu0 0.0
  %3868 = vmatpush2.msra.mxu0 0.0
  %3869 = vmatprep.subr.mxu0 0.0
  %3870 = vmatpush2.msra.mxu0 0.0
  %3871 = vmatprep.subr.mxu0 0.0
  %3872 = vmatpush2.msra.mxu0 0.0
  %3873 = vmatprep.subr.mxu0 0.0
  %3874 = vmatpush2.msra.mxu0 0.0
  %3875 = vmatprep.mubr.f32.mxu0 0.0
  %3876 = vmatmul.mubr.f32.gmra.mxu0 %v3800
  %v3877 = vpop.f32.mrf.mxu0
  %v3878 = vadd.f32 0.0, %v3877
  %v3879 = vpop.f32.mrf.mxu0
  %v3880 = vadd.f32 0.0, %v3879
  %3881 = vmatprep.mubr.f32.mxu0 0.0
  %3882 = vmatmul.mubr.f32.gmra.mxu0 %v3803
  %v3883 = vpop.f32.mrf.mxu0
  %v3884 = vadd.f32 0.0, %v3883
  %v3885 = vpop.f32.mrf.mxu0
  %v3886 = vadd.f32 0.0, %v3885
  %3887 = vmatprep.mubr.f32.mxu0 0.0
  %3888 = vmatmul.mubr.f32.gmra.mxu0 %v3806
  %v3889 = vpop.f32.mrf.mxu0
  %v3890 = vadd.f32 0.0, %v3889
  %v3891 = vpop.f32.mrf.mxu0
  %v3892 = vadd.f32 0.0, %v3891
  %3893 = vmatprep.mubr.f32.mxu0 0.0
  %3894 = vmatmul.mubr.f32.gmra.mxu0 %v3809
  %v3895 = vpop.f32.mrf.mxu0
  %v3896 = vadd.f32 0.0, %v3895
  %v3897 = vpop.f32.mrf.mxu0
  %v3898 = vadd.f32 0.0, %v3897
  %3899 = vdwg.mxu0
  %v3900 = vsel %vm250, %v3878, %v3880
  %v3901 = vsel %vm251, %v3884, %v3886
  %v3902 = vsel %vm252, %v3890, %v3892
  %v3903 = vsel %vm253, %v3896, %v3898
  %s3904 = scalar_lea.vmem %s0, 448
  %v3905 = vld [vmem:[%s3904] sm:$0xff]
  %v3906 = vld [vmem:[%s3904 + $0x8] sm:$0xff]
  %v3907 = vld [vmem:[%s3904 + $0x10] sm:$0xff]
  %v3908 = vld [vmem:[%s3904 + $0x18] sm:$0xff]
  %v3909 = vadd.f32 %v3905, %v3900
  %v3910 = vadd.f32 %v3906, %v3901
  %v3911 = vadd.f32 %v3907, %v3902
  %v3912 = vadd.f32 %v3908, %v3903
  %v3913 = vxor.u32 %v3909, 2147483648
  %v3914 = vxor.u32 %v3910, 2147483648
  %v3915 = vxor.u32 %v3911, 2147483648
  %v3916 = vxor.u32 %v3912, 2147483648
  %v3917 = vmul.f32 %v3913, 1.442695
  %v3918 = vpow.pop %v3917
  %v3919 = vmul.f32 %v3914, 1.442695
  %v3920 = vpow.pop %v3919
  %v3921 = vmul.f32 %v3915, 1.442695
  %v3922 = vpow.pop %v3921
  %v3923 = vmul.f32 %v3916, 1.442695
  %v3924 = vpow.pop %v3923
  %v3925 = vadd.f32 %v3918, 1.0
  %v3926 = vadd.f32 %v3920, 1.0
  %v3927 = vadd.f32 %v3922, 1.0
  %v3928 = vadd.f32 %v3924, 1.0
  %v3929 = vrcp.pop %v3925
  %v3930 = vmul.f32 1.0, %v3929
  %v3931 = vrcp.pop %v3926
  %v3932 = vmul.f32 1.0, %v3931
  %v3933 = vrcp.pop %v3927
  %v3934 = vmul.f32 1.0, %v3933
  %v3935 = vrcp.pop %v3928
  %v3936 = vmul.f32 1.0, %v3935
  %v3937 = vtanh.pop %v3727
  %v3938 = vtanh.pop %v3728
  %v3939 = vtanh.pop %v3729
  %v3940 = vtanh.pop %v3730
  %3945 = vrot.lane.b32.xlu0 %v3930, 96
  %v3946 = vpop.permute.xlu0 %3945
  %3947 = vrot.lane.b32.xlu0 %v3932, 96
  %v3948 = vpop.permute.xlu0 %3947
  %3949 = vrot.lane.b32.xlu0 %v3934, 96
  %v3950 = vpop.permute.xlu0 %3949
  %3951 = vrot.lane.b32.xlu0 %v3936, 96
  %v3952 = vpop.permute.xlu0 %3951
  %v3957 = vmul.f32 %v3937, %v3946
  %v3958 = vmul.f32 %v3938, %v3948
  %v3959 = vmul.f32 %v3939, %v3950
  %v3960 = vmul.f32 %v3940, %v3952
  %v3961 = vsel %vm139, %v3506, %v3784
  %v3962 = vsel %vm139, %v3508, %v3786
  %v3963 = vsel %vm139, %v3510, %v3788
  %v3964 = vsel %vm139, %v3512, %v3790
  %v3965 = vsel %vm144, %v3961, %v3957
  %v3966 = vsel %vm144, %v3962, %v3958
  %v3967 = vsel %vm144, %v3963, %v3959
  %v3968 = vsel %vm144, %v3964, %v3960
  %v3969 = vsel %vm1152, %v3965, 0.0
  %v3970 = vsel %vm1152, %v3966, 0.0
  %v3971 = vsel %vm1152, %v3967, 0.0
  %v3972 = vsel %vm1152, %v3968, 0.0
  %s3973 = scalar_lea.vmem %s4, 96
  %3974 = vst [vmem:[%s3973] sm:$0xff] %v3969
  %3975 = vst [vmem:[%s3973 + $0x8] sm:$0xff] %v3970
  %3976 = vst [vmem:[%s3973 + $0x10] sm:$0xff] %v3971
  %3977 = vst [vmem:[%s3973 + $0x18] sm:$0xff] %v3972
  // Predicated region
  $region18: #{diag_bilstm_pallas.1} parent=0 // pred_check
    _
  $region19: #{diag_bilstm_pallas.1} parent=0 // pred_check_branch
    %3979 = sbr.rel (0) target = $region21
  $region20: #{diag_bilstm_pallas.1} parent=0 // pred_region
    _
  $region21: #{diag_bilstm_pallas.1} parent=0 // pred_fallthru
    _
  // Predicated region
  $region22: #{diag_bilstm_pallas.1} parent=0 // pred_check
    _
  $region23: #{diag_bilstm_pallas.1} parent=0 // pred_check_branch
    %3981 = sbr.rel (0) target = $region25
  $region24: #{diag_bilstm_pallas.1} parent=0 // pred_region
    _
  $region25: #{diag_bilstm_pallas.1} parent=0 // pred_fallthru
    _

</llo_original>
